<compile_context>
chip_gen: v6e
topology: v6e:2x2x1
jax: 0.10.0
libtpu: 0.0.40
codegen_flags: <defaults>
</compile_context>

<pallas_src>
import functools

import jax
import jax.numpy as jnp
from jax.experimental import pallas as pl
from jax.experimental.pallas import tpu as pltpu


# ---------------------------------------------------------------------------
# In-kernel math helpers (pure jnp, traced into the Pallas kernel body).
# ---------------------------------------------------------------------------
def _erf_f32(x):
    # fp32 erf (Abramowitz & Stegun 7.1.26, max abs err ~1.5e-7); keeps
    # PyTorch's exact (erf-based) F.gelu semantics without relying on a
    # lax.erf Mosaic lowering.  The exp() rides the otherwise-idle EUP slot.
    a1, a2, a3, a4, a5 = 0.254829592, -0.284496736, 1.421413741, -1.453152027, 1.061405429
    p = 0.3275911
    ax = jnp.abs(x)
    t = 1.0 / (1.0 + p * ax)
    poly = ((((a5 * t + a4) * t + a3) * t + a2) * t + a1) * t
    y = 1.0 - poly * jnp.exp(-ax * ax)
    return jnp.where(x >= 0.0, y, -y)


def _gelu_exact(x):
    return 0.5 * x * (1.0 + _erf_f32(x * 0.7071067811865476))


def _layer_norm(x, w, b, eps=1e-5):
    mu = jnp.mean(x, axis=-1, keepdims=True)
    xc = x - mu
    var = jnp.mean(xc * xc, axis=-1, keepdims=True)
    inv = jax.lax.rsqrt(var + eps)
    return xc * inv * w + b


def _matmul(x, w):
    # x: (M, K) float; w: (K, N) bf16 in MXU-native (in, out) orientation.
    # bf16 operands, f32 accumulation.
    return jnp.dot(x.astype(jnp.bfloat16), w, preferred_element_type=jnp.float32)


# ---------------------------------------------------------------------------
# Pallas kernel: one grid step == (one batch block, one encoder layer).
# ---------------------------------------------------------------------------
def encoder_layer_kernel(
    x_ref, wqkv_ref, bqkv_ref, wo_ref, bo_ref, ln1w_ref, ln1b_ref,
    w1_ref, b1_ref, w2_ref, b2_ref, ln2w_ref, ln2b_ref, out_ref,
    *, heads, seq,
):
    layer = pl.program_id(1)

    # Output block (this batch block's (B_blk*S, E) rows) is resident across
    # the depth axis and carries the activation; seed it from the (aliased)
    # input at layer 0.
    @pl.when(layer == 0)
    def _():
        out_ref[...] = x_ref[...]

    x = out_ref[...]                                   # (B_blk*S, E) f32
    rows, emb = x.shape
    bblk = rows // seq
    d = emb // heads

    # ---------------- multi-head self-attention ----------------
    # 1/sqrt(d) already folded into the Q third of wqkv/bqkv (wrapper).
    qkv = _matmul(x, wqkv_ref[...]) + bqkv_ref[...]    # (rows, 3E) f32

    def split_heads(t_bf16):                           # (rows, E) bf16 -> (B_blk*H, S, D)
        t = t_bf16.reshape(bblk, seq, heads, d)
        return jnp.transpose(t, (0, 2, 1, 3)).reshape(bblk * heads, seq, d)

    # Cast to bf16 BEFORE the relayouts (halves the bytes moved by the
    # reshape/transpose copies; data is bf16 on the MXU anyway).
    q = split_heads(qkv[:, 0:emb].astype(jnp.bfloat16))
    k = split_heads(qkv[:, emb:2 * emb].astype(jnp.bfloat16))
    v = split_heads(qkv[:, 2 * emb:3 * emb].astype(jnp.bfloat16))

    # All (batch_block, head) pairs in one batched matmul.
    s = jnp.einsum('bqd,bkd->bqk', q, k,
                   preferred_element_type=jnp.float32)       # (B_blk*H, S, S) f32
    s = s - jnp.max(s, axis=-1, keepdims=True)
    p = jnp.exp(s)
    p = p * pl.reciprocal(jnp.sum(p, axis=-1, keepdims=True), approx=True)

    attn = jnp.einsum('bqk,bkd->bqd', p.astype(jnp.bfloat16), v,
                      preferred_element_type=jnp.float32)    # (B_blk*H, S, D) f32
    # bf16 before the head-reassembly relayout; last dim stays lane-dense (E).
    attn = attn.astype(jnp.bfloat16).reshape(bblk, heads, seq, d)
    attn = jnp.transpose(attn, (0, 2, 1, 3)).reshape(rows, emb)
    attn = _matmul(attn, wo_ref[...]) + bo_ref[...]

    # post-norm residual 1
    x1 = _layer_norm(x + attn, ln1w_ref[...], ln1b_ref[...])

    # ---------------------- feed-forward ----------------------
    h1 = _gelu_exact(_matmul(x1, w1_ref[...]) + b1_ref[...])   # (rows, FF) f32
    h2 = _matmul(h1, w2_ref[...]) + b2_ref[...]                # (rows, E)  f32

    # post-norm residual 2
    out_ref[...] = _layer_norm(x1 + h2, ln2w_ref[...], ln2b_ref[...])


# ---------------------------------------------------------------------------
# JAX wrapper
# ---------------------------------------------------------------------------
def prepare_params(params, *, num_heads):
    """PyTorch-layout params -> kernel layout.

    One-time host-side work: transpose matmul weights to (in, out), cast them
    to bf16, fold 1/sqrt(head_dim) into the Q projection, keep biases and
    layernorm parameters in f32 as (depth, 1, C) rows.
    """
    emb = params["wo"].shape[-1]
    scale = 1.0 / float(emb // num_heads) ** 0.5
    q_scale = jnp.concatenate(
        [jnp.full((emb,), scale, jnp.float32), jnp.ones((2 * emb,), jnp.float32)])

    def bf16_t(w):   # (L, out, in) -> (L, in, out) bf16
        return jnp.transpose(w, (0, 2, 1)).astype(jnp.bfloat16)

    def row(b):      # (L, C) -> (L, 1, C) f32
        return b[:, None, :].astype(jnp.float32)

    wqkv_t = jnp.transpose(params["wqkv"], (0, 2, 1)) * q_scale   # (L, E, 3E)
    bqkv = params["bqkv"] * q_scale

    return dict(
        wqkv=wqkv_t.astype(jnp.bfloat16), bqkv=row(bqkv),
        wo=bf16_t(params["wo"]), bo=row(params["bo"]),
        ln1w=row(params["ln1w"]), ln1b=row(params["ln1b"]),
        w1=bf16_t(params["w1"]), b1=row(params["b1"]),
        w2=bf16_t(params["w2"]), b2=row(params["b2"]),
        ln2w=row(params["ln2w"]), ln2b=row(params["ln2b"]),
    )


def _choose_batch_block(batch, seq, *, target_rows=512, max_rows=4096):
    """Batches per grid step (must divide batch so blocks hold whole sequences).

    Aims for an MXU-friendly M (>= target_rows) while capping the resident
    activation block (max_rows) so the attention scratch and FFN hidden stay
    comfortably inside VMEM.
    """
    divisors = [d for d in range(1, batch + 1) if batch % d == 0]
    fitting = [d for d in divisors if d * seq <= max_rows] or [1]
    for d in fitting:
        if d * seq >= target_rows:
            return d
    return fitting[-1]


def _vmem_limit_bytes():
    # Derive the scoped-VMEM budget from the actual chip (64 MiB/TC on v7x,
    # 128 MiB on v5e/v6e) instead of hard-coding a portable minimum.
    cap = 64 * 1024 * 1024
    try:
        cap = int(getattr(pltpu.get_tpu_info(), "vmem_capacity_bytes", cap))
    except Exception:
        pass
    return int(min(cap * 3 // 4, 100 * 1024 * 1024))


def transformer_encoder(x_sbe, params, *, num_heads):
    """x_sbe: (S, B, E) float32 — PyTorch (seq, batch, emb) convention."""
    S, B, E = x_sbe.shape
    kp = prepare_params(params, num_heads=num_heads)
    depth = kp["wqkv"].shape[0]
    FF = kp["w1"].shape[-1]

    b_blk = _choose_batch_block(B, S)
    n_bblk = B // b_blk
    rows = b_blk * S

    # tokens-major 2-D layout: rows [b*S, (b+1)*S) hold batch b's sequence.
    x2d = jnp.transpose(x_sbe, (1, 0, 2)).reshape(B * S, E).astype(jnp.float32)

    def per_layer(shape):
        # depth axis squeezed out; last two dims are the full per-layer dims.
        return pl.BlockSpec((None,) + shape, lambda b, l: (l, 0, 0))

    kernel = functools.partial(encoder_layer_kernel, heads=num_heads, seq=S)

    out = pl.pallas_call(
        kernel,
        out_shape=jax.ShapeDtypeStruct((B * S, E), jnp.float32),
        grid_spec=pltpu.PrefetchScalarGridSpec(
            num_scalar_prefetch=0,
            grid=(n_bblk, depth),                 # batch-blocks parallel, depth innermost
            in_specs=[
                pl.BlockSpec((rows, E), lambda b, l: (b, 0)),   # x (read at l==0)
                per_layer((E, 3 * E)), per_layer((1, 3 * E)),   # in_proj (pre-T, Q-scaled)
                per_layer((E, E)),     per_layer((1, E)),       # out_proj
                per_layer((1, E)),     per_layer((1, E)),       # norm1
                per_layer((E, FF)),    per_layer((1, FF)),      # linear1
                per_layer((FF, E)),    per_layer((1, E)),       # linear2
                per_layer((1, E)),     per_layer((1, E)),       # norm2
            ],
            out_specs=pl.BlockSpec((rows, E), lambda b, l: (b, 0)),
        ),
        compiler_params=pltpu.CompilerParams(
            dimension_semantics=("parallel", "arbitrary"),
            vmem_limit_bytes=_vmem_limit_bytes(),
        ),
        # x2d and the output share one HBM buffer (no extra output allocation,
        # no redundant copy on the critical path of layer 0).
        input_output_aliases={0: 0},
    )(
        x2d,
        kp["wqkv"], kp["bqkv"], kp["wo"], kp["bo"],
        kp["ln1w"], kp["ln1b"], kp["w1"], kp["b1"],
        kp["w2"], kp["b2"], kp["ln2w"], kp["ln2b"],
    )

    return out.reshape(B, S, E).transpose(1, 0, 2)   # back to (S, B, E)


def init_params(key, depth, emb, ff):
    """Deterministic synthetic parameters in PyTorch nn.TransformerEncoderLayer layout."""
    k0, k1, k2, k3 = jax.random.split(key, 4)
    s = 0.02
    f32 = jnp.float32
    return dict(
        wqkv=jax.random.normal(k0, (depth, 3 * emb, emb), f32) * s,   # in_proj_weight
        bqkv=jnp.zeros((depth, 3 * emb), f32),                        # in_proj_bias
        wo=jax.random.normal(k1, (depth, emb, emb), f32) * s,         # out_proj.weight
        bo=jnp.zeros((depth, emb), f32),
        ln1w=jnp.ones((depth, emb), f32), ln1b=jnp.zeros((depth, emb), f32),
        w1=jax.random.normal(k2, (depth, ff, emb), f32) * s,          # linear1.weight
        b1=jnp.zeros((depth, ff), f32),
        w2=jax.random.normal(k3, (depth, emb, ff), f32) * s,          # linear2.weight
        b2=jnp.zeros((depth, emb), f32),
        ln2w=jnp.ones((depth, emb), f32), ln2b=jnp.zeros((depth, emb), f32),
    )


if __name__ == "__main__":
    # Small shapes consistent with the module: emb divisible by num_heads=8.
    SEQ, BATCH, EMB, HEADS, DEPTH = 8, 2, 128, 8, 2
    MLP_RATIO = 4.0
    FF = int(EMB * MLP_RATIO)

    key = jax.random.PRNGKey(0)
    kx, kp = jax.random.split(key)
    params = init_params(kp, DEPTH, EMB, FF)
    x = jax.random.normal(kx, (SEQ, BATCH, EMB), jnp.float32)   # (seq, batch, emb)

    y = transformer_encoder(x, params, num_heads=HEADS)
    jax.block_until_ready(y)
    assert y.shape == (SEQ, BATCH, EMB) and y.dtype == jnp.float32
    print("KERNEL_OK")
</pallas_src>

<mosaic_0001>
module attributes {stable_mosaic.version = 11 : i64} {
  func.func @encoder_layer_kernel(%arg0: i32, %arg1: i32, %arg2: memref<16x128xf32, #tpu.memory_space<vmem>>, %arg3: memref<1x128x384xbf16, #tpu.memory_space<vmem>>, %arg4: memref<1x1x384xf32, #tpu.memory_space<vmem>>, %arg5: memref<1x128x128xbf16, #tpu.memory_space<vmem>>, %arg6: memref<1x1x128xf32, #tpu.memory_space<vmem>>, %arg7: memref<1x1x128xf32, #tpu.memory_space<vmem>>, %arg8: memref<1x1x128xf32, #tpu.memory_space<vmem>>, %arg9: memref<1x128x512xbf16, #tpu.memory_space<vmem>>, %arg10: memref<1x1x512xf32, #tpu.memory_space<vmem>>, %arg11: memref<1x512x128xbf16, #tpu.memory_space<vmem>>, %arg12: memref<1x1x128xf32, #tpu.memory_space<vmem>>, %arg13: memref<1x1x128xf32, #tpu.memory_space<vmem>>, %arg14: memref<1x1x128xf32, #tpu.memory_space<vmem>>, %arg15: memref<16x128xf32, #tpu.memory_space<vmem>>) attributes {dimension_semantics = [#tpu.dimension_semantics<parallel>, #tpu.dimension_semantics<arbitrary>], iteration_bounds = array<i64: 1, 2>, scalar_prefetch = 0 : i64, scratch_operands = 0 : i64, tpu.core_type = #tpu.core_type<tc>, window_params = [{transform_indices = @transform_0, window_bounds = array<i64: 16, 128>}, {transform_indices = @transform_1, window_bounds = array<i64: 1, 128, 384>}, {transform_indices = @transform_2, window_bounds = array<i64: 1, 1, 384>}, {transform_indices = @transform_3, window_bounds = array<i64: 1, 128, 128>}, {transform_indices = @transform_4, window_bounds = array<i64: 1, 1, 128>}, {transform_indices = @transform_5, window_bounds = array<i64: 1, 1, 128>}, {transform_indices = @transform_6, window_bounds = array<i64: 1, 1, 128>}, {transform_indices = @transform_7, window_bounds = array<i64: 1, 128, 512>}, {transform_indices = @transform_8, window_bounds = array<i64: 1, 1, 512>}, {transform_indices = @transform_9, window_bounds = array<i64: 1, 512, 128>}, {transform_indices = @transform_10, window_bounds = array<i64: 1, 1, 128>}, {transform_indices = @transform_11, window_bounds = array<i64: 1, 1, 128>}, {transform_indices = @transform_12, window_bounds = array<i64: 1, 1, 128>}, {transform_indices = @transform_13, window_bounds = array<i64: 16, 128>}]} {
    %c0_i32 = arith.constant 0 : i32
    %0 = arith.cmpi eq, %arg1, %c0_i32 : i32
    %1 = arith.extui %0 : i1 to i32
    %c0_i32_0 = arith.constant 0 : i32
    %2 = arith.cmpi ne, %1, %c0_i32_0 : i32
    scf.if %2 {
      %c0_72 = arith.constant 0 : index
      %c0_73 = arith.constant 0 : index
      %158 = vector.load %arg2[%c0_72, %c0_73] : memref<16x128xf32, #tpu.memory_space<vmem>>, vector<16x128xf32>
      %c0_74 = arith.constant 0 : index
      %c0_75 = arith.constant 0 : index
      %159 = vector.load %arg15[%c0_74, %c0_75] : memref<16x128xf32, #tpu.memory_space<vmem>>, vector<16x128xf32>
      tpu.vector_store %arg15[%c0_74, %c0_75], %158 {strides = array<i32>} : memref<16x128xf32, #tpu.memory_space<vmem>>, vector<16x128xf32>,
    } else {
    }
    %c0 = arith.constant 0 : index
    %c0_1 = arith.constant 0 : index
    %3 = vector.load %arg15[%c0, %c0_1] : memref<16x128xf32, #tpu.memory_space<vmem>>, vector<16x128xf32>
    %c0_2 = arith.constant 0 : index
    %c0_3 = arith.constant 0 : index
    %c0_4 = arith.constant 0 : index
    %4 = vector.load %arg3[%c0_2, %c0_3, %c0_4] : memref<1x128x384xbf16, #tpu.memory_space<vmem>>, vector<1x128x384xbf16>
    %5 = vector.shape_cast %4 : vector<1x128x384xbf16> to vector<128x384xbf16>
    %6 = arith.truncf %3 : vector<16x128xf32> to vector<16x128xbf16>
    %cst = arith.constant dense<0.000000e+00> : vector<16x384xf32>
    %7 = tpu.matmul %6, %5, %cst {dimension_numbers = #tpu.dot_dimension_numbers<[1], [0], [0], [1], [0, 0, 1, 1], [], []>} : vector<16x128xbf16>, vector<128x384xbf16>, vector<16x384xf32> -> vector<16x384xf32>
    %c0_5 = arith.constant 0 : index
    %c0_6 = arith.constant 0 : index
    %c0_7 = arith.constant 0 : index
    %8 = vector.load %arg4[%c0_5, %c0_6, %c0_7] : memref<1x1x384xf32, #tpu.memory_space<vmem>>, vector<1x1x384xf32>
    %9 = vector.shape_cast %8 : vector<1x1x384xf32> to vector<1x384xf32>
    %10 = vector.broadcast %9 : vector<1x384xf32> to vector<16x384xf32>
    %11 = arith.addf %7, %10 : vector<16x384xf32>
    %12 = vector.extract_strided_slice %11 {offsets = [0, 0], sizes = [16, 128], strides = [1, 1]} : vector<16x384xf32> to vector<16x128xf32>
    %13 = arith.truncf %12 : vector<16x128xf32> to vector<16x128xbf16>
    %14 = vector.shape_cast %13 : vector<16x128xbf16> to vector<2x8x8x16xbf16>
    %15 = tpu.transpose %14, [0, 2, 1, 3] : vector<2x8x8x16xbf16> -> vector<2x8x8x16xbf16>
    %16 = vector.shape_cast %15 : vector<2x8x8x16xbf16> to vector<16x8x16xbf16>
    %17 = vector.extract_strided_slice %11 {offsets = [0, 128], sizes = [16, 128], strides = [1, 1]} : vector<16x384xf32> to vector<16x128xf32>
    %18 = arith.truncf %17 : vector<16x128xf32> to vector<16x128xbf16>
    %19 = vector.shape_cast %18 : vector<16x128xbf16> to vector<2x8x8x16xbf16>
    %20 = tpu.transpose %19, [0, 2, 1, 3] : vector<2x8x8x16xbf16> -> vector<2x8x8x16xbf16>
    %21 = vector.shape_cast %20 : vector<2x8x8x16xbf16> to vector<16x8x16xbf16>
    %22 = vector.extract_strided_slice %11 {offsets = [0, 256], sizes = [16, 128], strides = [1, 1]} : vector<16x384xf32> to vector<16x128xf32>
    %23 = arith.truncf %22 : vector<16x128xf32> to vector<16x128xbf16>
    %24 = vector.shape_cast %23 : vector<16x128xbf16> to vector<2x8x8x16xbf16>
    %25 = tpu.transpose %24, [0, 2, 1, 3] : vector<2x8x8x16xbf16> -> vector<2x8x8x16xbf16>
    %26 = vector.shape_cast %25 : vector<2x8x8x16xbf16> to vector<16x8x16xbf16>
    "tpu.trace_start"() <{level = 10 : i32, message = "bqd,bkd->bqk"}> : () -> ()
    %cst_8 = arith.constant dense<0.000000e+00> : vector<16x8x8xf32>
    %27 = tpu.matmul %16, %21, %cst_8 {dimension_numbers = #tpu.dot_dimension_numbers<[2], [2], [1], [1], [0, 0, 0, 1, 1, 1], [0], [0]>} : vector<16x8x16xbf16>, vector<16x8x16xbf16>, vector<16x8x8xf32> -> vector<16x8x8xf32>
    "tpu.trace_stop"() : () -> ()
    %cst_9 = arith.constant dense<0xFF800000> : vector<16x8xf32>
    %28 = vector.multi_reduction <maximumf>, %27, %cst_9 [2] : vector<16x8x8xf32> to vector<16x8xf32>
    %29 = vector.shape_cast %28 : vector<16x8xf32> to vector<16x8x1xf32>
    %30 = vector.broadcast %29 : vector<16x8x1xf32> to vector<16x8x8xf32>
    %31 = arith.subf %27, %30 : vector<16x8x8xf32>
    %32 = math.exp %31 : vector<16x8x8xf32>
    %cst_10 = arith.constant dense<0.000000e+00> : vector<16x8xf32>
    %33 = vector.multi_reduction <add>, %32, %cst_10 [2] : vector<16x8x8xf32> to vector<16x8xf32>
    %34 = vector.shape_cast %33 : vector<16x8xf32> to vector<16x8x1xf32>
    %35 = tpu.reciprocal %34 {approx = true} : vector<16x8x1xf32> -> vector<16x8x1xf32>
    %36 = vector.broadcast %35 : vector<16x8x1xf32> to vector<16x8x8xf32>
    %37 = arith.mulf %32, %36 : vector<16x8x8xf32>
    %38 = arith.truncf %37 : vector<16x8x8xf32> to vector<16x8x8xbf16>
    "tpu.trace_start"() <{level = 10 : i32, message = "bqk,bkd->bqd"}> : () -> ()
    %cst_11 = arith.constant dense<0.000000e+00> : vector<16x8x16xf32>
    %39 = tpu.matmul %38, %26, %cst_11 {dimension_numbers = #tpu.dot_dimension_numbers<[2], [1], [1], [2], [0, 0, 0, 1, 1, 2], [0], [0]>} : vector<16x8x8xbf16>, vector<16x8x16xbf16>, vector<16x8x16xf32> -> vector<16x8x16xf32>
    "tpu.trace_stop"() : () -> ()
    %40 = arith.truncf %39 : vector<16x8x16xf32> to vector<16x8x16xbf16>
    %41 = vector.shape_cast %40 : vector<16x8x16xbf16> to vector<2x8x8x16xbf16>
    %42 = tpu.transpose %41, [0, 2, 1, 3] : vector<2x8x8x16xbf16> -> vector<2x8x8x16xbf16>
    %43 = vector.shape_cast %42 : vector<2x8x8x16xbf16> to vector<16x128xbf16>
    %c0_12 = arith.constant 0 : index
    %c0_13 = arith.constant 0 : index
    %c0_14 = arith.constant 0 : index
    %44 = vector.load %arg5[%c0_12, %c0_13, %c0_14] : memref<1x128x128xbf16, #tpu.memory_space<vmem>>, vector<1x128x128xbf16>
    %45 = vector.shape_cast %44 : vector<1x128x128xbf16> to vector<128x128xbf16>
    %cst_15 = arith.constant dense<0.000000e+00> : vector<16x128xf32>
    %46 = tpu.matmul %43, %45, %cst_15 {dimension_numbers = #tpu.dot_dimension_numbers<[1], [0], [0], [1], [0, 0, 1, 1], [], []>} : vector<16x128xbf16>, vector<128x128xbf16>, vector<16x128xf32> -> vector<16x128xf32>
    %c0_16 = arith.constant 0 : index
    %c0_17 = arith.constant 0 : index
    %c0_18 = arith.constant 0 : index
    %47 = vector.load %arg6[%c0_16, %c0_17, %c0_18] : memref<1x1x128xf32, #tpu.memory_space<vmem>>, vector<1x1x128xf32>
    %48 = vector.shape_cast %47 : vector<1x1x128xf32> to vector<1x128xf32>
    %49 = vector.broadcast %48 : vector<1x128xf32> to vector<16x128xf32>
    %50 = arith.addf %46, %49 : vector<16x128xf32>
    %51 = arith.addf %3, %50 : vector<16x128xf32>
    %c0_19 = arith.constant 0 : index
    %c0_20 = arith.constant 0 : index
    %c0_21 = arith.constant 0 : index
    %52 = vector.load %arg7[%c0_19, %c0_20, %c0_21] : memref<1x1x128xf32, #tpu.memory_space<vmem>>, vector<1x1x128xf32>
    %53 = vector.shape_cast %52 : vector<1x1x128xf32> to vector<1x128xf32>
    %c0_22 = arith.constant 0 : index
    %c0_23 = arith.constant 0 : index
    %c0_24 = arith.constant 0 : index
    %54 = vector.load %arg8[%c0_22, %c0_23, %c0_24] : memref<1x1x128xf32, #tpu.memory_space<vmem>>, vector<1x1x128xf32>
    %55 = vector.shape_cast %54 : vector<1x1x128xf32> to vector<1x128xf32>
    %cst_25 = arith.constant dense<0.000000e+00> : vector<16xf32>
    %56 = vector.multi_reduction <add>, %51, %cst_25 [1] : vector<16x128xf32> to vector<16xf32>
    %57 = vector.shape_cast %56 : vector<16xf32> to vector<16x1xf32>
    %cst_26 = arith.constant 1.280000e+02 : f32
    %58 = vector.broadcast %cst_26 : f32 to vector<16x1xf32>
    %59 = arith.divf %57, %58 : vector<16x1xf32>
    %60 = vector.broadcast %59 : vector<16x1xf32> to vector<16x128xf32>
    %61 = arith.subf %51, %60 : vector<16x128xf32>
    %62 = arith.mulf %61, %61 : vector<16x128xf32>
    %cst_27 = arith.constant dense<0.000000e+00> : vector<16xf32>
    %63 = vector.multi_reduction <add>, %62, %cst_27 [1] : vector<16x128xf32> to vector<16xf32>
    %64 = vector.shape_cast %63 : vector<16xf32> to vector<16x1xf32>
    %cst_28 = arith.constant 1.280000e+02 : f32
    %65 = vector.broadcast %cst_28 : f32 to vector<16x1xf32>
    %66 = arith.divf %64, %65 : vector<16x1xf32>
    %cst_29 = arith.constant 9.99999974E-6 : f32
    %67 = vector.broadcast %cst_29 : f32 to vector<16x1xf32>
    %68 = arith.addf %66, %67 : vector<16x1xf32>
    %69 = math.rsqrt %68 : vector<16x1xf32>
    %70 = vector.broadcast %69 : vector<16x1xf32> to vector<16x128xf32>
    %71 = arith.mulf %61, %70 : vector<16x128xf32>
    %72 = vector.broadcast %53 : vector<1x128xf32> to vector<16x128xf32>
    %73 = arith.mulf %71, %72 : vector<16x128xf32>
    %74 = vector.broadcast %55 : vector<1x128xf32> to vector<16x128xf32>
    %75 = arith.addf %73, %74 : vector<16x128xf32>
    %c0_30 = arith.constant 0 : index
    %c0_31 = arith.constant 0 : index
    %c0_32 = arith.constant 0 : index
    %76 = vector.load %arg9[%c0_30, %c0_31, %c0_32] : memref<1x128x512xbf16, #tpu.memory_space<vmem>>, vector<1x128x512xbf16>
    %77 = vector.shape_cast %76 : vector<1x128x512xbf16> to vector<128x512xbf16>
    %78 = arith.truncf %75 : vector<16x128xf32> to vector<16x128xbf16>
    %cst_33 = arith.constant dense<0.000000e+00> : vector<16x512xf32>
    %79 = tpu.matmul %78, %77, %cst_33 {dimension_numbers = #tpu.dot_dimension_numbers<[1], [0], [0], [1], [0, 0, 1, 1], [], []>} : vector<16x128xbf16>, vector<128x512xbf16>, vector<16x512xf32> -> vector<16x512xf32>
    %c0_34 = arith.constant 0 : index
    %c0_35 = arith.constant 0 : index
    %c0_36 = arith.constant 0 : index
    %80 = vector.load %arg10[%c0_34, %c0_35, %c0_36] : memref<1x1x512xf32, #tpu.memory_space<vmem>>, vector<1x1x512xf32>
    %81 = vector.shape_cast %80 : vector<1x1x512xf32> to vector<1x512xf32>
    %82 = vector.broadcast %81 : vector<1x512xf32> to vector<16x512xf32>
    %83 = arith.addf %79, %82 : vector<16x512xf32>
    %cst_37 = arith.constant 5.000000e-01 : f32
    %84 = vector.broadcast %cst_37 : f32 to vector<16x512xf32>
    %85 = arith.mulf %84, %83 : vector<16x512xf32>
    %cst_38 = arith.constant 0.707106769 : f32
    %86 = vector.broadcast %cst_38 : f32 to vector<16x512xf32>
    %87 = arith.mulf %83, %86 : vector<16x512xf32>
    %88 = math.absf %87 : vector<16x512xf32>
    %cst_39 = arith.constant 0.327591091 : f32
    %89 = vector.broadcast %cst_39 : f32 to vector<16x512xf32>
    %90 = arith.mulf %89, %88 : vector<16x512xf32>
    %cst_40 = arith.constant 1.000000e+00 : f32
    %91 = vector.broadcast %cst_40 : f32 to vector<16x512xf32>
    %92 = arith.addf %91, %90 : vector<16x512xf32>
    %cst_41 = arith.constant 1.000000e+00 : f32
    %93 = vector.broadcast %cst_41 : f32 to vector<16x512xf32>
    %94 = arith.divf %93, %92 : vector<16x512xf32>
    %cst_42 = arith.constant 1.06140542 : f32
    %95 = vector.broadcast %cst_42 : f32 to vector<16x512xf32>
    %96 = arith.mulf %95, %94 : vector<16x512xf32>
    %cst_43 = arith.constant -1.45315206 : f32
    %97 = vector.broadcast %cst_43 : f32 to vector<16x512xf32>
    %98 = arith.addf %96, %97 : vector<16x512xf32>
    %99 = arith.mulf %98, %94 : vector<16x512xf32>
    %cst_44 = arith.constant 1.42141378 : f32
    %100 = vector.broadcast %cst_44 : f32 to vector<16x512xf32>
    %101 = arith.addf %99, %100 : vector<16x512xf32>
    %102 = arith.mulf %101, %94 : vector<16x512xf32>
    %cst_45 = arith.constant -0.284496725 : f32
    %103 = vector.broadcast %cst_45 : f32 to vector<16x512xf32>
    %104 = arith.addf %102, %103 : vector<16x512xf32>
    %105 = arith.mulf %104, %94 : vector<16x512xf32>
    %cst_46 = arith.constant 0.254829586 : f32
    %106 = vector.broadcast %cst_46 : f32 to vector<16x512xf32>
    %107 = arith.addf %105, %106 : vector<16x512xf32>
    %108 = arith.mulf %107, %94 : vector<16x512xf32>
    %cst_47 = arith.constant 0.000000e+00 : f32
    %109 = vector.broadcast %cst_47 : f32 to vector<16x512xf32>
    %110 = arith.subf %109, %88 : vector<16x512xf32>
    %111 = arith.mulf %110, %88 : vector<16x512xf32>
    %112 = math.exp %111 : vector<16x512xf32>
    %113 = arith.mulf %108, %112 : vector<16x512xf32>
    %cst_48 = arith.constant 1.000000e+00 : f32
    %114 = vector.broadcast %cst_48 : f32 to vector<16x512xf32>
    %115 = arith.subf %114, %113 : vector<16x512xf32>
    %cst_49 = arith.constant 0.000000e+00 : f32
    %116 = vector.broadcast %cst_49 : f32 to vector<16x512xf32>
    %117 = arith.cmpf oge, %87, %116 : vector<16x512xf32>
    %cst_50 = arith.constant 0.000000e+00 : f32
    %118 = vector.broadcast %cst_50 : f32 to vector<16x512xf32>
    %119 = arith.subf %118, %115 : vector<16x512xf32>
    %120 = arith.select %117, %115, %119 : vector<16x512xi1>, vector<16x512xf32>
    %cst_51 = arith.constant 1.000000e+00 : f32
    %121 = vector.broadcast %cst_51 : f32 to vector<16x512xf32>
    %122 = arith.addf %121, %120 : vector<16x512xf32>
    %123 = arith.mulf %85, %122 : vector<16x512xf32>
    %c0_52 = arith.constant 0 : index
    %c0_53 = arith.constant 0 : index
    %c0_54 = arith.constant 0 : index
    %124 = vector.load %arg11[%c0_52, %c0_53, %c0_54] : memref<1x512x128xbf16, #tpu.memory_space<vmem>>, vector<1x512x128xbf16>
    %125 = vector.shape_cast %124 : vector<1x512x128xbf16> to vector<512x128xbf16>
    %126 = arith.truncf %123 : vector<16x512xf32> to vector<16x512xbf16>
    %cst_55 = arith.constant dense<0.000000e+00> : vector<16x128xf32>
    %127 = tpu.matmul %126, %125, %cst_55 {dimension_numbers = #tpu.dot_dimension_numbers<[1], [0], [0], [1], [0, 0, 1, 1], [], []>} : vector<16x512xbf16>, vector<512x128xbf16>, vector<16x128xf32> -> vector<16x128xf32>
    %c0_56 = arith.constant 0 : index
    %c0_57 = arith.constant 0 : index
    %c0_58 = arith.constant 0 : index
    %128 = vector.load %arg12[%c0_56, %c0_57, %c0_58] : memref<1x1x128xf32, #tpu.memory_space<vmem>>, vector<1x1x128xf32>
    %129 = vector.shape_cast %128 : vector<1x1x128xf32> to vector<1x128xf32>
    %130 = vector.broadcast %129 : vector<1x128xf32> to vector<16x128xf32>
    %131 = arith.addf %127, %130 : vector<16x128xf32>
    %132 = arith.addf %75, %131 : vector<16x128xf32>
    %c0_59 = arith.constant 0 : index
    %c0_60 = arith.constant 0 : index
    %c0_61 = arith.constant 0 : index
    %133 = vector.load %arg13[%c0_59, %c0_60, %c0_61] : memref<1x1x128xf32, #tpu.memory_space<vmem>>, vector<1x1x128xf32>
    %134 = vector.shape_cast %133 : vector<1x1x128xf32> to vector<1x128xf32>
    %c0_62 = arith.constant 0 : index
    %c0_63 = arith.constant 0 : index
    %c0_64 = arith.constant 0 : index
    %135 = vector.load %arg14[%c0_62, %c0_63, %c0_64] : memref<1x1x128xf32, #tpu.memory_space<vmem>>, vector<1x1x128xf32>
    %136 = vector.shape_cast %135 : vector<1x1x128xf32> to vector<1x128xf32>
    %cst_65 = arith.constant dense<0.000000e+00> : vector<16xf32>
    %137 = vector.multi_reduction <add>, %132, %cst_65 [1] : vector<16x128xf32> to vector<16xf32>
    %138 = vector.shape_cast %137 : vector<16xf32> to vector<16x1xf32>
    %cst_66 = arith.constant 1.280000e+02 : f32
    %139 = vector.broadcast %cst_66 : f32 to vector<16x1xf32>
    %140 = arith.divf %138, %139 : vector<16x1xf32>
    %141 = vector.broadcast %140 : vector<16x1xf32> to vector<16x128xf32>
    %142 = arith.subf %132, %141 : vector<16x128xf32>
    %143 = arith.mulf %142, %142 : vector<16x128xf32>
    %cst_67 = arith.constant dense<0.000000e+00> : vector<16xf32>
    %144 = vector.multi_reduction <add>, %143, %cst_67 [1] : vector<16x128xf32> to vector<16xf32>
    %145 = vector.shape_cast %144 : vector<16xf32> to vector<16x1xf32>
    %cst_68 = arith.constant 1.280000e+02 : f32
    %146 = vector.broadcast %cst_68 : f32 to vector<16x1xf32>
    %147 = arith.divf %145, %146 : vector<16x1xf32>
    %cst_69 = arith.constant 9.99999974E-6 : f32
    %148 = vector.broadcast %cst_69 : f32 to vector<16x1xf32>
    %149 = arith.addf %147, %148 : vector<16x1xf32>
    %150 = math.rsqrt %149 : vector<16x1xf32>
    %151 = vector.broadcast %150 : vector<16x1xf32> to vector<16x128xf32>
    %152 = arith.mulf %142, %151 : vector<16x128xf32>
    %153 = vector.broadcast %134 : vector<1x128xf32> to vector<16x128xf32>
    %154 = arith.mulf %152, %153 : vector<16x128xf32>
    %155 = vector.broadcast %136 : vector<1x128xf32> to vector<16x128xf32>
    %156 = arith.addf %154, %155 : vector<16x128xf32>
    %c0_70 = arith.constant 0 : index
    %c0_71 = arith.constant 0 : index
    %157 = vector.load %arg15[%c0_70, %c0_71] : memref<16x128xf32, #tpu.memory_space<vmem>>, vector<16x128xf32>
    tpu.vector_store %arg15[%c0_70, %c0_71], %156 {strides = array<i32>} : memref<16x128xf32, #tpu.memory_space<vmem>>, vector<16x128xf32>,
    return
  }
  func.func @transform_0(%arg0: i32, %arg1: i32) -> (i32, i32) {
    %c0_i32 = arith.constant 0 : i32
    %c0_i32_0 = arith.constant 0 : i32
    return %arg0, %c0_i32 : i32, i32
  }
  func.func @transform_1(%arg0: i32, %arg1: i32) -> (i32, i32, i32) {
    %c0_i32 = arith.constant 0 : i32
    %c0_i32_0 = arith.constant 0 : i32
    %c0_i32_1 = arith.constant 0 : i32
    return %arg1, %c0_i32, %c0_i32_0 : i32, i32, i32
  }
  func.func @transform_2(%arg0: i32, %arg1: i32) -> (i32, i32, i32) {
    %c0_i32 = arith.constant 0 : i32
    %c0_i32_0 = arith.constant 0 : i32
    %c0_i32_1 = arith.constant 0 : i32
    return %arg1, %c0_i32, %c0_i32_0 : i32, i32, i32
  }
  func.func @transform_3(%arg0: i32, %arg1: i32) -> (i32, i32, i32) {
    %c0_i32 = arith.constant 0 : i32
    %c0_i32_0 = arith.constant 0 : i32
    %c0_i32_1 = arith.constant 0 : i32
    return %arg1, %c0_i32, %c0_i32_0 : i32, i32, i32
  }
  func.func @transform_4(%arg0: i32, %arg1: i32) -> (i32, i32, i32) {
    %c0_i32 = arith.constant 0 : i32
    %c0_i32_0 = arith.constant 0 : i32
    %c0_i32_1 = arith.constant 0 : i32
    return %arg1, %c0_i32, %c0_i32_0 : i32, i32, i32
  }
  func.func @transform_5(%arg0: i32, %arg1: i32) -> (i32, i32, i32) {
    %c0_i32 = arith.constant 0 : i32
    %c0_i32_0 = arith.constant 0 : i32
    %c0_i32_1 = arith.constant 0 : i32
    return %arg1, %c0_i32, %c0_i32_0 : i32, i32, i32
  }
  func.func @transform_6(%arg0: i32, %arg1: i32) -> (i32, i32, i32) {
    %c0_i32 = arith.constant 0 : i32
    %c0_i32_0 = arith.constant 0 : i32
    %c0_i32_1 = arith.constant 0 : i32
    return %arg1, %c0_i32, %c0_i32_0 : i32, i32, i32
  }
  func.func @transform_7(%arg0: i32, %arg1: i32) -> (i32, i32, i32) {
    %c0_i32 = arith.constant 0 : i32
    %c0_i32_0 = arith.constant 0 : i32
    %c0_i32_1 = arith.constant 0 : i32
    return %arg1, %c0_i32, %c0_i32_0 : i32, i32, i32
  }
  func.func @transform_8(%arg0: i32, %arg1: i32) -> (i32, i32, i32) {
    %c0_i32 = arith.constant 0 : i32
    %c0_i32_0 = arith.constant 0 : i32
    %c0_i32_1 = arith.constant 0 : i32
    return %arg1, %c0_i32, %c0_i32_0 : i32, i32, i32
  }
  func.func @transform_9(%arg0: i32, %arg1: i32) -> (i32, i32, i32) {
    %c0_i32 = arith.constant 0 : i32
    %c0_i32_0 = arith.constant 0 : i32
    %c0_i32_1 = arith.constant 0 : i32
    return %arg1, %c0_i32, %c0_i32_0 : i32, i32, i32
  }
  func.func @transform_10(%arg0: i32, %arg1: i32) -> (i32, i32, i32) {
    %c0_i32 = arith.constant 0 : i32
    %c0_i32_0 = arith.constant 0 : i32
    %c0_i32_1 = arith.constant 0 : i32
    return %arg1, %c0_i32, %c0_i32_0 : i32, i32, i32
  }
  func.func @transform_11(%arg0: i32, %arg1: i32) -> (i32, i32, i32) {
    %c0_i32 = arith.constant 0 : i32
    %c0_i32_0 = arith.constant 0 : i32
    %c0_i32_1 = arith.constant 0 : i32
    return %arg1, %c0_i32, %c0_i32_0 : i32, i32, i32
  }
  func.func @transform_12(%arg0: i32, %arg1: i32) -> (i32, i32, i32) {
    %c0_i32 = arith.constant 0 : i32
    %c0_i32_0 = arith.constant 0 : i32
    %c0_i32_1 = arith.constant 0 : i32
    return %arg1, %c0_i32, %c0_i32_0 : i32, i32, i32
  }
  func.func @transform_13(%arg0: i32, %arg1: i32) -> (i32, i32) {
    %c0_i32 = arith.constant 0 : i32
    %c0_i32_0 = arith.constant 0 : i32
    return %arg0, %c0_i32 : i32, i32
  }
}

</mosaic_0001>

<llo_original>
// kernel: tpu_custom_call.1
$region0: #{tpu_custom_call.1}
  #allocation0 [shape = 'u32[]', space=smem, size = 0x4, offset = 0x4, fixed_abs, tag = 'smem constant byte address 0x4 - core index']
  #allocation1 [shape = 'u32[144,128]{1,0:T(1,128)}', space=vmem, size = 0x12000, scoped, tag = 'internal scratch']
  %s0 = inlined_call_operand.hbm [shape: f32[16,128], index: 0, kind: input, shape index: {}, may-alias: {0,13}]
  %s1 = inlined_call_operand.hbm [shape: bf16[2,128,384], index: 1, kind: input, shape index: {}]
  %s2 = inlined_call_operand.vmem [shape: f32[2,1,384], index: 2, kind: input, shape index: {}]
  %s3 = inlined_call_operand.hbm [shape: bf16[2,128,128], index: 3, kind: input, shape index: {}]
  %s4 = inlined_call_operand.vmem [shape: f32[2,1,128], index: 4, kind: input, shape index: {}]
  %s5 = inlined_call_operand.vmem [shape: f32[2,1,128], index: 5, kind: input, shape index: {}]
  %s6 = inlined_call_operand.vmem [shape: f32[2,1,128], index: 6, kind: input, shape index: {}]
  %s7 = inlined_call_operand.hbm [shape: bf16[2,128,512], index: 7, kind: input, shape index: {}]
  %s8 = inlined_call_operand.vmem [shape: f32[2,1,512], index: 8, kind: input, shape index: {}]
  %s9 = inlined_call_operand.hbm [shape: bf16[2,512,128], index: 9, kind: input, shape index: {}]
  %s10 = inlined_call_operand.vmem [shape: f32[2,1,128], index: 10, kind: input, shape index: {}]
  %s11 = inlined_call_operand.vmem [shape: f32[2,1,128], index: 11, kind: input, shape index: {}]
  %s12 = inlined_call_operand.vmem [shape: f32[2,1,128], index: 12, kind: input, shape index: {}]
  %s13 = inlined_call_operand.hbm [shape: f32[16,128], index: 13, kind: output, shape index: {}, may-alias: {0,13}]
  %s14 = sld [smem:[#allocation0]]
  $region109: #{tpu_custom_call.1} parent=0
    _
  %s16 = ssub.s32 1, %s14
  %s17 = scalar_select 0, %s16, %s14
  $region1: #{tpu_custom_call.1} parent=0
    #allocation2 [shape = 'u8[8192]{0}', space=vmem, size = 0x2000, scoped, tag = 'input window, operand 0, single buffered']
    #allocation3 [shape = 's32[2]{0}', space=sflag, size = 0x8, scoped, tag = 'scoped memory for tpu_custom_call.1']
    #allocation4 [shape = 's32[2]{0}', space=sflag, size = 0x8, scoped, tag = 'scoped memory for tpu_custom_call.1']
    #allocation5 [shape = 'u8[196608]{0}', space=vmem, size = 0x30000, scoped, tag = 'input window, operand 1']
    #allocation6 [shape = 's32[2]{0}', space=sflag, size = 0x8, scoped, tag = 'scoped memory for tpu_custom_call.1']
    #allocation7 [shape = 'u8[65536]{0}', space=vmem, size = 0x10000, scoped, tag = 'input window, operand 3']
    #allocation8 [shape = 'u8[262144]{0}', space=vmem, size = 0x40000, scoped, tag = 'input window, operand 7']
    #allocation9 [shape = 's32[2]{0}', space=sflag, size = 0x8, scoped, tag = 'scoped memory for tpu_custom_call.1']
    #allocation10 [shape = 'u8[262144]{0}', space=vmem, size = 0x40000, scoped, tag = 'input window, operand 9']
    #allocation11 [shape = 'u8[8192]{0}', space=vmem, size = 0x2000, scoped, tag = 'output window, operand 0, single buffered']
    %18 = vsyncpa [#allocation3], 0
    %19 = vsyncpa [#allocation6], 0
    %s20 = scalar_lea.sflag [#allocation6], 1
    %21 = vsyncpa %s20, 0
    %22 = vsyncpa [#allocation9], 0
    %s23 = scalar_lea.sflag [#allocation9], 1
    %24 = vsyncpa %s23, 0
    %25 = vsyncpa [#allocation4], 0
    loop: start=0, step=1, limit=4
    $region2: #{tpu_custom_call.1} parent=1 // loop_pre_header
      _
    $region3: #{tpu_custom_call.1} parent=1 // loop_header
      %s27 = sphi 0, %s31
      %p28 = scmp.ge.s32.totalorder %s27, 4
      %s34 = sphi 0, %s46
      %s35 = sphi 0, %s42
      %s36 = sphi 0, %s34
      %s37 = sphi 0, %s35
      %s38 = sphi 0, %s36
      %s39 = sphi 0, %s37
      %s49 = sphi 0, %s51
      %s52 = sphi 0, %s49
      %s53 = sphi 0, %s52
      %s69 = sphi 0, %s53
      %s75 = sphi 0, %s77
      %s78 = sphi 0, %s75
      %s79 = sphi 0, %s78
      %s95 = sphi 0, %s79
      %s101 = sphi 0, %s103
      %s104 = sphi 0, %s101
      %s105 = sphi 0, %s104
      %s121 = sphi 0, %s105
      %s127 = sphi 0, %s129
      %s130 = sphi 0, %s127
      %s131 = sphi 0, %s130
      %s147 = sphi 0, %s131
      %s153 = sphi 0, %s155
      %s156 = sphi 0, %s153
      %s157 = sphi 0, %s156
      %s173 = sphi 0, %s157
      %s179 = sphi 0, %s181
      %s182 = sphi 0, %s179
      %s183 = sphi 0, %s182
      %s199 = sphi 0, %s183
      %s205 = sphi 0, %s207
      %s208 = sphi 0, %s205
      %s209 = sphi 0, %s208
      %s225 = sphi 0, %s209
      %s231 = sphi 0, %s233
      %s234 = sphi 0, %s231
      %s235 = sphi 0, %s234
      %s251 = sphi 0, %s235
      %s257 = sphi 0, %s259
      %s260 = sphi 0, %s257
      %s261 = sphi 0, %s260
      %s277 = sphi 0, %s261
      %s283 = sphi 0, %s285
      %s286 = sphi 0, %s283
      %s287 = sphi 0, %s286
      %s303 = sphi 0, %s287
      %s309 = sphi 0, %s311
      %s312 = sphi 0, %s309
      %s313 = sphi 0, %s312
      %s329 = sphi 0, %s313
      %s335 = sphi 0, %s337
      %s338 = sphi 0, %s335
      %s339 = sphi 0, %s338
      %s355 = sphi 0, %s339
      %s361 = sphi 0, %s363
      %s364 = sphi 0, %s361
      %s365 = sphi 0, %s364
      %s381 = sphi 0, %s365
      %s387 = sphi 0, %s389
      %s390 = sphi 0, %s387
      %s391 = sphi 0, %s390
      %s407 = sphi 0, %s391
    $region4: #{tpu_custom_call.1} parent=1 // loop_header_branch
      %30 = sbr.rel (%p28) target = $region8
    $region5: #{tpu_custom_call.1} parent=1 // loop_body
      %s32 = ssub.s32 %s27, 1
      %s33 = ssub.s32 %s27, 2
      %s40 = sadd.s32 1, %s35
      %p41 = scmp.ge.s32.totalorder %s40, 2
      %s42 = scalar_select %p41, 0, %s40
      %s43 = sadd.s32 1, %s34
      %s44 = scalar_select %p41, %s43, %s34
      %p45 = scmp.ge.s32.totalorder %s44, 1
      %s46 = scalar_select %p45, 0, %s44
      %s47 = ssub.s32 %s34, %s46
      %p48 = scmp.eq.s32.totalorder %s47, 0
      %s50 = sadd.s32 %s49, 1
      %s51 = scalar_select %p48, %s49, %s50
      %p54 = pneg %p48
      %p55 = scmp.eq.s32.totalorder %s27, 1
      %p56 = por %p54, %p55
      %p57 = scmp.ne.s32.totalorder %s49, %s52
      %p58 = scmp.eq.s32.totalorder %s27, 0
      %p59 = por %p57, %p58
      %p60 = scmp.ne.s32.totalorder %s49, %s52
      %p61 = scmp.eq.s32.totalorder %s32, 1
      %p62 = por %p60, %p61
      %p63 = scmp.ne.s32.totalorder %s52, %s53
      %p64 = scmp.eq.s32.totalorder %s32, 0
      %p65 = por %p63, %p64
      %p66 = scmp.ne.s32.totalorder %s52, %s53
      %p67 = scmp.eq.s32.totalorder %s33, 1
      %p68 = por %p66, %p67
      %p70 = scmp.ne.s32.totalorder %s53, %s69
      %p71 = scmp.eq.s32.totalorder %s33, 0
      %p72 = por %p70, %p71
      %s73 = ssub.s32 %s35, %s42
      %p74 = scmp.eq.s32.totalorder %s73, 0
      %s76 = sadd.s32 %s75, 1
      %s77 = scalar_select %p74, %s75, %s76
      %p80 = pneg %p74
      %p81 = scmp.eq.s32.totalorder %s27, 1
      %p82 = por %p80, %p81
      %p83 = scmp.ne.s32.totalorder %s75, %s78
      %p84 = scmp.eq.s32.totalorder %s27, 0
      %p85 = por %p83, %p84
      %p86 = scmp.ne.s32.totalorder %s75, %s78
      %p87 = scmp.eq.s32.totalorder %s32, 1
      %p88 = por %p86, %p87
      %p89 = scmp.ne.s32.totalorder %s78, %s79
      %p90 = scmp.eq.s32.totalorder %s32, 0
      %p91 = por %p89, %p90
      %p92 = scmp.ne.s32.totalorder %s78, %s79
      %p93 = scmp.eq.s32.totalorder %s33, 1
      %p94 = por %p92, %p93
      %p96 = scmp.ne.s32.totalorder %s79, %s95
      %p97 = scmp.eq.s32.totalorder %s33, 0
      %p98 = por %p96, %p97
      %s99 = ssub.s32 %s35, %s42
      %p100 = scmp.eq.s32.totalorder %s99, 0
      %s102 = sadd.s32 %s101, 1
      %s103 = scalar_select %p100, %s101, %s102
      %p106 = pneg %p100
      %p107 = scmp.eq.s32.totalorder %s27, 1
      %p108 = por %p106, %p107
      %p109 = scmp.ne.s32.totalorder %s101, %s104
      %p110 = scmp.eq.s32.totalorder %s27, 0
      %p111 = por %p109, %p110
      %p112 = scmp.ne.s32.totalorder %s101, %s104
      %p113 = scmp.eq.s32.totalorder %s32, 1
      %p114 = por %p112, %p113
      %p115 = scmp.ne.s32.totalorder %s104, %s105
      %p116 = scmp.eq.s32.totalorder %s32, 0
      %p117 = por %p115, %p116
      %p118 = scmp.ne.s32.totalorder %s104, %s105
      %p119 = scmp.eq.s32.totalorder %s33, 1
      %p120 = por %p118, %p119
      %p122 = scmp.ne.s32.totalorder %s105, %s121
      %p123 = scmp.eq.s32.totalorder %s33, 0
      %p124 = por %p122, %p123
      %s125 = ssub.s32 %s35, %s42
      %p126 = scmp.eq.s32.totalorder %s125, 0
      %s128 = sadd.s32 %s127, 1
      %s129 = scalar_select %p126, %s127, %s128
      %p132 = pneg %p126
      %p133 = scmp.eq.s32.totalorder %s27, 1
      %p134 = por %p132, %p133
      %p135 = scmp.ne.s32.totalorder %s127, %s130
      %p136 = scmp.eq.s32.totalorder %s27, 0
      %p137 = por %p135, %p136
      %p138 = scmp.ne.s32.totalorder %s127, %s130
      %p139 = scmp.eq.s32.totalorder %s32, 1
      %p140 = por %p138, %p139
      %p141 = scmp.ne.s32.totalorder %s130, %s131
      %p142 = scmp.eq.s32.totalorder %s32, 0
      %p143 = por %p141, %p142
      %p144 = scmp.ne.s32.totalorder %s130, %s131
      %p145 = scmp.eq.s32.totalorder %s33, 1
      %p146 = por %p144, %p145
      %p148 = scmp.ne.s32.totalorder %s131, %s147
      %p149 = scmp.eq.s32.totalorder %s33, 0
      %p150 = por %p148, %p149
      %s151 = ssub.s32 %s35, %s42
      %p152 = scmp.eq.s32.totalorder %s151, 0
      %s154 = sadd.s32 %s153, 1
      %s155 = scalar_select %p152, %s153, %s154
      %p158 = pneg %p152
      %p159 = scmp.eq.s32.totalorder %s27, 1
      %p160 = por %p158, %p159
      %p161 = scmp.ne.s32.totalorder %s153, %s156
      %p162 = scmp.eq.s32.totalorder %s27, 0
      %p163 = por %p161, %p162
      %p164 = scmp.ne.s32.totalorder %s153, %s156
      %p165 = scmp.eq.s32.totalorder %s32, 1
      %p166 = por %p164, %p165
      %p167 = scmp.ne.s32.totalorder %s156, %s157
      %p168 = scmp.eq.s32.totalorder %s32, 0
      %p169 = por %p167, %p168
      %p170 = scmp.ne.s32.totalorder %s156, %s157
      %p171 = scmp.eq.s32.totalorder %s33, 1
      %p172 = por %p170, %p171
      %p174 = scmp.ne.s32.totalorder %s157, %s173
      %p175 = scmp.eq.s32.totalorder %s33, 0
      %p176 = por %p174, %p175
      %s177 = ssub.s32 %s35, %s42
      %p178 = scmp.eq.s32.totalorder %s177, 0
      %s180 = sadd.s32 %s179, 1
      %s181 = scalar_select %p178, %s179, %s180
      %p184 = pneg %p178
      %p185 = scmp.eq.s32.totalorder %s27, 1
      %p186 = por %p184, %p185
      %p187 = scmp.ne.s32.totalorder %s179, %s182
      %p188 = scmp.eq.s32.totalorder %s27, 0
      %p189 = por %p187, %p188
      %p190 = scmp.ne.s32.totalorder %s179, %s182
      %p191 = scmp.eq.s32.totalorder %s32, 1
      %p192 = por %p190, %p191
      %p193 = scmp.ne.s32.totalorder %s182, %s183
      %p194 = scmp.eq.s32.totalorder %s32, 0
      %p195 = por %p193, %p194
      %p196 = scmp.ne.s32.totalorder %s182, %s183
      %p197 = scmp.eq.s32.totalorder %s33, 1
      %p198 = por %p196, %p197
      %p200 = scmp.ne.s32.totalorder %s183, %s199
      %p201 = scmp.eq.s32.totalorder %s33, 0
      %p202 = por %p200, %p201
      %s203 = ssub.s32 %s35, %s42
      %p204 = scmp.eq.s32.totalorder %s203, 0
      %s206 = sadd.s32 %s205, 1
      %s207 = scalar_select %p204, %s205, %s206
      %p210 = pneg %p204
      %p211 = scmp.eq.s32.totalorder %s27, 1
      %p212 = por %p210, %p211
      %p213 = scmp.ne.s32.totalorder %s205, %s208
      %p214 = scmp.eq.s32.totalorder %s27, 0
      %p215 = por %p213, %p214
      %p216 = scmp.ne.s32.totalorder %s205, %s208
      %p217 = scmp.eq.s32.totalorder %s32, 1
      %p218 = por %p216, %p217
      %p219 = scmp.ne.s32.totalorder %s208, %s209
      %p220 = scmp.eq.s32.totalorder %s32, 0
      %p221 = por %p219, %p220
      %p222 = scmp.ne.s32.totalorder %s208, %s209
      %p223 = scmp.eq.s32.totalorder %s33, 1
      %p224 = por %p222, %p223
      %p226 = scmp.ne.s32.totalorder %s209, %s225
      %p227 = scmp.eq.s32.totalorder %s33, 0
      %p228 = por %p226, %p227
      %s229 = ssub.s32 %s35, %s42
      %p230 = scmp.eq.s32.totalorder %s229, 0
      %s232 = sadd.s32 %s231, 1
      %s233 = scalar_select %p230, %s231, %s232
      %p236 = pneg %p230
      %p237 = scmp.eq.s32.totalorder %s27, 1
      %p238 = por %p236, %p237
      %p239 = scmp.ne.s32.totalorder %s231, %s234
      %p240 = scmp.eq.s32.totalorder %s27, 0
      %p241 = por %p239, %p240
      %p242 = scmp.ne.s32.totalorder %s231, %s234
      %p243 = scmp.eq.s32.totalorder %s32, 1
      %p244 = por %p242, %p243
      %p245 = scmp.ne.s32.totalorder %s234, %s235
      %p246 = scmp.eq.s32.totalorder %s32, 0
      %p247 = por %p245, %p246
      %p248 = scmp.ne.s32.totalorder %s234, %s235
      %p249 = scmp.eq.s32.totalorder %s33, 1
      %p250 = por %p248, %p249
      %p252 = scmp.ne.s32.totalorder %s235, %s251
      %p253 = scmp.eq.s32.totalorder %s33, 0
      %p254 = por %p252, %p253
      %s255 = ssub.s32 %s35, %s42
      %p256 = scmp.eq.s32.totalorder %s255, 0
      %s258 = sadd.s32 %s257, 1
      %s259 = scalar_select %p256, %s257, %s258
      %p262 = pneg %p256
      %p263 = scmp.eq.s32.totalorder %s27, 1
      %p264 = por %p262, %p263
      %p265 = scmp.ne.s32.totalorder %s257, %s260
      %p266 = scmp.eq.s32.totalorder %s27, 0
      %p267 = por %p265, %p266
      %p268 = scmp.ne.s32.totalorder %s257, %s260
      %p269 = scmp.eq.s32.totalorder %s32, 1
      %p270 = por %p268, %p269
      %p271 = scmp.ne.s32.totalorder %s260, %s261
      %p272 = scmp.eq.s32.totalorder %s32, 0
      %p273 = por %p271, %p272
      %p274 = scmp.ne.s32.totalorder %s260, %s261
      %p275 = scmp.eq.s32.totalorder %s33, 1
      %p276 = por %p274, %p275
      %p278 = scmp.ne.s32.totalorder %s261, %s277
      %p279 = scmp.eq.s32.totalorder %s33, 0
      %p280 = por %p278, %p279
      %s281 = ssub.s32 %s35, %s42
      %p282 = scmp.eq.s32.totalorder %s281, 0
      %s284 = sadd.s32 %s283, 1
      %s285 = scalar_select %p282, %s283, %s284
      %p288 = pneg %p282
      %p289 = scmp.eq.s32.totalorder %s27, 1
      %p290 = por %p288, %p289
      %p291 = scmp.ne.s32.totalorder %s283, %s286
      %p292 = scmp.eq.s32.totalorder %s27, 0
      %p293 = por %p291, %p292
      %p294 = scmp.ne.s32.totalorder %s283, %s286
      %p295 = scmp.eq.s32.totalorder %s32, 1
      %p296 = por %p294, %p295
      %p297 = scmp.ne.s32.totalorder %s286, %s287
      %p298 = scmp.eq.s32.totalorder %s32, 0
      %p299 = por %p297, %p298
      %p300 = scmp.ne.s32.totalorder %s286, %s287
      %p301 = scmp.eq.s32.totalorder %s33, 1
      %p302 = por %p300, %p301
      %p304 = scmp.ne.s32.totalorder %s287, %s303
      %p305 = scmp.eq.s32.totalorder %s33, 0
      %p306 = por %p304, %p305
      %s307 = ssub.s32 %s35, %s42
      %p308 = scmp.eq.s32.totalorder %s307, 0
      %s310 = sadd.s32 %s309, 1
      %s311 = scalar_select %p308, %s309, %s310
      %p314 = pneg %p308
      %p315 = scmp.eq.s32.totalorder %s27, 1
      %p316 = por %p314, %p315
      %p317 = scmp.ne.s32.totalorder %s309, %s312
      %p318 = scmp.eq.s32.totalorder %s27, 0
      %p319 = por %p317, %p318
      %p320 = scmp.ne.s32.totalorder %s309, %s312
      %p321 = scmp.eq.s32.totalorder %s32, 1
      %p322 = por %p320, %p321
      %p323 = scmp.ne.s32.totalorder %s312, %s313
      %p324 = scmp.eq.s32.totalorder %s32, 0
      %p325 = por %p323, %p324
      %p326 = scmp.ne.s32.totalorder %s312, %s313
      %p327 = scmp.eq.s32.totalorder %s33, 1
      %p328 = por %p326, %p327
      %p330 = scmp.ne.s32.totalorder %s313, %s329
      %p331 = scmp.eq.s32.totalorder %s33, 0
      %p332 = por %p330, %p331
      %s333 = ssub.s32 %s35, %s42
      %p334 = scmp.eq.s32.totalorder %s333, 0
      %s336 = sadd.s32 %s335, 1
      %s337 = scalar_select %p334, %s335, %s336
      %p340 = pneg %p334
      %p341 = scmp.eq.s32.totalorder %s27, 1
      %p342 = por %p340, %p341
      %p343 = scmp.ne.s32.totalorder %s335, %s338
      %p344 = scmp.eq.s32.totalorder %s27, 0
      %p345 = por %p343, %p344
      %p346 = scmp.ne.s32.totalorder %s335, %s338
      %p347 = scmp.eq.s32.totalorder %s32, 1
      %p348 = por %p346, %p347
      %p349 = scmp.ne.s32.totalorder %s338, %s339
      %p350 = scmp.eq.s32.totalorder %s32, 0
      %p351 = por %p349, %p350
      %p352 = scmp.ne.s32.totalorder %s338, %s339
      %p353 = scmp.eq.s32.totalorder %s33, 1
      %p354 = por %p352, %p353
      %p356 = scmp.ne.s32.totalorder %s339, %s355
      %p357 = scmp.eq.s32.totalorder %s33, 0
      %p358 = por %p356, %p357
      %s359 = ssub.s32 %s35, %s42
      %p360 = scmp.eq.s32.totalorder %s359, 0
      %s362 = sadd.s32 %s361, 1
      %s363 = scalar_select %p360, %s361, %s362
      %p366 = pneg %p360
      %p367 = scmp.eq.s32.totalorder %s27, 1
      %p368 = por %p366, %p367
      %p369 = scmp.ne.s32.totalorder %s361, %s364
      %p370 = scmp.eq.s32.totalorder %s27, 0
      %p371 = por %p369, %p370
      %p372 = scmp.ne.s32.totalorder %s361, %s364
      %p373 = scmp.eq.s32.totalorder %s32, 1
      %p374 = por %p372, %p373
      %p375 = scmp.ne.s32.totalorder %s364, %s365
      %p376 = scmp.eq.s32.totalorder %s32, 0
      %p377 = por %p375, %p376
      %p378 = scmp.ne.s32.totalorder %s364, %s365
      %p379 = scmp.eq.s32.totalorder %s33, 1
      %p380 = por %p378, %p379
      %p382 = scmp.ne.s32.totalorder %s365, %s381
      %p383 = scmp.eq.s32.totalorder %s33, 0
      %p384 = por %p382, %p383
      %s385 = ssub.s32 %s34, %s46
      %p386 = scmp.eq.s32.totalorder %s385, 0
      %s388 = sadd.s32 %s387, 1
      %s389 = scalar_select %p386, %s387, %s388
      %p392 = pneg %p386
      %p393 = scmp.eq.s32.totalorder %s27, 1
      %p394 = por %p392, %p393
      %p395 = scmp.ne.s32.totalorder %s387, %s390
      %p396 = scmp.eq.s32.totalorder %s27, 0
      %p397 = por %p395, %p396
      %p398 = scmp.ne.s32.totalorder %s387, %s390
      %p399 = scmp.eq.s32.totalorder %s32, 1
      %p400 = por %p398, %p399
      %p401 = scmp.ne.s32.totalorder %s390, %s391
      %p402 = scmp.eq.s32.totalorder %s32, 0
      %p403 = por %p401, %p402
      %p404 = scmp.ne.s32.totalorder %s390, %s391
      %p405 = scmp.eq.s32.totalorder %s33, 1
      %p406 = por %p404, %p405
      %p408 = scmp.ne.s32.totalorder %s391, %s407
      %p409 = scmp.eq.s32.totalorder %s33, 0
      %p410 = por %p408, %p409
      %p411 = scmp.le.s32.totalorder 1, %s27
      %p412 = scmp.lt.s32.totalorder %s27, 3
      %p413 = pnand %p411, %p412
      %p414 = pneg %p413
      // Predicated region
      $region9: #{tpu_custom_call.1} parent=5 // pred_check
        _
      $region10: #{tpu_custom_call.1} parent=5 // pred_check_branch
        %416 = sbr.rel (%p413) target = $region12
      $region11: #{tpu_custom_call.1} parent=5 // pred_region
        %s417 = ssub.s32 %s27, 1
        // Predicated region
        $region13: #{tpu_custom_call.1} parent=11 // pred_check
          %p418 = pneg %p65
        $region14: #{tpu_custom_call.1} parent=11 // pred_check_branch
          %420 = sbr.rel (%p418) target = $region16
        $region15: #{tpu_custom_call.1} parent=11 // pred_region
          %s421 = smul.u32 2, %s36
          %s423 = ssub.s32 256, 256
          %424 = vsyncadd [#allocation3], %s423
          %s425 = smul.addr %s421, 128
          %s426 = scalar_lea.hbm %s0, %s425
          %s427 = sshll.u32 [#allocation2], 4
          %s428 = int_to_ptr.vmem [resolvable:$true] %s427
          %433 = dma.hbm_to_vmem [thread:$0]  %s426, 256, %s428, [#allocation3], 128, 128, 8
        $region16: #{tpu_custom_call.1} parent=11 // pred_fallthru
          _
      $region12: #{tpu_custom_call.1} parent=5 // pred_fallthru
        _
      %p434 = scmp.lt.s32.totalorder %s27, 2
      // Predicated region
      $region17: #{tpu_custom_call.1} parent=5 // pred_check
        %p435 = pneg %p434
      $region18: #{tpu_custom_call.1} parent=5 // pred_check_branch
        %437 = sbr.rel (%p435) target = $region20
      $region19: #{tpu_custom_call.1} parent=5 // pred_region
        // Predicated region
        $region21: #{tpu_custom_call.1} parent=19 // pred_check
          %p438 = pneg %p85
        $region22: #{tpu_custom_call.1} parent=19 // pred_check_branch
          %440 = sbr.rel (%p438) target = $region24
        $region23: #{tpu_custom_call.1} parent=19 // pred_region
          %s441 = sand.u32 %s27, 1
          %s442 = scalar_lea.sflag [#allocation6], %s441
          %s443 = sand.u32 %s75, 1
          %s444 = smul.addr %s443, 192
          %s445 = scalar_lea.vmem [#allocation5], %s444
          %s447 = ssub.s32 3072, 3072
          %448 = vsyncadd %s442, %s447
          %s449 = smul.addr %s35, 48
          %s450 = smul.addr %s449, 64
          %s451 = scalar_lea.hbm %s1, %s450
          %s452 = sshll.u32 %s445, 4
          %s453 = int_to_ptr.vmem [resolvable:$true] %s452
          %458 = dma.hbm_to_vmem [thread:$0]  %s451, 3072, %s453, %s442, 192, 192, 12
        $region24: #{tpu_custom_call.1} parent=19 // pred_fallthru
          _
        // Predicated region
        $region25: #{tpu_custom_call.1} parent=19 // pred_check
          %p459 = pneg %p111
        $region26: #{tpu_custom_call.1} parent=19 // pred_check_branch
          %461 = sbr.rel (%p459) target = $region28
        $region27: #{tpu_custom_call.1} parent=19 // pred_region
          %p462 = scmp.lt.s32.totalorder %s35, 1
          %s463 = scalar_select %p462, %s35, 1
          %s464 = smul.addr %s463, 3
          %s465 = scalar_lea.vmem %s2, %s464
        $region28: #{tpu_custom_call.1} parent=19 // pred_fallthru
          _
        // Predicated region
        $region29: #{tpu_custom_call.1} parent=19 // pred_check
          %p466 = pneg %p137
        $region30: #{tpu_custom_call.1} parent=19 // pred_check_branch
          %468 = sbr.rel (%p466) target = $region32
        $region31: #{tpu_custom_call.1} parent=19 // pred_region
          %s469 = sand.u32 %s27, 1
          %s470 = scalar_lea.sflag [#allocation6], %s469
          %s471 = sand.u32 %s127, 1
          %s472 = smul.addr %s471, 64
          %s473 = scalar_lea.vmem [#allocation7], %s472
          %s475 = ssub.s32 1024, 1024
          %476 = vsyncadd %s470, %s475
          %s477 = smul.addr %s35, 16
          %s478 = smul.addr %s477, 64
          %s479 = scalar_lea.hbm %s3, %s478
          %s480 = sshll.u32 %s473, 4
          %s481 = int_to_ptr.vmem [resolvable:$true] %s480
          %486 = dma.hbm_to_vmem [thread:$0]  %s479, 1024, %s481, %s470, 64, 64, 4
        $region32: #{tpu_custom_call.1} parent=19 // pred_fallthru
          _
        // Predicated region
        $region33: #{tpu_custom_call.1} parent=19 // pred_check
          %p487 = pneg %p163
        $region34: #{tpu_custom_call.1} parent=19 // pred_check_branch
          %489 = sbr.rel (%p487) target = $region36
        $region35: #{tpu_custom_call.1} parent=19 // pred_region
          %p490 = scmp.lt.s32.totalorder %s35, 1
          %s491 = scalar_select %p490, %s35, 1
          %s492 = scalar_lea.vmem %s4, %s491
        $region36: #{tpu_custom_call.1} parent=19 // pred_fallthru
          _
        // Predicated region
        $region37: #{tpu_custom_call.1} parent=19 // pred_check
          %p493 = pneg %p189
        $region38: #{tpu_custom_call.1} parent=19 // pred_check_branch
          %495 = sbr.rel (%p493) target = $region40
        $region39: #{tpu_custom_call.1} parent=19 // pred_region
          %p496 = scmp.lt.s32.totalorder %s35, 1
          %s497 = scalar_select %p496, %s35, 1
          %s498 = scalar_lea.vmem %s5, %s497
        $region40: #{tpu_custom_call.1} parent=19 // pred_fallthru
          _
        // Predicated region
        $region41: #{tpu_custom_call.1} parent=19 // pred_check
          %p499 = pneg %p215
        $region42: #{tpu_custom_call.1} parent=19 // pred_check_branch
          %501 = sbr.rel (%p499) target = $region44
        $region43: #{tpu_custom_call.1} parent=19 // pred_region
          %p502 = scmp.lt.s32.totalorder %s35, 1
          %s503 = scalar_select %p502, %s35, 1
          %s504 = scalar_lea.vmem %s6, %s503
        $region44: #{tpu_custom_call.1} parent=19 // pred_fallthru
          _
        // Predicated region
        $region45: #{tpu_custom_call.1} parent=19 // pred_check
          %p505 = pneg %p241
        $region46: #{tpu_custom_call.1} parent=19 // pred_check_branch
          %507 = sbr.rel (%p505) target = $region48
        $region47: #{tpu_custom_call.1} parent=19 // pred_region
          %s508 = sand.u32 %s27, 1
          %s509 = scalar_lea.sflag [#allocation9], %s508
          %s510 = sand.u32 %s231, 1
          %s511 = smul.addr %s510, 256
          %s512 = scalar_lea.vmem [#allocation8], %s511
          %s514 = ssub.s32 4096, 4096
          %515 = vsyncadd %s509, %s514
          %s516 = smul.addr %s35, 64
          %s517 = smul.addr %s516, 64
          %s518 = scalar_lea.hbm %s7, %s517
          %s519 = sshll.u32 %s512, 4
          %s520 = int_to_ptr.vmem [resolvable:$true] %s519
          %525 = dma.hbm_to_vmem [thread:$0]  %s518, 4096, %s520, %s509, 256, 256, 16
        $region48: #{tpu_custom_call.1} parent=19 // pred_fallthru
          _
        // Predicated region
        $region49: #{tpu_custom_call.1} parent=19 // pred_check
          %p526 = pneg %p267
        $region50: #{tpu_custom_call.1} parent=19 // pred_check_branch
          %528 = sbr.rel (%p526) target = $region52
        $region51: #{tpu_custom_call.1} parent=19 // pred_region
          %p529 = scmp.lt.s32.totalorder %s35, 1
          %s530 = scalar_select %p529, %s35, 1
          %s531 = smul.addr %s530, 4
          %s532 = scalar_lea.vmem %s8, %s531
        $region52: #{tpu_custom_call.1} parent=19 // pred_fallthru
          _
        // Predicated region
        $region53: #{tpu_custom_call.1} parent=19 // pred_check
          %p533 = pneg %p293
        $region54: #{tpu_custom_call.1} parent=19 // pred_check_branch
          %535 = sbr.rel (%p533) target = $region56
        $region55: #{tpu_custom_call.1} parent=19 // pred_region
          %s536 = sand.u32 %s27, 1
          %s537 = scalar_lea.sflag [#allocation9], %s536
          %s538 = sand.u32 %s283, 1
          %s539 = smul.addr %s538, 256
          %s540 = scalar_lea.vmem [#allocation10], %s539
          %s542 = ssub.s32 4096, 4096
          %543 = vsyncadd %s537, %s542
          %s544 = smul.addr %s35, 64
          %s545 = smul.addr %s544, 64
          %s546 = scalar_lea.hbm %s9, %s545
          %s547 = sshll.u32 %s540, 4
          %s548 = int_to_ptr.vmem [resolvable:$true] %s547
          %553 = dma.hbm_to_vmem [thread:$0]  %s546, 4096, %s548, %s537, 64, 64, 4
        $region56: #{tpu_custom_call.1} parent=19 // pred_fallthru
          _
        // Predicated region
        $region57: #{tpu_custom_call.1} parent=19 // pred_check
          %p554 = pneg %p319
        $region58: #{tpu_custom_call.1} parent=19 // pred_check_branch
          %556 = sbr.rel (%p554) target = $region60
        $region59: #{tpu_custom_call.1} parent=19 // pred_region
          %p557 = scmp.lt.s32.totalorder %s35, 1
          %s558 = scalar_select %p557, %s35, 1
          %s559 = scalar_lea.vmem %s10, %s558
        $region60: #{tpu_custom_call.1} parent=19 // pred_fallthru
          _
        // Predicated region
        $region61: #{tpu_custom_call.1} parent=19 // pred_check
          %p560 = pneg %p345
        $region62: #{tpu_custom_call.1} parent=19 // pred_check_branch
          %562 = sbr.rel (%p560) target = $region64
        $region63: #{tpu_custom_call.1} parent=19 // pred_region
          %p563 = scmp.lt.s32.totalorder %s35, 1
          %s564 = scalar_select %p563, %s35, 1
          %s565 = scalar_lea.vmem %s11, %s564
        $region64: #{tpu_custom_call.1} parent=19 // pred_fallthru
          _
        // Predicated region
        $region65: #{tpu_custom_call.1} parent=19 // pred_check
          %p566 = pneg %p371
        $region66: #{tpu_custom_call.1} parent=19 // pred_check_branch
          %568 = sbr.rel (%p566) target = $region68
        $region67: #{tpu_custom_call.1} parent=19 // pred_region
          %p569 = scmp.lt.s32.totalorder %s35, 1
          %s570 = scalar_select %p569, %s35, 1
          %s571 = scalar_lea.vmem %s12, %s570
        $region68: #{tpu_custom_call.1} parent=19 // pred_fallthru
          _
      $region20: #{tpu_custom_call.1} parent=5 // pred_fallthru
        _
      %p572 = scmp.le.s32.totalorder 1, %s27
      %p573 = scmp.lt.s32.totalorder %s27, 3
      %p574 = pnand %p572, %p573
      %p575 = pneg %p574
      // Predicated region
      $region69: #{tpu_custom_call.1} parent=5 // pred_check
        _
      $region70: #{tpu_custom_call.1} parent=5 // pred_check_branch
        %577 = sbr.rel (%p574) target = $region72
      $region71: #{tpu_custom_call.1} parent=5 // pred_region
        %s578 = ssub.s32 %s27, 1
        // Predicated region
        $region73: #{tpu_custom_call.1} parent=71 // pred_check
          %p579 = pneg %p65
        $region74: #{tpu_custom_call.1} parent=71 // pred_check_branch
          %581 = sbr.rel (%p579) target = $region76
        $region75: #{tpu_custom_call.1} parent=71 // pred_region
          %582 = dma.done [#allocation3], 256
        $region76: #{tpu_custom_call.1} parent=71 // pred_fallthru
          _
        %s583 = sand.u32 %s32, 1
        %s584 = scalar_lea.sflag [#allocation6], %s583
        %s585 = sand.u32 %s78, 1
        %s586 = smul.addr %s585, 192
        %s587 = scalar_lea.vmem [#allocation5], %s586
        // Predicated region
        $region77: #{tpu_custom_call.1} parent=71 // pred_check
          %p588 = pneg %p91
        $region78: #{tpu_custom_call.1} parent=71 // pred_check_branch
          %590 = sbr.rel (%p588) target = $region80
        $region79: #{tpu_custom_call.1} parent=71 // pred_region
          %591 = dma.done %s584, 3072
        $region80: #{tpu_custom_call.1} parent=71 // pred_fallthru
          _
        %s592 = sand.u32 %s32, 1
        %s593 = scalar_lea.sflag [#allocation6], %s592
        %s594 = sand.u32 %s130, 1
        %s595 = smul.addr %s594, 64
        %s596 = scalar_lea.vmem [#allocation7], %s595
        // Predicated region
        $region81: #{tpu_custom_call.1} parent=71 // pred_check
          %p597 = pneg %p143
        $region82: #{tpu_custom_call.1} parent=71 // pred_check_branch
          %599 = sbr.rel (%p597) target = $region84
        $region83: #{tpu_custom_call.1} parent=71 // pred_region
          %600 = dma.done %s593, 1024
        $region84: #{tpu_custom_call.1} parent=71 // pred_fallthru
          _
        %s601 = sand.u32 %s32, 1
        %s602 = scalar_lea.sflag [#allocation9], %s601
        %s603 = sand.u32 %s234, 1
        %s604 = smul.addr %s603, 256
        %s605 = scalar_lea.vmem [#allocation8], %s604
        // Predicated region
        $region85: #{tpu_custom_call.1} parent=71 // pred_check
          %p606 = pneg %p247
        $region86: #{tpu_custom_call.1} parent=71 // pred_check_branch
          %608 = sbr.rel (%p606) target = $region88
        $region87: #{tpu_custom_call.1} parent=71 // pred_region
          %609 = dma.done %s602, 4096
        $region88: #{tpu_custom_call.1} parent=71 // pred_fallthru
          _
        %s610 = sand.u32 %s32, 1
        %s611 = scalar_lea.sflag [#allocation9], %s610
        %s612 = sand.u32 %s286, 1
        %s613 = smul.addr %s612, 256
        %s614 = scalar_lea.vmem [#allocation10], %s613
        // Predicated region
        $region89: #{tpu_custom_call.1} parent=71 // pred_check
          %p615 = pneg %p299
        $region90: #{tpu_custom_call.1} parent=71 // pred_check_branch
          %617 = sbr.rel (%p615) target = $region92
        $region91: #{tpu_custom_call.1} parent=71 // pred_region
          %618 = dma.done %s611, 4096
        $region92: #{tpu_custom_call.1} parent=71 // pred_fallthru
          _
        %p619 = pneg %p65
        %p620 = pneg %p62
        %s621 = sand.u32 %s32, 1
        %s622 = scalar_lea.sflag [#allocation6], %s621
        %s623 = sand.u32 %s78, 1
        %s624 = smul.addr %s623, 192
        %s625 = scalar_lea.vmem [#allocation5], %s624
        %p626 = pneg %p91
        %p627 = pneg %p88
        %p628 = scmp.lt.s32.totalorder %s37, 1
        %s629 = scalar_select %p628, %s37, 1
        %s630 = smul.addr %s629, 3
        %s631 = scalar_lea.vmem %s2, %s630
        %p632 = pneg %p117
        %p633 = pneg %p114
        %s634 = sand.u32 %s32, 1
        %s635 = scalar_lea.sflag [#allocation6], %s634
        %s636 = sand.u32 %s130, 1
        %s637 = smul.addr %s636, 64
        %s638 = scalar_lea.vmem [#allocation7], %s637
        %p639 = pneg %p143
        %p640 = pneg %p140
        %p641 = scmp.lt.s32.totalorder %s37, 1
        %s642 = scalar_select %p641, %s37, 1
        %s643 = scalar_lea.vmem %s4, %s642
        %p644 = pneg %p169
        %p645 = pneg %p166
        %p646 = scmp.lt.s32.totalorder %s37, 1
        %s647 = scalar_select %p646, %s37, 1
        %s648 = scalar_lea.vmem %s5, %s647
        %p649 = pneg %p195
        %p650 = pneg %p192
        %p651 = scmp.lt.s32.totalorder %s37, 1
        %s652 = scalar_select %p651, %s37, 1
        %s653 = scalar_lea.vmem %s6, %s652
        %p654 = pneg %p221
        %p655 = pneg %p218
        %s656 = sand.u32 %s32, 1
        %s657 = scalar_lea.sflag [#allocation9], %s656
        %s658 = sand.u32 %s234, 1
        %s659 = smul.addr %s658, 256
        %s660 = scalar_lea.vmem [#allocation8], %s659
        %p661 = pneg %p247
        %p662 = pneg %p244
        %p663 = scmp.lt.s32.totalorder %s37, 1
        %s664 = scalar_select %p663, %s37, 1
        %s665 = smul.addr %s664, 4
        %s666 = scalar_lea.vmem %s8, %s665
        %p667 = pneg %p273
        %p668 = pneg %p270
        %s669 = sand.u32 %s32, 1
        %s670 = scalar_lea.sflag [#allocation9], %s669
        %s671 = sand.u32 %s286, 1
        %s672 = smul.addr %s671, 256
        %s673 = scalar_lea.vmem [#allocation10], %s672
        %p674 = pneg %p299
        %p675 = pneg %p296
        %p676 = scmp.lt.s32.totalorder %s37, 1
        %s677 = scalar_select %p676, %s37, 1
        %s678 = scalar_lea.vmem %s10, %s677
        %p679 = pneg %p325
        %p680 = pneg %p322
        %p681 = scmp.lt.s32.totalorder %s37, 1
        %s682 = scalar_select %p681, %s37, 1
        %s683 = scalar_lea.vmem %s11, %s682
        %p684 = pneg %p351
        %p685 = pneg %p348
        %p686 = scmp.lt.s32.totalorder %s37, 1
        %s687 = scalar_select %p686, %s37, 1
        %s688 = scalar_lea.vmem %s12, %s687
        %p689 = pneg %p377
        %p690 = pneg %p374
        %p691 = pneg %p403
        %p692 = pneg %p400
        %s693 = smul.u32 2, %s36
        %p694 = scmp.lt.s32.totalorder %s37, 1
        %s695 = scalar_select %p694, %s37, 1
        %s696 = smul.addr %s695, 3
        %s697 = scalar_lea.vmem %s2, %s696
        %p698 = scmp.lt.s32.totalorder %s37, 1
        %s699 = scalar_select %p698, %s37, 1
        %s700 = scalar_lea.vmem %s4, %s699
        %p701 = scmp.lt.s32.totalorder %s37, 1
        %s702 = scalar_select %p701, %s37, 1
        %s703 = scalar_lea.vmem %s5, %s702
        %p704 = scmp.lt.s32.totalorder %s37, 1
        %s705 = scalar_select %p704, %s37, 1
        %s706 = scalar_lea.vmem %s6, %s705
        %p707 = scmp.lt.s32.totalorder %s37, 1
        %s708 = scalar_select %p707, %s37, 1
        %s709 = smul.addr %s708, 4
        %s710 = scalar_lea.vmem %s8, %s709
        %p711 = scmp.lt.s32.totalorder %s37, 1
        %s712 = scalar_select %p711, %s37, 1
        %s713 = scalar_lea.vmem %s10, %s712
        %p714 = scmp.lt.s32.totalorder %s37, 1
        %s715 = scalar_select %p714, %s37, 1
        %s716 = scalar_lea.vmem %s11, %s715
        %p717 = scmp.lt.s32.totalorder %s37, 1
        %s718 = scalar_select %p717, %s37, 1
        %s719 = scalar_lea.vmem %s12, %s718
        %s720 = smul.u32 2, %s36
        %p722 = scmp.eq.s32.totalorder %s37, 0
        // Predicated region
        $region93: #{tpu_custom_call.1} parent=71 // pred_check
          %p723 = pneg %p722
        $region94: #{tpu_custom_call.1} parent=71 // pred_check_branch
          %725 = sbr.rel (%p723) target = $region96
        $region95: #{tpu_custom_call.1} parent=71 // pred_region
          %v726 = vld [vmem:[#allocation2] sm:$0xff]
          %v727 = vld [vmem:[#allocation2 + $0x8] sm:$0xff]
          %728 = vst [vmem:[#allocation11] sm:$0xff] %v726
          %729 = vst [vmem:[#allocation11 + $0x8] sm:$0xff] %v727
        $region96: #{tpu_custom_call.1} parent=71 // pred_fallthru
          _
        %v730 = vld [vmem:[#allocation11] sm:$0xff]
        %v731 = vld [vmem:[#allocation11 + $0x8] sm:$0xff]
        %v732 = vld [vmem:[%s587] sm:$0xff]
        %v733 = vld [vmem:[%s587 + $0x8] sm:$0xf]
        %v734 = vld [vmem:[%s587 + $0xc] sm:$0xff]
        %v735 = vld [vmem:[%s587 + $0x14] sm:$0xf]
        %v736 = vld [vmem:[%s587 + $0x18] sm:$0xff]
        %v737 = vld [vmem:[%s587 + $0x20] sm:$0xf]
        %v738 = vld [vmem:[%s587 + $0x24] sm:$0xff]
        %v739 = vld [vmem:[%s587 + $0x2c] sm:$0xf]
        %v740 = vld [vmem:[%s587 + $0x30] sm:$0xff]
        %v741 = vld [vmem:[%s587 + $0x38] sm:$0xf]
        %v742 = vld [vmem:[%s587 + $0x3c] sm:$0xff]
        %v743 = vld [vmem:[%s587 + $0x44] sm:$0xf]
        %v744 = vld [vmem:[%s587 + $0x48] sm:$0xff]
        %v745 = vld [vmem:[%s587 + $0x50] sm:$0xf]
        %v746 = vld [vmem:[%s587 + $0x54] sm:$0xff]
        %v747 = vld [vmem:[%s587 + $0x5c] sm:$0xf]
        %v748 = vld [vmem:[%s587 + $0x60] sm:$0xff]
        %v749 = vld [vmem:[%s587 + $0x68] sm:$0xf]
        %v750 = vld [vmem:[%s587 + $0x6c] sm:$0xff]
        %v751 = vld [vmem:[%s587 + $0x74] sm:$0xf]
        %v752 = vld [vmem:[%s587 + $0x78] sm:$0xff]
        %v753 = vld [vmem:[%s587 + $0x80] sm:$0xf]
        %v754 = vld [vmem:[%s587 + $0x84] sm:$0xff]
        %v755 = vld [vmem:[%s587 + $0x8c] sm:$0xf]
        %v756 = vld [vmem:[%s587 + $0x90] sm:$0xff]
        %v757 = vld [vmem:[%s587 + $0x98] sm:$0xf]
        %v758 = vld [vmem:[%s587 + $0x9c] sm:$0xff]
        %v759 = vld [vmem:[%s587 + $0xa4] sm:$0xf]
        %v760 = vld [vmem:[%s587 + $0xa8] sm:$0xff]
        %v761 = vld [vmem:[%s587 + $0xb0] sm:$0xf]
        %v762 = vld [vmem:[%s587 + $0xb4] sm:$0xff]
        %v763 = vld [vmem:[%s587 + $0xbc] sm:$0xf]
        %v764 = vpack.c.bf16 %v731, %v730
        %v765 = vld [vmem:[%s697] sm:$0x7]
        %v767 = vlaneseq
        %v768 = vshrl.u32 %v767, 7
        %v769 = vsub.s32 0, %v768
        %v770 = vrot.slane %v765, %v769
        %v771 = vlaneseq
        %v772 = vshrl.u32 %v771, 7
        %v773 = vsub.s32 1, %v772
        %v774 = vrot.slane %v765, %v773
        %v775 = vlaneseq
        %v776 = vshrl.u32 %v775, 7
        %v777 = vsub.s32 2, %v776
        %v778 = vrot.slane %v765, %v777
        %v814 = vunpack.c.l.b16 %v732
        %v815 = vunpack.c.h.b16 %v732
        %v816 = vunpack.c.l.b16 %v733
        %v817 = vunpack.c.l.b16 %v734
        %v818 = vunpack.c.h.b16 %v734
        %v819 = vunpack.c.l.b16 %v735
        %v820 = vunpack.c.l.b16 %v736
        %v821 = vunpack.c.h.b16 %v736
        %v822 = vunpack.c.l.b16 %v737
        %v823 = vunpack.c.l.b16 %v738
        %v824 = vunpack.c.h.b16 %v738
        %v825 = vunpack.c.l.b16 %v739
        %v826 = vunpack.c.l.b16 %v740
        %v827 = vunpack.c.h.b16 %v740
        %v828 = vunpack.c.l.b16 %v741
        %v829 = vunpack.c.l.b16 %v742
        %v830 = vunpack.c.h.b16 %v742
        %v831 = vunpack.c.l.b16 %v743
        %v832 = vunpack.c.l.b16 %v744
        %v833 = vunpack.c.h.b16 %v744
        %v834 = vunpack.c.l.b16 %v745
        %v835 = vunpack.c.l.b16 %v746
        %v836 = vunpack.c.h.b16 %v746
        %v837 = vunpack.c.l.b16 %v747
        %v838 = vunpack.c.l.b16 %v748
        %v839 = vunpack.c.h.b16 %v748
        %v840 = vunpack.c.l.b16 %v749
        %v841 = vunpack.c.l.b16 %v750
        %v842 = vunpack.c.h.b16 %v750
        %v843 = vunpack.c.l.b16 %v751
        %v844 = vunpack.c.l.b16 %v752
        %v845 = vunpack.c.h.b16 %v752
        %v846 = vunpack.c.l.b16 %v753
        %v847 = vunpack.c.l.b16 %v754
        %v848 = vunpack.c.h.b16 %v754
        %v849 = vunpack.c.l.b16 %v755
        %v850 = vunpack.c.l.b16 %v756
        %v851 = vunpack.c.h.b16 %v756
        %v852 = vunpack.c.l.b16 %v757
        %v853 = vunpack.c.l.b16 %v758
        %v854 = vunpack.c.h.b16 %v758
        %v855 = vunpack.c.l.b16 %v759
        %v856 = vunpack.c.l.b16 %v760
        %v857 = vunpack.c.h.b16 %v760
        %v858 = vunpack.c.l.b16 %v761
        %v859 = vunpack.c.l.b16 %v762
        %v860 = vunpack.c.h.b16 %v762
        %v861 = vunpack.c.l.b16 %v763
        %v862 = vpack.c.b16 %v817, %v814
        %v863 = vpack.c.b16 %v818, %v815
        %v864 = vpack.c.b16 %v819, %v816
        %v865 = vpack.c.b16 %v823, %v820
        %v866 = vpack.c.b16 %v824, %v821
        %v867 = vpack.c.b16 %v825, %v822
        %v868 = vpack.c.b16 %v829, %v826
        %v869 = vpack.c.b16 %v830, %v827
        %v870 = vpack.c.b16 %v831, %v828
        %v871 = vpack.c.b16 %v835, %v832
        %v872 = vpack.c.b16 %v836, %v833
        %v873 = vpack.c.b16 %v837, %v834
        %v874 = vpack.c.b16 %v841, %v838
        %v875 = vpack.c.b16 %v842, %v839
        %v876 = vpack.c.b16 %v843, %v840
        %v877 = vpack.c.b16 %v847, %v844
        %v878 = vpack.c.b16 %v848, %v845
        %v879 = vpack.c.b16 %v849, %v846
        %v880 = vpack.c.b16 %v853, %v850
        %v881 = vpack.c.b16 %v854, %v851
        %v882 = vpack.c.b16 %v855, %v852
        %v883 = vpack.c.b16 %v859, %v856
        %v884 = vpack.c.b16 %v860, %v857
        %v885 = vpack.c.b16 %v861, %v858
        %910 = vmatprep.subr.bf16.mxu0 %v884
        %911 = vmatpush1.bf16.msra.mxu0 %v883
        %912 = vmatprep.subr.bf16.mxu0 %v881
        %913 = vmatpush1.bf16.msra.mxu0 %v880
        %914 = vmatprep.subr.bf16.mxu0 %v878
        %915 = vmatpush1.bf16.msra.mxu0 %v877
        %916 = vmatprep.subr.bf16.mxu0 %v875
        %917 = vmatpush1.bf16.msra.mxu0 %v874
        %918 = vmatprep.subr.bf16.mxu0 %v872
        %919 = vmatpush1.bf16.msra.mxu0 %v871
        %920 = vmatprep.subr.bf16.mxu0 %v869
        %921 = vmatpush1.bf16.msra.mxu0 %v868
        %922 = vmatprep.subr.bf16.mxu0 %v866
        %923 = vmatpush1.bf16.msra.mxu0 %v865
        %924 = vmatprep.subr.bf16.mxu0 %v863
        %925 = vmatpush1.bf16.msra.mxu0 %v862
        %926 = vmatprep.subr.bf16.mxu0 0
        %927 = vmatpush2.bf16.msra.mxu0 0
        %928 = vmatprep.subr.bf16.mxu0 0
        %929 = vmatpush2.bf16.msra.mxu0 0
        %930 = vmatprep.subr.bf16.mxu0 0
        %931 = vmatpush2.bf16.msra.mxu0 0
        %932 = vmatprep.subr.bf16.mxu0 0
        %933 = vmatpush2.bf16.msra.mxu0 0
        %934 = vmatprep.subr.bf16.mxu0 0
        %935 = vmatpush2.bf16.msra.mxu0 0
        %936 = vmatprep.subr.bf16.mxu0 0
        %937 = vmatpush2.bf16.msra.mxu0 0
        %938 = vmatprep.subr.bf16.mxu0 0
        %939 = vmatpush2.bf16.msra.mxu0 0
        %940 = vmatprep.subr.bf16.mxu0 0
        %941 = vmatpush2.bf16.msra.mxu0 0
        %942 = vmatprep.mubr.bf16.mxu0 0
        %943 = vmatmul.mubr.bf16.gmra.mxu0 %v764
        %v944 = vpop.f32.mrf.mxu0
        %v945 = vadd.f32 %v770, %v944
        %v946 = vpop.f32.mrf.mxu0
        %v947 = vadd.f32 %v774, %v946
        %v948 = vpop.f32.mrf.mxu0
        %v949 = vadd.f32 %v770, %v948
        %v950 = vpop.f32.mrf.mxu0
        %v951 = vadd.f32 %v774, %v950
        %952 = vdwg.mxu0
        %953 = vmatprep.subr.bf16.mxu0 0
        %954 = vmatpush1.bf16.msra.mxu0 %v885
        %955 = vmatprep.subr.bf16.mxu0 0
        %956 = vmatpush1.bf16.msra.mxu0 %v882
        %957 = vmatprep.subr.bf16.mxu0 0
        %958 = vmatpush1.bf16.msra.mxu0 %v879
        %959 = vmatprep.subr.bf16.mxu0 0
        %960 = vmatpush1.bf16.msra.mxu0 %v876
        %961 = vmatprep.subr.bf16.mxu0 0
        %962 = vmatpush1.bf16.msra.mxu0 %v873
        %963 = vmatprep.subr.bf16.mxu0 0
        %964 = vmatpush1.bf16.msra.mxu0 %v870
        %965 = vmatprep.subr.bf16.mxu0 0
        %966 = vmatpush1.bf16.msra.mxu0 %v867
        %967 = vmatprep.subr.bf16.mxu0 0
        %968 = vmatpush1.bf16.msra.mxu0 %v864
        %969 = vmatprep.subr.bf16.mxu0 0
        %970 = vmatpush2.bf16.msra.mxu0 0
        %971 = vmatprep.subr.bf16.mxu0 0
        %972 = vmatpush2.bf16.msra.mxu0 0
        %973 = vmatprep.subr.bf16.mxu0 0
        %974 = vmatpush2.bf16.msra.mxu0 0
        %975 = vmatprep.subr.bf16.mxu0 0
        %976 = vmatpush2.bf16.msra.mxu0 0
        %977 = vmatprep.subr.bf16.mxu0 0
        %978 = vmatpush2.bf16.msra.mxu0 0
        %979 = vmatprep.subr.bf16.mxu0 0
        %980 = vmatpush2.bf16.msra.mxu0 0
        %981 = vmatprep.subr.bf16.mxu0 0
        %982 = vmatpush2.bf16.msra.mxu0 0
        %983 = vmatprep.subr.bf16.mxu0 0
        %984 = vmatpush2.bf16.msra.mxu0 0
        %985 = vmatprep.mubr.bf16.mxu0 0
        %986 = vmatmul.mubr.bf16.gmra.mxu0 %v764
        %v987 = vpop.f32.mrf.mxu0
        %v988 = vadd.f32 %v778, %v987
        %v989 = vpop.f32.mrf.mxu0
        %v990 = vpop.f32.mrf.mxu0
        %v991 = vadd.f32 %v778, %v990
        %v992 = vpop.f32.mrf.mxu0
        %993 = vdwg.mxu0
        %v994 = vpack.c.bf16 %v949, %v945
        %996 = vrot.lane.b32.xlu0 %v994, 112
        %v997 = vpop.permute.xlu0 %996
        %998 = vrot.lane.b32.xlu0 %v994, 96
        %v999 = vpop.permute.xlu0 %998
        %1000 = vrot.lane.b32.xlu0 %v994, 80
        %v1001 = vpop.permute.xlu0 %1000
        %1002 = vrot.lane.b32.xlu0 %v994, 64
        %v1003 = vpop.permute.xlu0 %1002
        %1004 = vrot.lane.b32.xlu0 %v994, 48
        %v1005 = vpop.permute.xlu0 %1004
        %1006 = vrot.lane.b32.xlu0 %v994, 32
        %v1007 = vpop.permute.xlu0 %1006
        %1008 = vrot.lane.b32.xlu0 %v994, 16
        %v1009 = vpop.permute.xlu0 %1008
        %v1012 = vpack.i.b16 %v997, %v994
        %v1014 = vshrl.u32 %v994, 16
        %v1015 = vshrl.u32 %v997, 16
        %v1016 = vpack.i.b16 %v1015, %v1014
        %v1020 = vpack.i.b16 %v1001, %v999
        %v1022 = vshrl.u32 %v999, 16
        %v1023 = vshrl.u32 %v1001, 16
        %v1024 = vpack.i.b16 %v1023, %v1022
        %v1028 = vpack.i.b16 %v1005, %v1003
        %v1030 = vshrl.u32 %v1003, 16
        %v1031 = vshrl.u32 %v1005, 16
        %v1032 = vpack.i.b16 %v1031, %v1030
        %v1036 = vpack.i.b16 %v1009, %v1007
        %v1038 = vshrl.u32 %v1007, 16
        %v1039 = vshrl.u32 %v1009, 16
        %v1040 = vpack.i.b16 %v1039, %v1038
        %v1042 = vcombine.low %v1012, %v1028
        %v1043 = vcombine.high %v1012, %v1028
        %v1045 = vunpack.c.l.s4 1983009808
        %v1046 = vunpack.c.0.s8 %v1045
        %v1047 = vlaneseq
        %v1048 = vshrl.u32 %v1047, 7
        %v1049 = vsub.s32 %v1046, %v1048
        %v1050 = vrot.slane %v1042, %v1049
        %v1052 = vunpack.c.l.s4 1983009808
        %v1053 = vunpack.c.0.s8 %v1052
        %v1054 = vlaneseq
        %v1055 = vshrl.u32 %v1054, 7
        %v1056 = vsub.s32 %v1053, %v1055
        %v1057 = vrot.slane %v1043, %v1056
        %v1058 = vcombine.low %v1020, %v1036
        %v1059 = vcombine.high %v1020, %v1036
        %v1061 = vunpack.c.l.s4 1983009808
        %v1062 = vunpack.c.0.s8 %v1061
        %v1063 = vlaneseq
        %v1064 = vshrl.u32 %v1063, 7
        %v1065 = vsub.s32 %v1062, %v1064
        %v1066 = vrot.slane %v1058, %v1065
        %v1068 = vunpack.c.l.s4 1983009808
        %v1069 = vunpack.c.0.s8 %v1068
        %v1070 = vlaneseq
        %v1071 = vshrl.u32 %v1070, 7
        %v1072 = vsub.s32 %v1069, %v1071
        %v1073 = vrot.slane %v1059, %v1072
        %v1074 = vcombine.low %v1050, %v1066
        %v1075 = vcombine.high %v1050, %v1066
        %v1077 = vunpack.c.l.s4 1934713408
        %v1078 = vunpack.c.0.s8 %v1077
        %v1079 = vlaneseq
        %v1080 = vshrl.u32 %v1079, 7
        %v1081 = vsub.s32 %v1078, %v1080
        %v1082 = vrot.slane %v1074, %v1081
        %v1084 = vunpack.c.l.s4 1934713408
        %v1085 = vunpack.c.0.s8 %v1084
        %v1086 = vlaneseq
        %v1087 = vshrl.u32 %v1086, 7
        %v1088 = vsub.s32 %v1085, %v1087
        %v1089 = vrot.slane %v1075, %v1088
        %v1090 = vcombine.low %v1057, %v1073
        %v1091 = vcombine.high %v1057, %v1073
        %v1093 = vunpack.c.l.s4 1934713408
        %v1094 = vunpack.c.0.s8 %v1093
        %v1095 = vlaneseq
        %v1096 = vshrl.u32 %v1095, 7
        %v1097 = vsub.s32 %v1094, %v1096
        %v1098 = vrot.slane %v1090, %v1097
        %v1100 = vunpack.c.l.s4 1934713408
        %v1101 = vunpack.c.0.s8 %v1100
        %v1102 = vlaneseq
        %v1103 = vshrl.u32 %v1102, 7
        %v1104 = vsub.s32 %v1101, %v1103
        %v1105 = vrot.slane %v1091, %v1104
        %v1106 = vcombine.high %v1082, 0
        %v1107 = vcombine.high %v1089, 0
        %v1108 = vcombine.high %v1098, 0
        %v1109 = vcombine.high %v1105, 0
        %v1110 = vcombine.low %v1016, %v1032
        %v1111 = vcombine.high %v1016, %v1032
        %v1113 = vunpack.c.l.s4 1983009808
        %v1114 = vunpack.c.0.s8 %v1113
        %v1115 = vlaneseq
        %v1116 = vshrl.u32 %v1115, 7
        %v1117 = vsub.s32 %v1114, %v1116
        %v1118 = vrot.slane %v1110, %v1117
        %v1120 = vunpack.c.l.s4 1983009808
        %v1121 = vunpack.c.0.s8 %v1120
        %v1122 = vlaneseq
        %v1123 = vshrl.u32 %v1122, 7
        %v1124 = vsub.s32 %v1121, %v1123
        %v1125 = vrot.slane %v1111, %v1124
        %v1126 = vcombine.low %v1024, %v1040
        %v1127 = vcombine.high %v1024, %v1040
        %v1129 = vunpack.c.l.s4 1983009808
        %v1130 = vunpack.c.0.s8 %v1129
        %v1131 = vlaneseq
        %v1132 = vshrl.u32 %v1131, 7
        %v1133 = vsub.s32 %v1130, %v1132
        %v1134 = vrot.slane %v1126, %v1133
        %v1136 = vunpack.c.l.s4 1983009808
        %v1137 = vunpack.c.0.s8 %v1136
        %v1138 = vlaneseq
        %v1139 = vshrl.u32 %v1138, 7
        %v1140 = vsub.s32 %v1137, %v1139
        %v1141 = vrot.slane %v1127, %v1140
        %v1142 = vcombine.low %v1118, %v1134
        %v1143 = vcombine.high %v1118, %v1134
        %v1145 = vunpack.c.l.s4 1934713408
        %v1146 = vunpack.c.0.s8 %v1145
        %v1147 = vlaneseq
        %v1148 = vshrl.u32 %v1147, 7
        %v1149 = vsub.s32 %v1146, %v1148
        %v1150 = vrot.slane %v1142, %v1149
        %v1152 = vunpack.c.l.s4 1934713408
        %v1153 = vunpack.c.0.s8 %v1152
        %v1154 = vlaneseq
        %v1155 = vshrl.u32 %v1154, 7
        %v1156 = vsub.s32 %v1153, %v1155
        %v1157 = vrot.slane %v1143, %v1156
        %v1158 = vcombine.low %v1125, %v1141
        %v1159 = vcombine.high %v1125, %v1141
        %v1161 = vunpack.c.l.s4 1934713408
        %v1162 = vunpack.c.0.s8 %v1161
        %v1163 = vlaneseq
        %v1164 = vshrl.u32 %v1163, 7
        %v1165 = vsub.s32 %v1162, %v1164
        %v1166 = vrot.slane %v1158, %v1165
        %v1168 = vunpack.c.l.s4 1934713408
        %v1169 = vunpack.c.0.s8 %v1168
        %v1170 = vlaneseq
        %v1171 = vshrl.u32 %v1170, 7
        %v1172 = vsub.s32 %v1169, %v1171
        %v1173 = vrot.slane %v1159, %v1172
        %v1174 = vcombine.high %v1150, 0
        %v1175 = vcombine.high %v1157, 0
        %v1176 = vcombine.high %v1166, 0
        %v1177 = vcombine.high %v1173, 0
        %v1178 = vcombine.low %v1082, %v1089
        %v1180 = vunpack.c.l.s4 1983009808
        %v1181 = vunpack.c.0.s8 %v1180
        %v1182 = vlaneseq
        %v1183 = vshrl.u32 %v1182, 7
        %v1184 = vsub.s32 %v1181, %v1183
        %v1185 = vrot.slane %v1178, %v1184
        %v1186 = vcombine.low %v1106, %v1107
        %v1188 = vunpack.c.l.s4 1983009808
        %v1189 = vunpack.c.0.s8 %v1188
        %v1190 = vlaneseq
        %v1191 = vshrl.u32 %v1190, 7
        %v1192 = vsub.s32 %v1189, %v1191
        %v1193 = vrot.slane %v1186, %v1192
        %v1194 = vcombine.low %v1185, %v1193
        %v1195 = vcombine.high %v1185, %v1193
        %v1197 = vunpack.c.l.s4 1934713408
        %v1198 = vunpack.c.0.s8 %v1197
        %v1199 = vlaneseq
        %v1200 = vshrl.u32 %v1199, 7
        %v1201 = vsub.s32 %v1198, %v1200
        %v1202 = vrot.slane %v1194, %v1201
        %v1204 = vunpack.c.l.s4 1934713408
        %v1205 = vunpack.c.0.s8 %v1204
        %v1206 = vlaneseq
        %v1207 = vshrl.u32 %v1206, 7
        %v1208 = vsub.s32 %v1205, %v1207
        %v1209 = vrot.slane %v1195, %v1208
        %v1210 = vcombine.high %v1202, 0
        %v1211 = vcombine.high %v1209, 0
        %v1212 = vcombine.low %v1150, %v1157
        %v1214 = vunpack.c.l.s4 1983009808
        %v1215 = vunpack.c.0.s8 %v1214
        %v1216 = vlaneseq
        %v1217 = vshrl.u32 %v1216, 7
        %v1218 = vsub.s32 %v1215, %v1217
        %v1219 = vrot.slane %v1212, %v1218
        %v1220 = vcombine.low %v1174, %v1175
        %v1222 = vunpack.c.l.s4 1983009808
        %v1223 = vunpack.c.0.s8 %v1222
        %v1224 = vlaneseq
        %v1225 = vshrl.u32 %v1224, 7
        %v1226 = vsub.s32 %v1223, %v1225
        %v1227 = vrot.slane %v1220, %v1226
        %v1228 = vcombine.low %v1219, %v1227
        %v1229 = vcombine.high %v1219, %v1227
        %v1231 = vunpack.c.l.s4 1934713408
        %v1232 = vunpack.c.0.s8 %v1231
        %v1233 = vlaneseq
        %v1234 = vshrl.u32 %v1233, 7
        %v1235 = vsub.s32 %v1232, %v1234
        %v1236 = vrot.slane %v1228, %v1235
        %v1238 = vunpack.c.l.s4 1934713408
        %v1239 = vunpack.c.0.s8 %v1238
        %v1240 = vlaneseq
        %v1241 = vshrl.u32 %v1240, 7
        %v1242 = vsub.s32 %v1239, %v1241
        %v1243 = vrot.slane %v1229, %v1242
        %v1244 = vcombine.high %v1236, 0
        %v1245 = vcombine.high %v1243, 0
        %v1246 = vcombine.low %v1098, %v1105
        %v1248 = vunpack.c.l.s4 1983009808
        %v1249 = vunpack.c.0.s8 %v1248
        %v1250 = vlaneseq
        %v1251 = vshrl.u32 %v1250, 7
        %v1252 = vsub.s32 %v1249, %v1251
        %v1253 = vrot.slane %v1246, %v1252
        %v1254 = vcombine.low %v1108, %v1109
        %v1256 = vunpack.c.l.s4 1983009808
        %v1257 = vunpack.c.0.s8 %v1256
        %v1258 = vlaneseq
        %v1259 = vshrl.u32 %v1258, 7
        %v1260 = vsub.s32 %v1257, %v1259
        %v1261 = vrot.slane %v1254, %v1260
        %v1262 = vcombine.low %v1253, %v1261
        %v1263 = vcombine.high %v1253, %v1261
        %v1265 = vunpack.c.l.s4 1934713408
        %v1266 = vunpack.c.0.s8 %v1265
        %v1267 = vlaneseq
        %v1268 = vshrl.u32 %v1267, 7
        %v1269 = vsub.s32 %v1266, %v1268
        %v1270 = vrot.slane %v1262, %v1269
        %v1272 = vunpack.c.l.s4 1934713408
        %v1273 = vunpack.c.0.s8 %v1272
        %v1274 = vlaneseq
        %v1275 = vshrl.u32 %v1274, 7
        %v1276 = vsub.s32 %v1273, %v1275
        %v1277 = vrot.slane %v1263, %v1276
        %v1278 = vcombine.high %v1270, 0
        %v1279 = vcombine.high %v1277, 0
        %v1280 = vcombine.low %v1166, %v1173
        %v1282 = vunpack.c.l.s4 1983009808
        %v1283 = vunpack.c.0.s8 %v1282
        %v1284 = vlaneseq
        %v1285 = vshrl.u32 %v1284, 7
        %v1286 = vsub.s32 %v1283, %v1285
        %v1287 = vrot.slane %v1280, %v1286
        %v1288 = vcombine.low %v1176, %v1177
        %v1290 = vunpack.c.l.s4 1983009808
        %v1291 = vunpack.c.0.s8 %v1290
        %v1292 = vlaneseq
        %v1293 = vshrl.u32 %v1292, 7
        %v1294 = vsub.s32 %v1291, %v1293
        %v1295 = vrot.slane %v1288, %v1294
        %v1296 = vcombine.low %v1287, %v1295
        %v1297 = vcombine.high %v1287, %v1295
        %v1299 = vunpack.c.l.s4 1934713408
        %v1300 = vunpack.c.0.s8 %v1299
        %v1301 = vlaneseq
        %v1302 = vshrl.u32 %v1301, 7
        %v1303 = vsub.s32 %v1300, %v1302
        %v1304 = vrot.slane %v1296, %v1303
        %v1306 = vunpack.c.l.s4 1934713408
        %v1307 = vunpack.c.0.s8 %v1306
        %v1308 = vlaneseq
        %v1309 = vshrl.u32 %v1308, 7
        %v1310 = vsub.s32 %v1307, %v1309
        %v1311 = vrot.slane %v1297, %v1310
        %v1312 = vcombine.high %v1304, 0
        %v1313 = vcombine.high %v1311, 0
        %v1316 = vpack.i.b16 %v1236, %v1202
        %v1317 = vshrl.u32 %v1202, 16
        %v1318 = vshrl.u32 %v1236, 16
        %v1319 = vpack.i.b16 %v1318, %v1317
        %v1322 = vpack.i.b16 %v1244, %v1210
        %v1323 = vshrl.u32 %v1210, 16
        %v1324 = vshrl.u32 %v1244, 16
        %v1325 = vpack.i.b16 %v1324, %v1323
        %v1328 = vpack.i.b16 %v1243, %v1209
        %v1329 = vshrl.u32 %v1209, 16
        %v1330 = vshrl.u32 %v1243, 16
        %v1331 = vpack.i.b16 %v1330, %v1329
        %v1334 = vpack.i.b16 %v1245, %v1211
        %v1335 = vshrl.u32 %v1211, 16
        %v1336 = vshrl.u32 %v1245, 16
        %v1337 = vpack.i.b16 %v1336, %v1335
        %v1340 = vpack.i.b16 %v1304, %v1270
        %v1341 = vshrl.u32 %v1270, 16
        %v1342 = vshrl.u32 %v1304, 16
        %v1343 = vpack.i.b16 %v1342, %v1341
        %v1346 = vpack.i.b16 %v1312, %v1278
        %v1347 = vshrl.u32 %v1278, 16
        %v1348 = vshrl.u32 %v1312, 16
        %v1349 = vpack.i.b16 %v1348, %v1347
        %v1352 = vpack.i.b16 %v1311, %v1277
        %v1353 = vshrl.u32 %v1277, 16
        %v1354 = vshrl.u32 %v1311, 16
        %v1355 = vpack.i.b16 %v1354, %v1353
        %v1358 = vpack.i.b16 %v1313, %v1279
        %v1359 = vshrl.u32 %v1279, 16
        %v1360 = vshrl.u32 %v1313, 16
        %v1361 = vpack.i.b16 %v1360, %v1359
        %v1362 = vpack.c.bf16 %v951, %v947
        %1364 = vrot.lane.b32.xlu0 %v1362, 112
        %v1365 = vpop.permute.xlu0 %1364
        %1366 = vrot.lane.b32.xlu0 %v1362, 96
        %v1367 = vpop.permute.xlu0 %1366
        %1368 = vrot.lane.b32.xlu0 %v1362, 80
        %v1369 = vpop.permute.xlu0 %1368
        %1370 = vrot.lane.b32.xlu0 %v1362, 64
        %v1371 = vpop.permute.xlu0 %1370
        %1372 = vrot.lane.b32.xlu0 %v1362, 48
        %v1373 = vpop.permute.xlu0 %1372
        %1374 = vrot.lane.b32.xlu0 %v1362, 32
        %v1375 = vpop.permute.xlu0 %1374
        %1376 = vrot.lane.b32.xlu0 %v1362, 16
        %v1377 = vpop.permute.xlu0 %1376
        %v1380 = vpack.i.b16 %v1365, %v1362
        %v1382 = vshrl.u32 %v1362, 16
        %v1383 = vshrl.u32 %v1365, 16
        %v1384 = vpack.i.b16 %v1383, %v1382
        %v1388 = vpack.i.b16 %v1369, %v1367
        %v1390 = vshrl.u32 %v1367, 16
        %v1391 = vshrl.u32 %v1369, 16
        %v1392 = vpack.i.b16 %v1391, %v1390
        %v1396 = vpack.i.b16 %v1373, %v1371
        %v1398 = vshrl.u32 %v1371, 16
        %v1399 = vshrl.u32 %v1373, 16
        %v1400 = vpack.i.b16 %v1399, %v1398
        %v1404 = vpack.i.b16 %v1377, %v1375
        %v1406 = vshrl.u32 %v1375, 16
        %v1407 = vshrl.u32 %v1377, 16
        %v1408 = vpack.i.b16 %v1407, %v1406
        %v1410 = vcombine.low %v1380, %v1396
        %v1411 = vcombine.high %v1380, %v1396
        %v1413 = vunpack.c.l.s4 1983009808
        %v1414 = vunpack.c.0.s8 %v1413
        %v1415 = vlaneseq
        %v1416 = vshrl.u32 %v1415, 7
        %v1417 = vsub.s32 %v1414, %v1416
        %v1418 = vrot.slane %v1410, %v1417
        %v1420 = vunpack.c.l.s4 1983009808
        %v1421 = vunpack.c.0.s8 %v1420
        %v1422 = vlaneseq
        %v1423 = vshrl.u32 %v1422, 7
        %v1424 = vsub.s32 %v1421, %v1423
        %v1425 = vrot.slane %v1411, %v1424
        %v1426 = vcombine.low %v1388, %v1404
        %v1427 = vcombine.high %v1388, %v1404
        %v1429 = vunpack.c.l.s4 1983009808
        %v1430 = vunpack.c.0.s8 %v1429
        %v1431 = vlaneseq
        %v1432 = vshrl.u32 %v1431, 7
        %v1433 = vsub.s32 %v1430, %v1432
        %v1434 = vrot.slane %v1426, %v1433
        %v1436 = vunpack.c.l.s4 1983009808
        %v1437 = vunpack.c.0.s8 %v1436
        %v1438 = vlaneseq
        %v1439 = vshrl.u32 %v1438, 7
        %v1440 = vsub.s32 %v1437, %v1439
        %v1441 = vrot.slane %v1427, %v1440
        %v1442 = vcombine.low %v1418, %v1434
        %v1443 = vcombine.high %v1418, %v1434
        %v1445 = vunpack.c.l.s4 1934713408
        %v1446 = vunpack.c.0.s8 %v1445
        %v1447 = vlaneseq
        %v1448 = vshrl.u32 %v1447, 7
        %v1449 = vsub.s32 %v1446, %v1448
        %v1450 = vrot.slane %v1442, %v1449
        %v1452 = vunpack.c.l.s4 1934713408
        %v1453 = vunpack.c.0.s8 %v1452
        %v1454 = vlaneseq
        %v1455 = vshrl.u32 %v1454, 7
        %v1456 = vsub.s32 %v1453, %v1455
        %v1457 = vrot.slane %v1443, %v1456
        %v1458 = vcombine.low %v1425, %v1441
        %v1459 = vcombine.high %v1425, %v1441
        %v1461 = vunpack.c.l.s4 1934713408
        %v1462 = vunpack.c.0.s8 %v1461
        %v1463 = vlaneseq
        %v1464 = vshrl.u32 %v1463, 7
        %v1465 = vsub.s32 %v1462, %v1464
        %v1466 = vrot.slane %v1458, %v1465
        %v1468 = vunpack.c.l.s4 1934713408
        %v1469 = vunpack.c.0.s8 %v1468
        %v1470 = vlaneseq
        %v1471 = vshrl.u32 %v1470, 7
        %v1472 = vsub.s32 %v1469, %v1471
        %v1473 = vrot.slane %v1459, %v1472
        %v1474 = vcombine.high %v1450, 0
        %v1475 = vcombine.high %v1457, 0
        %v1476 = vcombine.high %v1466, 0
        %v1477 = vcombine.high %v1473, 0
        %v1478 = vcombine.low %v1384, %v1400
        %v1479 = vcombine.high %v1384, %v1400
        %v1481 = vunpack.c.l.s4 1983009808
        %v1482 = vunpack.c.0.s8 %v1481
        %v1483 = vlaneseq
        %v1484 = vshrl.u32 %v1483, 7
        %v1485 = vsub.s32 %v1482, %v1484
        %v1486 = vrot.slane %v1478, %v1485
        %v1488 = vunpack.c.l.s4 1983009808
        %v1489 = vunpack.c.0.s8 %v1488
        %v1490 = vlaneseq
        %v1491 = vshrl.u32 %v1490, 7
        %v1492 = vsub.s32 %v1489, %v1491
        %v1493 = vrot.slane %v1479, %v1492
        %v1494 = vcombine.low %v1392, %v1408
        %v1495 = vcombine.high %v1392, %v1408
        %v1497 = vunpack.c.l.s4 1983009808
        %v1498 = vunpack.c.0.s8 %v1497
        %v1499 = vlaneseq
        %v1500 = vshrl.u32 %v1499, 7
        %v1501 = vsub.s32 %v1498, %v1500
        %v1502 = vrot.slane %v1494, %v1501
        %v1504 = vunpack.c.l.s4 1983009808
        %v1505 = vunpack.c.0.s8 %v1504
        %v1506 = vlaneseq
        %v1507 = vshrl.u32 %v1506, 7
        %v1508 = vsub.s32 %v1505, %v1507
        %v1509 = vrot.slane %v1495, %v1508
        %v1510 = vcombine.low %v1486, %v1502
        %v1511 = vcombine.high %v1486, %v1502
        %v1513 = vunpack.c.l.s4 1934713408
        %v1514 = vunpack.c.0.s8 %v1513
        %v1515 = vlaneseq
        %v1516 = vshrl.u32 %v1515, 7
        %v1517 = vsub.s32 %v1514, %v1516
        %v1518 = vrot.slane %v1510, %v1517
        %v1520 = vunpack.c.l.s4 1934713408
        %v1521 = vunpack.c.0.s8 %v1520
        %v1522 = vlaneseq
        %v1523 = vshrl.u32 %v1522, 7
        %v1524 = vsub.s32 %v1521, %v1523
        %v1525 = vrot.slane %v1511, %v1524
        %v1526 = vcombine.low %v1493, %v1509
        %v1527 = vcombine.high %v1493, %v1509
        %v1529 = vunpack.c.l.s4 1934713408
        %v1530 = vunpack.c.0.s8 %v1529
        %v1531 = vlaneseq
        %v1532 = vshrl.u32 %v1531, 7
        %v1533 = vsub.s32 %v1530, %v1532
        %v1534 = vrot.slane %v1526, %v1533
        %v1536 = vunpack.c.l.s4 1934713408
        %v1537 = vunpack.c.0.s8 %v1536
        %v1538 = vlaneseq
        %v1539 = vshrl.u32 %v1538, 7
        %v1540 = vsub.s32 %v1537, %v1539
        %v1541 = vrot.slane %v1527, %v1540
        %v1542 = vcombine.high %v1518, 0
        %v1543 = vcombine.high %v1525, 0
        %v1544 = vcombine.high %v1534, 0
        %v1545 = vcombine.high %v1541, 0
        %v1546 = vcombine.low %v1450, %v1457
        %v1548 = vunpack.c.l.s4 1983009808
        %v1549 = vunpack.c.0.s8 %v1548
        %v1550 = vlaneseq
        %v1551 = vshrl.u32 %v1550, 7
        %v1552 = vsub.s32 %v1549, %v1551
        %v1553 = vrot.slane %v1546, %v1552
        %v1554 = vcombine.low %v1474, %v1475
        %v1556 = vunpack.c.l.s4 1983009808
        %v1557 = vunpack.c.0.s8 %v1556
        %v1558 = vlaneseq
        %v1559 = vshrl.u32 %v1558, 7
        %v1560 = vsub.s32 %v1557, %v1559
        %v1561 = vrot.slane %v1554, %v1560
        %v1562 = vcombine.low %v1553, %v1561
        %v1563 = vcombine.high %v1553, %v1561
        %v1565 = vunpack.c.l.s4 1934713408
        %v1566 = vunpack.c.0.s8 %v1565
        %v1567 = vlaneseq
        %v1568 = vshrl.u32 %v1567, 7
        %v1569 = vsub.s32 %v1566, %v1568
        %v1570 = vrot.slane %v1562, %v1569
        %v1572 = vunpack.c.l.s4 1934713408
        %v1573 = vunpack.c.0.s8 %v1572
        %v1574 = vlaneseq
        %v1575 = vshrl.u32 %v1574, 7
        %v1576 = vsub.s32 %v1573, %v1575
        %v1577 = vrot.slane %v1563, %v1576
        %v1578 = vcombine.high %v1570, 0
        %v1579 = vcombine.high %v1577, 0
        %v1580 = vcombine.low %v1518, %v1525
        %v1582 = vunpack.c.l.s4 1983009808
        %v1583 = vunpack.c.0.s8 %v1582
        %v1584 = vlaneseq
        %v1585 = vshrl.u32 %v1584, 7
        %v1586 = vsub.s32 %v1583, %v1585
        %v1587 = vrot.slane %v1580, %v1586
        %v1588 = vcombine.low %v1542, %v1543
        %v1590 = vunpack.c.l.s4 1983009808
        %v1591 = vunpack.c.0.s8 %v1590
        %v1592 = vlaneseq
        %v1593 = vshrl.u32 %v1592, 7
        %v1594 = vsub.s32 %v1591, %v1593
        %v1595 = vrot.slane %v1588, %v1594
        %v1596 = vcombine.low %v1587, %v1595
        %v1597 = vcombine.high %v1587, %v1595
        %v1599 = vunpack.c.l.s4 1934713408
        %v1600 = vunpack.c.0.s8 %v1599
        %v1601 = vlaneseq
        %v1602 = vshrl.u32 %v1601, 7
        %v1603 = vsub.s32 %v1600, %v1602
        %v1604 = vrot.slane %v1596, %v1603
        %v1606 = vunpack.c.l.s4 1934713408
        %v1607 = vunpack.c.0.s8 %v1606
        %v1608 = vlaneseq
        %v1609 = vshrl.u32 %v1608, 7
        %v1610 = vsub.s32 %v1607, %v1609
        %v1611 = vrot.slane %v1597, %v1610
        %v1612 = vcombine.high %v1604, 0
        %v1613 = vcombine.high %v1611, 0
        %v1614 = vcombine.low %v1466, %v1473
        %v1616 = vunpack.c.l.s4 1983009808
        %v1617 = vunpack.c.0.s8 %v1616
        %v1618 = vlaneseq
        %v1619 = vshrl.u32 %v1618, 7
        %v1620 = vsub.s32 %v1617, %v1619
        %v1621 = vrot.slane %v1614, %v1620
        %v1622 = vcombine.low %v1476, %v1477
        %v1624 = vunpack.c.l.s4 1983009808
        %v1625 = vunpack.c.0.s8 %v1624
        %v1626 = vlaneseq
        %v1627 = vshrl.u32 %v1626, 7
        %v1628 = vsub.s32 %v1625, %v1627
        %v1629 = vrot.slane %v1622, %v1628
        %v1630 = vcombine.low %v1621, %v1629
        %v1631 = vcombine.high %v1621, %v1629
        %v1633 = vunpack.c.l.s4 1934713408
        %v1634 = vunpack.c.0.s8 %v1633
        %v1635 = vlaneseq
        %v1636 = vshrl.u32 %v1635, 7
        %v1637 = vsub.s32 %v1634, %v1636
        %v1638 = vrot.slane %v1630, %v1637
        %v1640 = vunpack.c.l.s4 1934713408
        %v1641 = vunpack.c.0.s8 %v1640
        %v1642 = vlaneseq
        %v1643 = vshrl.u32 %v1642, 7
        %v1644 = vsub.s32 %v1641, %v1643
        %v1645 = vrot.slane %v1631, %v1644
        %v1646 = vcombine.high %v1638, 0
        %v1647 = vcombine.high %v1645, 0
        %v1648 = vcombine.low %v1534, %v1541
        %v1650 = vunpack.c.l.s4 1983009808
        %v1651 = vunpack.c.0.s8 %v1650
        %v1652 = vlaneseq
        %v1653 = vshrl.u32 %v1652, 7
        %v1654 = vsub.s32 %v1651, %v1653
        %v1655 = vrot.slane %v1648, %v1654
        %v1656 = vcombine.low %v1544, %v1545
        %v1658 = vunpack.c.l.s4 1983009808
        %v1659 = vunpack.c.0.s8 %v1658
        %v1660 = vlaneseq
        %v1661 = vshrl.u32 %v1660, 7
        %v1662 = vsub.s32 %v1659, %v1661
        %v1663 = vrot.slane %v1656, %v1662
        %v1664 = vcombine.low %v1655, %v1663
        %v1665 = vcombine.high %v1655, %v1663
        %v1667 = vunpack.c.l.s4 1934713408
        %v1668 = vunpack.c.0.s8 %v1667
        %v1669 = vlaneseq
        %v1670 = vshrl.u32 %v1669, 7
        %v1671 = vsub.s32 %v1668, %v1670
        %v1672 = vrot.slane %v1664, %v1671
        %v1674 = vunpack.c.l.s4 1934713408
        %v1675 = vunpack.c.0.s8 %v1674
        %v1676 = vlaneseq
        %v1677 = vshrl.u32 %v1676, 7
        %v1678 = vsub.s32 %v1675, %v1677
        %v1679 = vrot.slane %v1665, %v1678
        %v1680 = vcombine.high %v1672, 0
        %v1681 = vcombine.high %v1679, 0
        %v1684 = vpack.i.b16 %v1604, %v1570
        %v1685 = vshrl.u32 %v1570, 16
        %v1686 = vshrl.u32 %v1604, 16
        %v1687 = vpack.i.b16 %v1686, %v1685
        %v1690 = vpack.i.b16 %v1612, %v1578
        %v1691 = vshrl.u32 %v1578, 16
        %v1692 = vshrl.u32 %v1612, 16
        %v1693 = vpack.i.b16 %v1692, %v1691
        %v1696 = vpack.i.b16 %v1611, %v1577
        %v1697 = vshrl.u32 %v1577, 16
        %v1698 = vshrl.u32 %v1611, 16
        %v1699 = vpack.i.b16 %v1698, %v1697
        %v1702 = vpack.i.b16 %v1613, %v1579
        %v1703 = vshrl.u32 %v1579, 16
        %v1704 = vshrl.u32 %v1613, 16
        %v1705 = vpack.i.b16 %v1704, %v1703
        %v1708 = vpack.i.b16 %v1672, %v1638
        %v1709 = vshrl.u32 %v1638, 16
        %v1710 = vshrl.u32 %v1672, 16
        %v1711 = vpack.i.b16 %v1710, %v1709
        %v1714 = vpack.i.b16 %v1680, %v1646
        %v1715 = vshrl.u32 %v1646, 16
        %v1716 = vshrl.u32 %v1680, 16
        %v1717 = vpack.i.b16 %v1716, %v1715
        %v1720 = vpack.i.b16 %v1679, %v1645
        %v1721 = vshrl.u32 %v1645, 16
        %v1722 = vshrl.u32 %v1679, 16
        %v1723 = vpack.i.b16 %v1722, %v1721
        %v1726 = vpack.i.b16 %v1681, %v1647
        %v1727 = vshrl.u32 %v1647, 16
        %v1728 = vshrl.u32 %v1681, 16
        %v1729 = vpack.i.b16 %v1728, %v1727
        %v1730 = vpack.c.bf16 %v991, %v988
        %1732 = vrot.lane.b32.xlu0 %v1730, 112
        %v1733 = vpop.permute.xlu0 %1732
        %1734 = vrot.lane.b32.xlu0 %v1730, 96
        %v1735 = vpop.permute.xlu0 %1734
        %1736 = vrot.lane.b32.xlu0 %v1730, 80
        %v1737 = vpop.permute.xlu0 %1736
        %1738 = vrot.lane.b32.xlu0 %v1730, 64
        %v1739 = vpop.permute.xlu0 %1738
        %1740 = vrot.lane.b32.xlu0 %v1730, 48
        %v1741 = vpop.permute.xlu0 %1740
        %1742 = vrot.lane.b32.xlu0 %v1730, 32
        %v1743 = vpop.permute.xlu0 %1742
        %1744 = vrot.lane.b32.xlu0 %v1730, 16
        %v1745 = vpop.permute.xlu0 %1744
        %v1748 = vpack.i.b16 %v1733, %v1730
        %v1750 = vshrl.u32 %v1730, 16
        %v1751 = vshrl.u32 %v1733, 16
        %v1752 = vpack.i.b16 %v1751, %v1750
        %v1756 = vpack.i.b16 %v1737, %v1735
        %v1758 = vshrl.u32 %v1735, 16
        %v1759 = vshrl.u32 %v1737, 16
        %v1760 = vpack.i.b16 %v1759, %v1758
        %v1764 = vpack.i.b16 %v1741, %v1739
        %v1766 = vshrl.u32 %v1739, 16
        %v1767 = vshrl.u32 %v1741, 16
        %v1768 = vpack.i.b16 %v1767, %v1766
        %v1772 = vpack.i.b16 %v1745, %v1743
        %v1774 = vshrl.u32 %v1743, 16
        %v1775 = vshrl.u32 %v1745, 16
        %v1776 = vpack.i.b16 %v1775, %v1774
        %v1778 = vcombine.low %v1748, %v1764
        %v1779 = vcombine.high %v1748, %v1764
        %v1781 = vunpack.c.l.s4 1983009808
        %v1782 = vunpack.c.0.s8 %v1781
        %v1783 = vlaneseq
        %v1784 = vshrl.u32 %v1783, 7
        %v1785 = vsub.s32 %v1782, %v1784
        %v1786 = vrot.slane %v1778, %v1785
        %v1788 = vunpack.c.l.s4 1983009808
        %v1789 = vunpack.c.0.s8 %v1788
        %v1790 = vlaneseq
        %v1791 = vshrl.u32 %v1790, 7
        %v1792 = vsub.s32 %v1789, %v1791
        %v1793 = vrot.slane %v1779, %v1792
        %v1794 = vcombine.low %v1756, %v1772
        %v1795 = vcombine.high %v1756, %v1772
        %v1797 = vunpack.c.l.s4 1983009808
        %v1798 = vunpack.c.0.s8 %v1797
        %v1799 = vlaneseq
        %v1800 = vshrl.u32 %v1799, 7
        %v1801 = vsub.s32 %v1798, %v1800
        %v1802 = vrot.slane %v1794, %v1801
        %v1804 = vunpack.c.l.s4 1983009808
        %v1805 = vunpack.c.0.s8 %v1804
        %v1806 = vlaneseq
        %v1807 = vshrl.u32 %v1806, 7
        %v1808 = vsub.s32 %v1805, %v1807
        %v1809 = vrot.slane %v1795, %v1808
        %v1810 = vcombine.low %v1786, %v1802
        %v1811 = vcombine.high %v1786, %v1802
        %v1813 = vunpack.c.l.s4 1934713408
        %v1814 = vunpack.c.0.s8 %v1813
        %v1815 = vlaneseq
        %v1816 = vshrl.u32 %v1815, 7
        %v1817 = vsub.s32 %v1814, %v1816
        %v1818 = vrot.slane %v1810, %v1817
        %v1820 = vunpack.c.l.s4 1934713408
        %v1821 = vunpack.c.0.s8 %v1820
        %v1822 = vlaneseq
        %v1823 = vshrl.u32 %v1822, 7
        %v1824 = vsub.s32 %v1821, %v1823
        %v1825 = vrot.slane %v1811, %v1824
        %v1826 = vcombine.low %v1793, %v1809
        %v1827 = vcombine.high %v1793, %v1809
        %v1829 = vunpack.c.l.s4 1934713408
        %v1830 = vunpack.c.0.s8 %v1829
        %v1831 = vlaneseq
        %v1832 = vshrl.u32 %v1831, 7
        %v1833 = vsub.s32 %v1830, %v1832
        %v1834 = vrot.slane %v1826, %v1833
        %v1836 = vunpack.c.l.s4 1934713408
        %v1837 = vunpack.c.0.s8 %v1836
        %v1838 = vlaneseq
        %v1839 = vshrl.u32 %v1838, 7
        %v1840 = vsub.s32 %v1837, %v1839
        %v1841 = vrot.slane %v1827, %v1840
        %v1842 = vcombine.high %v1818, 0
        %v1843 = vcombine.high %v1825, 0
        %v1844 = vcombine.high %v1834, 0
        %v1845 = vcombine.high %v1841, 0
        %v1846 = vcombine.low %v1752, %v1768
        %v1847 = vcombine.high %v1752, %v1768
        %v1849 = vunpack.c.l.s4 1983009808
        %v1850 = vunpack.c.0.s8 %v1849
        %v1851 = vlaneseq
        %v1852 = vshrl.u32 %v1851, 7
        %v1853 = vsub.s32 %v1850, %v1852
        %v1854 = vrot.slane %v1846, %v1853
        %v1856 = vunpack.c.l.s4 1983009808
        %v1857 = vunpack.c.0.s8 %v1856
        %v1858 = vlaneseq
        %v1859 = vshrl.u32 %v1858, 7
        %v1860 = vsub.s32 %v1857, %v1859
        %v1861 = vrot.slane %v1847, %v1860
        %v1862 = vcombine.low %v1760, %v1776
        %v1863 = vcombine.high %v1760, %v1776
        %v1865 = vunpack.c.l.s4 1983009808
        %v1866 = vunpack.c.0.s8 %v1865
        %v1867 = vlaneseq
        %v1868 = vshrl.u32 %v1867, 7
        %v1869 = vsub.s32 %v1866, %v1868
        %v1870 = vrot.slane %v1862, %v1869
        %v1872 = vunpack.c.l.s4 1983009808
        %v1873 = vunpack.c.0.s8 %v1872
        %v1874 = vlaneseq
        %v1875 = vshrl.u32 %v1874, 7
        %v1876 = vsub.s32 %v1873, %v1875
        %v1877 = vrot.slane %v1863, %v1876
        %v1878 = vcombine.low %v1854, %v1870
        %v1879 = vcombine.high %v1854, %v1870
        %v1881 = vunpack.c.l.s4 1934713408
        %v1882 = vunpack.c.0.s8 %v1881
        %v1883 = vlaneseq
        %v1884 = vshrl.u32 %v1883, 7
        %v1885 = vsub.s32 %v1882, %v1884
        %v1886 = vrot.slane %v1878, %v1885
        %v1888 = vunpack.c.l.s4 1934713408
        %v1889 = vunpack.c.0.s8 %v1888
        %v1890 = vlaneseq
        %v1891 = vshrl.u32 %v1890, 7
        %v1892 = vsub.s32 %v1889, %v1891
        %v1893 = vrot.slane %v1879, %v1892
        %v1894 = vcombine.low %v1861, %v1877
        %v1895 = vcombine.high %v1861, %v1877
        %v1897 = vunpack.c.l.s4 1934713408
        %v1898 = vunpack.c.0.s8 %v1897
        %v1899 = vlaneseq
        %v1900 = vshrl.u32 %v1899, 7
        %v1901 = vsub.s32 %v1898, %v1900
        %v1902 = vrot.slane %v1894, %v1901
        %v1904 = vunpack.c.l.s4 1934713408
        %v1905 = vunpack.c.0.s8 %v1904
        %v1906 = vlaneseq
        %v1907 = vshrl.u32 %v1906, 7
        %v1908 = vsub.s32 %v1905, %v1907
        %v1909 = vrot.slane %v1895, %v1908
        %v1910 = vcombine.high %v1886, 0
        %v1911 = vcombine.high %v1893, 0
        %v1912 = vcombine.high %v1902, 0
        %v1913 = vcombine.high %v1909, 0
        %v1914 = vcombine.low %v1818, %v1825
        %v1916 = vunpack.c.l.s4 1983009808
        %v1917 = vunpack.c.0.s8 %v1916
        %v1918 = vlaneseq
        %v1919 = vshrl.u32 %v1918, 7
        %v1920 = vsub.s32 %v1917, %v1919
        %v1921 = vrot.slane %v1914, %v1920
        %v1922 = vcombine.low %v1842, %v1843
        %v1924 = vunpack.c.l.s4 1983009808
        %v1925 = vunpack.c.0.s8 %v1924
        %v1926 = vlaneseq
        %v1927 = vshrl.u32 %v1926, 7
        %v1928 = vsub.s32 %v1925, %v1927
        %v1929 = vrot.slane %v1922, %v1928
        %v1930 = vcombine.low %v1921, %v1929
        %v1931 = vcombine.high %v1921, %v1929
        %v1933 = vunpack.c.l.s4 1934713408
        %v1934 = vunpack.c.0.s8 %v1933
        %v1935 = vlaneseq
        %v1936 = vshrl.u32 %v1935, 7
        %v1937 = vsub.s32 %v1934, %v1936
        %v1938 = vrot.slane %v1930, %v1937
        %v1940 = vunpack.c.l.s4 1934713408
        %v1941 = vunpack.c.0.s8 %v1940
        %v1942 = vlaneseq
        %v1943 = vshrl.u32 %v1942, 7
        %v1944 = vsub.s32 %v1941, %v1943
        %v1945 = vrot.slane %v1931, %v1944
        %v1946 = vcombine.high %v1938, 0
        %v1947 = vcombine.high %v1945, 0
        %v1948 = vcombine.low %v1886, %v1893
        %v1950 = vunpack.c.l.s4 1983009808
        %v1951 = vunpack.c.0.s8 %v1950
        %v1952 = vlaneseq
        %v1953 = vshrl.u32 %v1952, 7
        %v1954 = vsub.s32 %v1951, %v1953
        %v1955 = vrot.slane %v1948, %v1954
        %v1956 = vcombine.low %v1910, %v1911
        %v1958 = vunpack.c.l.s4 1983009808
        %v1959 = vunpack.c.0.s8 %v1958
        %v1960 = vlaneseq
        %v1961 = vshrl.u32 %v1960, 7
        %v1962 = vsub.s32 %v1959, %v1961
        %v1963 = vrot.slane %v1956, %v1962
        %v1964 = vcombine.low %v1955, %v1963
        %v1965 = vcombine.high %v1955, %v1963
        %v1967 = vunpack.c.l.s4 1934713408
        %v1968 = vunpack.c.0.s8 %v1967
        %v1969 = vlaneseq
        %v1970 = vshrl.u32 %v1969, 7
        %v1971 = vsub.s32 %v1968, %v1970
        %v1972 = vrot.slane %v1964, %v1971
        %v1974 = vunpack.c.l.s4 1934713408
        %v1975 = vunpack.c.0.s8 %v1974
        %v1976 = vlaneseq
        %v1977 = vshrl.u32 %v1976, 7
        %v1978 = vsub.s32 %v1975, %v1977
        %v1979 = vrot.slane %v1965, %v1978
        %v1980 = vcombine.high %v1972, 0
        %v1981 = vcombine.high %v1979, 0
        %v1982 = vcombine.low %v1834, %v1841
        %v1984 = vunpack.c.l.s4 1983009808
        %v1985 = vunpack.c.0.s8 %v1984
        %v1986 = vlaneseq
        %v1987 = vshrl.u32 %v1986, 7
        %v1988 = vsub.s32 %v1985, %v1987
        %v1989 = vrot.slane %v1982, %v1988
        %v1990 = vcombine.low %v1844, %v1845
        %v1992 = vunpack.c.l.s4 1983009808
        %v1993 = vunpack.c.0.s8 %v1992
        %v1994 = vlaneseq
        %v1995 = vshrl.u32 %v1994, 7
        %v1996 = vsub.s32 %v1993, %v1995
        %v1997 = vrot.slane %v1990, %v1996
        %v1998 = vcombine.low %v1989, %v1997
        %v1999 = vcombine.high %v1989, %v1997
        %v2001 = vunpack.c.l.s4 1934713408
        %v2002 = vunpack.c.0.s8 %v2001
        %v2003 = vlaneseq
        %v2004 = vshrl.u32 %v2003, 7
        %v2005 = vsub.s32 %v2002, %v2004
        %v2006 = vrot.slane %v1998, %v2005
        %v2008 = vunpack.c.l.s4 1934713408
        %v2009 = vunpack.c.0.s8 %v2008
        %v2010 = vlaneseq
        %v2011 = vshrl.u32 %v2010, 7
        %v2012 = vsub.s32 %v2009, %v2011
        %v2013 = vrot.slane %v1999, %v2012
        %v2014 = vcombine.high %v2006, 0
        %v2015 = vcombine.high %v2013, 0
        %v2016 = vcombine.low %v1902, %v1909
        %v2018 = vunpack.c.l.s4 1983009808
        %v2019 = vunpack.c.0.s8 %v2018
        %v2020 = vlaneseq
        %v2021 = vshrl.u32 %v2020, 7
        %v2022 = vsub.s32 %v2019, %v2021
        %v2023 = vrot.slane %v2016, %v2022
        %v2024 = vcombine.low %v1912, %v1913
        %v2026 = vunpack.c.l.s4 1983009808
        %v2027 = vunpack.c.0.s8 %v2026
        %v2028 = vlaneseq
        %v2029 = vshrl.u32 %v2028, 7
        %v2030 = vsub.s32 %v2027, %v2029
        %v2031 = vrot.slane %v2024, %v2030
        %v2032 = vcombine.low %v2023, %v2031
        %v2033 = vcombine.high %v2023, %v2031
        %v2035 = vunpack.c.l.s4 1934713408
        %v2036 = vunpack.c.0.s8 %v2035
        %v2037 = vlaneseq
        %v2038 = vshrl.u32 %v2037, 7
        %v2039 = vsub.s32 %v2036, %v2038
        %v2040 = vrot.slane %v2032, %v2039
        %v2042 = vunpack.c.l.s4 1934713408
        %v2043 = vunpack.c.0.s8 %v2042
        %v2044 = vlaneseq
        %v2045 = vshrl.u32 %v2044, 7
        %v2046 = vsub.s32 %v2043, %v2045
        %v2047 = vrot.slane %v2033, %v2046
        %v2048 = vcombine.high %v2040, 0
        %v2049 = vcombine.high %v2047, 0
        %v2052 = vpack.i.b16 %v1972, %v1938
        %v2053 = vshrl.u32 %v1938, 16
        %v2054 = vshrl.u32 %v1972, 16
        %v2055 = vpack.i.b16 %v2054, %v2053
        %v2058 = vpack.i.b16 %v1980, %v1946
        %v2059 = vshrl.u32 %v1946, 16
        %v2060 = vshrl.u32 %v1980, 16
        %v2061 = vpack.i.b16 %v2060, %v2059
        %v2064 = vpack.i.b16 %v1979, %v1945
        %v2065 = vshrl.u32 %v1945, 16
        %v2066 = vshrl.u32 %v1979, 16
        %v2067 = vpack.i.b16 %v2066, %v2065
        %v2070 = vpack.i.b16 %v1981, %v1947
        %v2071 = vshrl.u32 %v1947, 16
        %v2072 = vshrl.u32 %v1981, 16
        %v2073 = vpack.i.b16 %v2072, %v2071
        %v2076 = vpack.i.b16 %v2040, %v2006
        %v2077 = vshrl.u32 %v2006, 16
        %v2078 = vshrl.u32 %v2040, 16
        %v2079 = vpack.i.b16 %v2078, %v2077
        %v2082 = vpack.i.b16 %v2048, %v2014
        %v2083 = vshrl.u32 %v2014, 16
        %v2084 = vshrl.u32 %v2048, 16
        %v2085 = vpack.i.b16 %v2084, %v2083
        %v2088 = vpack.i.b16 %v2047, %v2013
        %v2089 = vshrl.u32 %v2013, 16
        %v2090 = vshrl.u32 %v2047, 16
        %v2091 = vpack.i.b16 %v2090, %v2089
        %v2094 = vpack.i.b16 %v2049, %v2015
        %v2095 = vshrl.u32 %v2015, 16
        %v2096 = vshrl.u32 %v2049, 16
        %v2097 = vpack.i.b16 %v2096, %v2095
        %vm2098 = vcmask 130048
        %v2100 = vsel %vm2098, %v1316, 0
        %v2103 = vsel %vm2098, %v1684, 0
        %2105 = vmatprep.subr.bf16.mxu0 0
        %2106 = vmatpush1.bf16.xpose.msra.mxu0 0
        %2107 = vmatprep.subr.bf16.mxu0 0
        %2108 = vmatpush1.bf16.xpose.msra.mxu0 0
        %2109 = vmatprep.subr.bf16.mxu0 0
        %2110 = vmatpush1.bf16.xpose.msra.mxu0 0
        %2111 = vmatprep.subr.bf16.mxu0 0
        %2112 = vmatpush1.bf16.xpose.msra.mxu0 0
        %2113 = vmatprep.subr.bf16.mxu0 0
        %2114 = vmatpush1.bf16.xpose.msra.mxu0 0
        %2115 = vmatprep.subr.bf16.mxu0 0
        %2116 = vmatpush1.bf16.xpose.msra.mxu0 0
        %2117 = vmatprep.subr.bf16.mxu0 0
        %2118 = vmatpush1.bf16.xpose.msra.mxu0 0
        %2119 = vmatprep.subr.bf16.mxu0 0
        %2120 = vmatpush1.bf16.xpose.msra.mxu0 %v2103
        %2121 = vmatprep.subr.bf16.mxu0 0
        %2122 = vmatpush2.bf16.xpose.msra.mxu0 0
        %2123 = vmatprep.subr.bf16.mxu0 0
        %2124 = vmatpush2.bf16.xpose.msra.mxu0 0
        %2125 = vmatprep.subr.bf16.mxu0 0
        %2126 = vmatpush2.bf16.xpose.msra.mxu0 0
        %2127 = vmatprep.subr.bf16.mxu0 0
        %2128 = vmatpush2.bf16.xpose.msra.mxu0 0
        %2129 = vmatprep.subr.bf16.mxu0 0
        %2130 = vmatpush2.bf16.xpose.msra.mxu0 0
        %2131 = vmatprep.subr.bf16.mxu0 0
        %2132 = vmatpush2.bf16.xpose.msra.mxu0 0
        %2133 = vmatprep.subr.bf16.mxu0 0
        %2134 = vmatpush2.bf16.xpose.msra.mxu0 0
        %2135 = vmatprep.subr.bf16.mxu0 0
        %2136 = vmatpush2.bf16.xpose.msra.mxu0 0
        %2137 = vmatprep.mubr.bf16.mxu0 0
        %2138 = vmatmul.mubr.bf16.gmra.mxu0 %v2100
        %v2139 = vpop.f32.mrf.mxu0
        %v2140 = vadd.f32 0.0, %v2139
        %v2141 = vpop.f32.mrf.mxu0
        %v2142 = vpop.f32.mrf.mxu0
        %v2143 = vpop.f32.mrf.mxu0
        %2144 = vdwg.mxu0
        %v2146 = vsel %vm2098, %v1319, 0
        %v2149 = vsel %vm2098, %v1687, 0
        %2151 = vmatprep.subr.bf16.mxu0 0
        %2152 = vmatpush1.bf16.xpose.msra.mxu0 0
        %2153 = vmatprep.subr.bf16.mxu0 0
        %2154 = vmatpush1.bf16.xpose.msra.mxu0 0
        %2155 = vmatprep.subr.bf16.mxu0 0
        %2156 = vmatpush1.bf16.xpose.msra.mxu0 0
        %2157 = vmatprep.subr.bf16.mxu0 0
        %2158 = vmatpush1.bf16.xpose.msra.mxu0 0
        %2159 = vmatprep.subr.bf16.mxu0 0
        %2160 = vmatpush1.bf16.xpose.msra.mxu0 0
        %2161 = vmatprep.subr.bf16.mxu0 0
        %2162 = vmatpush1.bf16.xpose.msra.mxu0 0
        %2163 = vmatprep.subr.bf16.mxu0 0
        %2164 = vmatpush1.bf16.xpose.msra.mxu0 0
        %2165 = vmatprep.subr.bf16.mxu0 0
        %2166 = vmatpush1.bf16.xpose.msra.mxu0 %v2149
        %2167 = vmatprep.subr.bf16.mxu0 0
        %2168 = vmatpush2.bf16.xpose.msra.mxu0 0
        %2169 = vmatprep.subr.bf16.mxu0 0
        %2170 = vmatpush2.bf16.xpose.msra.mxu0 0
        %2171 = vmatprep.subr.bf16.mxu0 0
        %2172 = vmatpush2.bf16.xpose.msra.mxu0 0
        %2173 = vmatprep.subr.bf16.mxu0 0
        %2174 = vmatpush2.bf16.xpose.msra.mxu0 0
        %2175 = vmatprep.subr.bf16.mxu0 0
        %2176 = vmatpush2.bf16.xpose.msra.mxu0 0
        %2177 = vmatprep.subr.bf16.mxu0 0
        %2178 = vmatpush2.bf16.xpose.msra.mxu0 0
        %2179 = vmatprep.subr.bf16.mxu0 0
        %2180 = vmatpush2.bf16.xpose.msra.mxu0 0
        %2181 = vmatprep.subr.bf16.mxu0 0
        %2182 = vmatpush2.bf16.xpose.msra.mxu0 0
        %2183 = vmatprep.mubr.bf16.mxu0 0
        %2184 = vmatmul.mubr.bf16.gmra.mxu0 %v2146
        %v2185 = vpop.f32.mrf.mxu0
        %v2186 = vadd.f32 0.0, %v2185
        %v2187 = vpop.f32.mrf.mxu0
        %v2188 = vpop.f32.mrf.mxu0
        %v2189 = vpop.f32.mrf.mxu0
        %2190 = vdwg.mxu0
        %v2192 = vsel %vm2098, %v1322, 0
        %v2195 = vsel %vm2098, %v1690, 0
        %2197 = vmatprep.subr.bf16.mxu0 0
        %2198 = vmatpush1.bf16.xpose.msra.mxu0 0
        %2199 = vmatprep.subr.bf16.mxu0 0
        %2200 = vmatpush1.bf16.xpose.msra.mxu0 0
        %2201 = vmatprep.subr.bf16.mxu0 0
        %2202 = vmatpush1.bf16.xpose.msra.mxu0 0
        %2203 = vmatprep.subr.bf16.mxu0 0
        %2204 = vmatpush1.bf16.xpose.msra.mxu0 0
        %2205 = vmatprep.subr.bf16.mxu0 0
        %2206 = vmatpush1.bf16.xpose.msra.mxu0 0
        %2207 = vmatprep.subr.bf16.mxu0 0
        %2208 = vmatpush1.bf16.xpose.msra.mxu0 0
        %2209 = vmatprep.subr.bf16.mxu0 0
        %2210 = vmatpush1.bf16.xpose.msra.mxu0 0
        %2211 = vmatprep.subr.bf16.mxu0 0
        %2212 = vmatpush1.bf16.xpose.msra.mxu0 %v2195
        %2213 = vmatprep.subr.bf16.mxu0 0
        %2214 = vmatpush2.bf16.xpose.msra.mxu0 0
        %2215 = vmatprep.subr.bf16.mxu0 0
        %2216 = vmatpush2.bf16.xpose.msra.mxu0 0
        %2217 = vmatprep.subr.bf16.mxu0 0
        %2218 = vmatpush2.bf16.xpose.msra.mxu0 0
        %2219 = vmatprep.subr.bf16.mxu0 0
        %2220 = vmatpush2.bf16.xpose.msra.mxu0 0
        %2221 = vmatprep.subr.bf16.mxu0 0
        %2222 = vmatpush2.bf16.xpose.msra.mxu0 0
        %2223 = vmatprep.subr.bf16.mxu0 0
        %2224 = vmatpush2.bf16.xpose.msra.mxu0 0
        %2225 = vmatprep.subr.bf16.mxu0 0
        %2226 = vmatpush2.bf16.xpose.msra.mxu0 0
        %2227 = vmatprep.subr.bf16.mxu0 0
        %2228 = vmatpush2.bf16.xpose.msra.mxu0 0
        %2229 = vmatprep.mubr.bf16.mxu0 0
        %2230 = vmatmul.mubr.bf16.gmra.mxu0 %v2192
        %v2231 = vpop.f32.mrf.mxu0
        %v2232 = vadd.f32 0.0, %v2231
        %v2233 = vpop.f32.mrf.mxu0
        %v2234 = vpop.f32.mrf.mxu0
        %v2235 = vpop.f32.mrf.mxu0
        %2236 = vdwg.mxu0
        %v2238 = vsel %vm2098, %v1325, 0
        %v2241 = vsel %vm2098, %v1693, 0
        %2243 = vmatprep.subr.bf16.mxu0 0
        %2244 = vmatpush1.bf16.xpose.msra.mxu0 0
        %2245 = vmatprep.subr.bf16.mxu0 0
        %2246 = vmatpush1.bf16.xpose.msra.mxu0 0
        %2247 = vmatprep.subr.bf16.mxu0 0
        %2248 = vmatpush1.bf16.xpose.msra.mxu0 0
        %2249 = vmatprep.subr.bf16.mxu0 0
        %2250 = vmatpush1.bf16.xpose.msra.mxu0 0
        %2251 = vmatprep.subr.bf16.mxu0 0
        %2252 = vmatpush1.bf16.xpose.msra.mxu0 0
        %2253 = vmatprep.subr.bf16.mxu0 0
        %2254 = vmatpush1.bf16.xpose.msra.mxu0 0
        %2255 = vmatprep.subr.bf16.mxu0 0
        %2256 = vmatpush1.bf16.xpose.msra.mxu0 0
        %2257 = vmatprep.subr.bf16.mxu0 0
        %2258 = vmatpush1.bf16.xpose.msra.mxu0 %v2241
        %2259 = vmatprep.subr.bf16.mxu0 0
        %2260 = vmatpush2.bf16.xpose.msra.mxu0 0
        %2261 = vmatprep.subr.bf16.mxu0 0
        %2262 = vmatpush2.bf16.xpose.msra.mxu0 0
        %2263 = vmatprep.subr.bf16.mxu0 0
        %2264 = vmatpush2.bf16.xpose.msra.mxu0 0
        %2265 = vmatprep.subr.bf16.mxu0 0
        %2266 = vmatpush2.bf16.xpose.msra.mxu0 0
        %2267 = vmatprep.subr.bf16.mxu0 0
        %2268 = vmatpush2.bf16.xpose.msra.mxu0 0
        %2269 = vmatprep.subr.bf16.mxu0 0
        %2270 = vmatpush2.bf16.xpose.msra.mxu0 0
        %2271 = vmatprep.subr.bf16.mxu0 0
        %2272 = vmatpush2.bf16.xpose.msra.mxu0 0
        %2273 = vmatprep.subr.bf16.mxu0 0
        %2274 = vmatpush2.bf16.xpose.msra.mxu0 0
        %2275 = vmatprep.mubr.bf16.mxu0 0
        %2276 = vmatmul.mubr.bf16.gmra.mxu0 %v2238
        %v2277 = vpop.f32.mrf.mxu0
        %v2278 = vadd.f32 0.0, %v2277
        %v2279 = vpop.f32.mrf.mxu0
        %v2280 = vpop.f32.mrf.mxu0
        %v2281 = vpop.f32.mrf.mxu0
        %2282 = vdwg.mxu0
        %v2284 = vsel %vm2098, %v1328, 0
        %v2287 = vsel %vm2098, %v1696, 0
        %2289 = vmatprep.subr.bf16.mxu0 0
        %2290 = vmatpush1.bf16.xpose.msra.mxu0 0
        %2291 = vmatprep.subr.bf16.mxu0 0
        %2292 = vmatpush1.bf16.xpose.msra.mxu0 0
        %2293 = vmatprep.subr.bf16.mxu0 0
        %2294 = vmatpush1.bf16.xpose.msra.mxu0 0
        %2295 = vmatprep.subr.bf16.mxu0 0
        %2296 = vmatpush1.bf16.xpose.msra.mxu0 0
        %2297 = vmatprep.subr.bf16.mxu0 0
        %2298 = vmatpush1.bf16.xpose.msra.mxu0 0
        %2299 = vmatprep.subr.bf16.mxu0 0
        %2300 = vmatpush1.bf16.xpose.msra.mxu0 0
        %2301 = vmatprep.subr.bf16.mxu0 0
        %2302 = vmatpush1.bf16.xpose.msra.mxu0 0
        %2303 = vmatprep.subr.bf16.mxu0 0
        %2304 = vmatpush1.bf16.xpose.msra.mxu0 %v2287
        %2305 = vmatprep.subr.bf16.mxu0 0
        %2306 = vmatpush2.bf16.xpose.msra.mxu0 0
        %2307 = vmatprep.subr.bf16.mxu0 0
        %2308 = vmatpush2.bf16.xpose.msra.mxu0 0
        %2309 = vmatprep.subr.bf16.mxu0 0
        %2310 = vmatpush2.bf16.xpose.msra.mxu0 0
        %2311 = vmatprep.subr.bf16.mxu0 0
        %2312 = vmatpush2.bf16.xpose.msra.mxu0 0
        %2313 = vmatprep.subr.bf16.mxu0 0
        %2314 = vmatpush2.bf16.xpose.msra.mxu0 0
        %2315 = vmatprep.subr.bf16.mxu0 0
        %2316 = vmatpush2.bf16.xpose.msra.mxu0 0
        %2317 = vmatprep.subr.bf16.mxu0 0
        %2318 = vmatpush2.bf16.xpose.msra.mxu0 0
        %2319 = vmatprep.subr.bf16.mxu0 0
        %2320 = vmatpush2.bf16.xpose.msra.mxu0 0
        %2321 = vmatprep.mubr.bf16.mxu0 0
        %2322 = vmatmul.mubr.bf16.gmra.mxu0 %v2284
        %v2323 = vpop.f32.mrf.mxu0
        %v2324 = vadd.f32 0.0, %v2323
        %v2325 = vpop.f32.mrf.mxu0
        %v2326 = vpop.f32.mrf.mxu0
        %v2327 = vpop.f32.mrf.mxu0
        %2328 = vdwg.mxu0
        %v2330 = vsel %vm2098, %v1331, 0
        %v2333 = vsel %vm2098, %v1699, 0
        %2335 = vmatprep.subr.bf16.mxu0 0
        %2336 = vmatpush1.bf16.xpose.msra.mxu0 0
        %2337 = vmatprep.subr.bf16.mxu0 0
        %2338 = vmatpush1.bf16.xpose.msra.mxu0 0
        %2339 = vmatprep.subr.bf16.mxu0 0
        %2340 = vmatpush1.bf16.xpose.msra.mxu0 0
        %2341 = vmatprep.subr.bf16.mxu0 0
        %2342 = vmatpush1.bf16.xpose.msra.mxu0 0
        %2343 = vmatprep.subr.bf16.mxu0 0
        %2344 = vmatpush1.bf16.xpose.msra.mxu0 0
        %2345 = vmatprep.subr.bf16.mxu0 0
        %2346 = vmatpush1.bf16.xpose.msra.mxu0 0
        %2347 = vmatprep.subr.bf16.mxu0 0
        %2348 = vmatpush1.bf16.xpose.msra.mxu0 0
        %2349 = vmatprep.subr.bf16.mxu0 0
        %2350 = vmatpush1.bf16.xpose.msra.mxu0 %v2333
        %2351 = vmatprep.subr.bf16.mxu0 0
        %2352 = vmatpush2.bf16.xpose.msra.mxu0 0
        %2353 = vmatprep.subr.bf16.mxu0 0
        %2354 = vmatpush2.bf16.xpose.msra.mxu0 0
        %2355 = vmatprep.subr.bf16.mxu0 0
        %2356 = vmatpush2.bf16.xpose.msra.mxu0 0
        %2357 = vmatprep.subr.bf16.mxu0 0
        %2358 = vmatpush2.bf16.xpose.msra.mxu0 0
        %2359 = vmatprep.subr.bf16.mxu0 0
        %2360 = vmatpush2.bf16.xpose.msra.mxu0 0
        %2361 = vmatprep.subr.bf16.mxu0 0
        %2362 = vmatpush2.bf16.xpose.msra.mxu0 0
        %2363 = vmatprep.subr.bf16.mxu0 0
        %2364 = vmatpush2.bf16.xpose.msra.mxu0 0
        %2365 = vmatprep.subr.bf16.mxu0 0
        %2366 = vmatpush2.bf16.xpose.msra.mxu0 0
        %2367 = vmatprep.mubr.bf16.mxu0 0
        %2368 = vmatmul.mubr.bf16.gmra.mxu0 %v2330
        %v2369 = vpop.f32.mrf.mxu0
        %v2370 = vadd.f32 0.0, %v2369
        %v2371 = vpop.f32.mrf.mxu0
        %v2372 = vpop.f32.mrf.mxu0
        %v2373 = vpop.f32.mrf.mxu0
        %2374 = vdwg.mxu0
        %v2376 = vsel %vm2098, %v1334, 0
        %v2379 = vsel %vm2098, %v1702, 0
        %2381 = vmatprep.subr.bf16.mxu0 0
        %2382 = vmatpush1.bf16.xpose.msra.mxu0 0
        %2383 = vmatprep.subr.bf16.mxu0 0
        %2384 = vmatpush1.bf16.xpose.msra.mxu0 0
        %2385 = vmatprep.subr.bf16.mxu0 0
        %2386 = vmatpush1.bf16.xpose.msra.mxu0 0
        %2387 = vmatprep.subr.bf16.mxu0 0
        %2388 = vmatpush1.bf16.xpose.msra.mxu0 0
        %2389 = vmatprep.subr.bf16.mxu0 0
        %2390 = vmatpush1.bf16.xpose.msra.mxu0 0
        %2391 = vmatprep.subr.bf16.mxu0 0
        %2392 = vmatpush1.bf16.xpose.msra.mxu0 0
        %2393 = vmatprep.subr.bf16.mxu0 0
        %2394 = vmatpush1.bf16.xpose.msra.mxu0 0
        %2395 = vmatprep.subr.bf16.mxu0 0
        %2396 = vmatpush1.bf16.xpose.msra.mxu0 %v2379
        %2397 = vmatprep.subr.bf16.mxu0 0
        %2398 = vmatpush2.bf16.xpose.msra.mxu0 0
        %2399 = vmatprep.subr.bf16.mxu0 0
        %2400 = vmatpush2.bf16.xpose.msra.mxu0 0
        %2401 = vmatprep.subr.bf16.mxu0 0
        %2402 = vmatpush2.bf16.xpose.msra.mxu0 0
        %2403 = vmatprep.subr.bf16.mxu0 0
        %2404 = vmatpush2.bf16.xpose.msra.mxu0 0
        %2405 = vmatprep.subr.bf16.mxu0 0
        %2406 = vmatpush2.bf16.xpose.msra.mxu0 0
        %2407 = vmatprep.subr.bf16.mxu0 0
        %2408 = vmatpush2.bf16.xpose.msra.mxu0 0
        %2409 = vmatprep.subr.bf16.mxu0 0
        %2410 = vmatpush2.bf16.xpose.msra.mxu0 0
        %2411 = vmatprep.subr.bf16.mxu0 0
        %2412 = vmatpush2.bf16.xpose.msra.mxu0 0
        %2413 = vmatprep.mubr.bf16.mxu0 0
        %2414 = vmatmul.mubr.bf16.gmra.mxu0 %v2376
        %v2415 = vpop.f32.mrf.mxu0
        %v2416 = vadd.f32 0.0, %v2415
        %v2417 = vpop.f32.mrf.mxu0
        %v2418 = vpop.f32.mrf.mxu0
        %v2419 = vpop.f32.mrf.mxu0
        %2420 = vdwg.mxu0
        %v2422 = vsel %vm2098, %v1337, 0
        %v2425 = vsel %vm2098, %v1705, 0
        %2427 = vmatprep.subr.bf16.mxu0 0
        %2428 = vmatpush1.bf16.xpose.msra.mxu0 0
        %2429 = vmatprep.subr.bf16.mxu0 0
        %2430 = vmatpush1.bf16.xpose.msra.mxu0 0
        %2431 = vmatprep.subr.bf16.mxu0 0
        %2432 = vmatpush1.bf16.xpose.msra.mxu0 0
        %2433 = vmatprep.subr.bf16.mxu0 0
        %2434 = vmatpush1.bf16.xpose.msra.mxu0 0
        %2435 = vmatprep.subr.bf16.mxu0 0
        %2436 = vmatpush1.bf16.xpose.msra.mxu0 0
        %2437 = vmatprep.subr.bf16.mxu0 0
        %2438 = vmatpush1.bf16.xpose.msra.mxu0 0
        %2439 = vmatprep.subr.bf16.mxu0 0
        %2440 = vmatpush1.bf16.xpose.msra.mxu0 0
        %2441 = vmatprep.subr.bf16.mxu0 0
        %2442 = vmatpush1.bf16.xpose.msra.mxu0 %v2425
        %2443 = vmatprep.subr.bf16.mxu0 0
        %2444 = vmatpush2.bf16.xpose.msra.mxu0 0
        %2445 = vmatprep.subr.bf16.mxu0 0
        %2446 = vmatpush2.bf16.xpose.msra.mxu0 0
        %2447 = vmatprep.subr.bf16.mxu0 0
        %2448 = vmatpush2.bf16.xpose.msra.mxu0 0
        %2449 = vmatprep.subr.bf16.mxu0 0
        %2450 = vmatpush2.bf16.xpose.msra.mxu0 0
        %2451 = vmatprep.subr.bf16.mxu0 0
        %2452 = vmatpush2.bf16.xpose.msra.mxu0 0
        %2453 = vmatprep.subr.bf16.mxu0 0
        %2454 = vmatpush2.bf16.xpose.msra.mxu0 0
        %2455 = vmatprep.subr.bf16.mxu0 0
        %2456 = vmatpush2.bf16.xpose.msra.mxu0 0
        %2457 = vmatprep.subr.bf16.mxu0 0
        %2458 = vmatpush2.bf16.xpose.msra.mxu0 0
        %2459 = vmatprep.mubr.bf16.mxu0 0
        %2460 = vmatmul.mubr.bf16.gmra.mxu0 %v2422
        %v2461 = vpop.f32.mrf.mxu0
        %v2462 = vadd.f32 0.0, %v2461
        %v2463 = vpop.f32.mrf.mxu0
        %v2464 = vpop.f32.mrf.mxu0
        %v2465 = vpop.f32.mrf.mxu0
        %2466 = vdwg.mxu0
        %v2468 = vsel %vm2098, %v1340, 0
        %v2471 = vsel %vm2098, %v1708, 0
        %2473 = vmatprep.subr.bf16.mxu0 0
        %2474 = vmatpush1.bf16.xpose.msra.mxu0 0
        %2475 = vmatprep.subr.bf16.mxu0 0
        %2476 = vmatpush1.bf16.xpose.msra.mxu0 0
        %2477 = vmatprep.subr.bf16.mxu0 0
        %2478 = vmatpush1.bf16.xpose.msra.mxu0 0
        %2479 = vmatprep.subr.bf16.mxu0 0
        %2480 = vmatpush1.bf16.xpose.msra.mxu0 0
        %2481 = vmatprep.subr.bf16.mxu0 0
        %2482 = vmatpush1.bf16.xpose.msra.mxu0 0
        %2483 = vmatprep.subr.bf16.mxu0 0
        %2484 = vmatpush1.bf16.xpose.msra.mxu0 0
        %2485 = vmatprep.subr.bf16.mxu0 0
        %2486 = vmatpush1.bf16.xpose.msra.mxu0 0
        %2487 = vmatprep.subr.bf16.mxu0 0
        %2488 = vmatpush1.bf16.xpose.msra.mxu0 %v2471
        %2489 = vmatprep.subr.bf16.mxu0 0
        %2490 = vmatpush2.bf16.xpose.msra.mxu0 0
        %2491 = vmatprep.subr.bf16.mxu0 0
        %2492 = vmatpush2.bf16.xpose.msra.mxu0 0
        %2493 = vmatprep.subr.bf16.mxu0 0
        %2494 = vmatpush2.bf16.xpose.msra.mxu0 0
        %2495 = vmatprep.subr.bf16.mxu0 0
        %2496 = vmatpush2.bf16.xpose.msra.mxu0 0
        %2497 = vmatprep.subr.bf16.mxu0 0
        %2498 = vmatpush2.bf16.xpose.msra.mxu0 0
        %2499 = vmatprep.subr.bf16.mxu0 0
        %2500 = vmatpush2.bf16.xpose.msra.mxu0 0
        %2501 = vmatprep.subr.bf16.mxu0 0
        %2502 = vmatpush2.bf16.xpose.msra.mxu0 0
        %2503 = vmatprep.subr.bf16.mxu0 0
        %2504 = vmatpush2.bf16.xpose.msra.mxu0 0
        %2505 = vmatprep.mubr.bf16.mxu0 0
        %2506 = vmatmul.mubr.bf16.gmra.mxu0 %v2468
        %v2507 = vpop.f32.mrf.mxu0
        %v2508 = vadd.f32 0.0, %v2507
        %v2509 = vpop.f32.mrf.mxu0
        %v2510 = vpop.f32.mrf.mxu0
        %v2511 = vpop.f32.mrf.mxu0
        %2512 = vdwg.mxu0
        %v2514 = vsel %vm2098, %v1343, 0
        %v2517 = vsel %vm2098, %v1711, 0
        %2519 = vmatprep.subr.bf16.mxu0 0
        %2520 = vmatpush1.bf16.xpose.msra.mxu0 0
        %2521 = vmatprep.subr.bf16.mxu0 0
        %2522 = vmatpush1.bf16.xpose.msra.mxu0 0
        %2523 = vmatprep.subr.bf16.mxu0 0
        %2524 = vmatpush1.bf16.xpose.msra.mxu0 0
        %2525 = vmatprep.subr.bf16.mxu0 0
        %2526 = vmatpush1.bf16.xpose.msra.mxu0 0
        %2527 = vmatprep.subr.bf16.mxu0 0
        %2528 = vmatpush1.bf16.xpose.msra.mxu0 0
        %2529 = vmatprep.subr.bf16.mxu0 0
        %2530 = vmatpush1.bf16.xpose.msra.mxu0 0
        %2531 = vmatprep.subr.bf16.mxu0 0
        %2532 = vmatpush1.bf16.xpose.msra.mxu0 0
        %2533 = vmatprep.subr.bf16.mxu0 0
        %2534 = vmatpush1.bf16.xpose.msra.mxu0 %v2517
        %2535 = vmatprep.subr.bf16.mxu0 0
        %2536 = vmatpush2.bf16.xpose.msra.mxu0 0
        %2537 = vmatprep.subr.bf16.mxu0 0
        %2538 = vmatpush2.bf16.xpose.msra.mxu0 0
        %2539 = vmatprep.subr.bf16.mxu0 0
        %2540 = vmatpush2.bf16.xpose.msra.mxu0 0
        %2541 = vmatprep.subr.bf16.mxu0 0
        %2542 = vmatpush2.bf16.xpose.msra.mxu0 0
        %2543 = vmatprep.subr.bf16.mxu0 0
        %2544 = vmatpush2.bf16.xpose.msra.mxu0 0
        %2545 = vmatprep.subr.bf16.mxu0 0
        %2546 = vmatpush2.bf16.xpose.msra.mxu0 0
        %2547 = vmatprep.subr.bf16.mxu0 0
        %2548 = vmatpush2.bf16.xpose.msra.mxu0 0
        %2549 = vmatprep.subr.bf16.mxu0 0
        %2550 = vmatpush2.bf16.xpose.msra.mxu0 0
        %2551 = vmatprep.mubr.bf16.mxu0 0
        %2552 = vmatmul.mubr.bf16.gmra.mxu0 %v2514
        %v2553 = vpop.f32.mrf.mxu0
        %v2554 = vadd.f32 0.0, %v2553
        %v2555 = vpop.f32.mrf.mxu0
        %v2556 = vpop.f32.mrf.mxu0
        %v2557 = vpop.f32.mrf.mxu0
        %2558 = vdwg.mxu0
        %v2560 = vsel %vm2098, %v1346, 0
        %v2563 = vsel %vm2098, %v1714, 0
        %2565 = vmatprep.subr.bf16.mxu0 0
        %2566 = vmatpush1.bf16.xpose.msra.mxu0 0
        %2567 = vmatprep.subr.bf16.mxu0 0
        %2568 = vmatpush1.bf16.xpose.msra.mxu0 0
        %2569 = vmatprep.subr.bf16.mxu0 0
        %2570 = vmatpush1.bf16.xpose.msra.mxu0 0
        %2571 = vmatprep.subr.bf16.mxu0 0
        %2572 = vmatpush1.bf16.xpose.msra.mxu0 0
        %2573 = vmatprep.subr.bf16.mxu0 0
        %2574 = vmatpush1.bf16.xpose.msra.mxu0 0
        %2575 = vmatprep.subr.bf16.mxu0 0
        %2576 = vmatpush1.bf16.xpose.msra.mxu0 0
        %2577 = vmatprep.subr.bf16.mxu0 0
        %2578 = vmatpush1.bf16.xpose.msra.mxu0 0
        %2579 = vmatprep.subr.bf16.mxu0 0
        %2580 = vmatpush1.bf16.xpose.msra.mxu0 %v2563
        %2581 = vmatprep.subr.bf16.mxu0 0
        %2582 = vmatpush2.bf16.xpose.msra.mxu0 0
        %2583 = vmatprep.subr.bf16.mxu0 0
        %2584 = vmatpush2.bf16.xpose.msra.mxu0 0
        %2585 = vmatprep.subr.bf16.mxu0 0
        %2586 = vmatpush2.bf16.xpose.msra.mxu0 0
        %2587 = vmatprep.subr.bf16.mxu0 0
        %2588 = vmatpush2.bf16.xpose.msra.mxu0 0
        %2589 = vmatprep.subr.bf16.mxu0 0
        %2590 = vmatpush2.bf16.xpose.msra.mxu0 0
        %2591 = vmatprep.subr.bf16.mxu0 0
        %2592 = vmatpush2.bf16.xpose.msra.mxu0 0
        %2593 = vmatprep.subr.bf16.mxu0 0
        %2594 = vmatpush2.bf16.xpose.msra.mxu0 0
        %2595 = vmatprep.subr.bf16.mxu0 0
        %2596 = vmatpush2.bf16.xpose.msra.mxu0 0
        %2597 = vmatprep.mubr.bf16.mxu0 0
        %2598 = vmatmul.mubr.bf16.gmra.mxu0 %v2560
        %v2599 = vpop.f32.mrf.mxu0
        %v2600 = vadd.f32 0.0, %v2599
        %v2601 = vpop.f32.mrf.mxu0
        %v2602 = vpop.f32.mrf.mxu0
        %v2603 = vpop.f32.mrf.mxu0
        %2604 = vdwg.mxu0
        %v2606 = vsel %vm2098, %v1349, 0
        %v2609 = vsel %vm2098, %v1717, 0
        %2611 = vmatprep.subr.bf16.mxu0 0
        %2612 = vmatpush1.bf16.xpose.msra.mxu0 0
        %2613 = vmatprep.subr.bf16.mxu0 0
        %2614 = vmatpush1.bf16.xpose.msra.mxu0 0
        %2615 = vmatprep.subr.bf16.mxu0 0
        %2616 = vmatpush1.bf16.xpose.msra.mxu0 0
        %2617 = vmatprep.subr.bf16.mxu0 0
        %2618 = vmatpush1.bf16.xpose.msra.mxu0 0
        %2619 = vmatprep.subr.bf16.mxu0 0
        %2620 = vmatpush1.bf16.xpose.msra.mxu0 0
        %2621 = vmatprep.subr.bf16.mxu0 0
        %2622 = vmatpush1.bf16.xpose.msra.mxu0 0
        %2623 = vmatprep.subr.bf16.mxu0 0
        %2624 = vmatpush1.bf16.xpose.msra.mxu0 0
        %2625 = vmatprep.subr.bf16.mxu0 0
        %2626 = vmatpush1.bf16.xpose.msra.mxu0 %v2609
        %2627 = vmatprep.subr.bf16.mxu0 0
        %2628 = vmatpush2.bf16.xpose.msra.mxu0 0
        %2629 = vmatprep.subr.bf16.mxu0 0
        %2630 = vmatpush2.bf16.xpose.msra.mxu0 0
        %2631 = vmatprep.subr.bf16.mxu0 0
        %2632 = vmatpush2.bf16.xpose.msra.mxu0 0
        %2633 = vmatprep.subr.bf16.mxu0 0
        %2634 = vmatpush2.bf16.xpose.msra.mxu0 0
        %2635 = vmatprep.subr.bf16.mxu0 0
        %2636 = vmatpush2.bf16.xpose.msra.mxu0 0
        %2637 = vmatprep.subr.bf16.mxu0 0
        %2638 = vmatpush2.bf16.xpose.msra.mxu0 0
        %2639 = vmatprep.subr.bf16.mxu0 0
        %2640 = vmatpush2.bf16.xpose.msra.mxu0 0
        %2641 = vmatprep.subr.bf16.mxu0 0
        %2642 = vmatpush2.bf16.xpose.msra.mxu0 0
        %2643 = vmatprep.mubr.bf16.mxu0 0
        %2644 = vmatmul.mubr.bf16.gmra.mxu0 %v2606
        %v2645 = vpop.f32.mrf.mxu0
        %v2646 = vadd.f32 0.0, %v2645
        %v2647 = vpop.f32.mrf.mxu0
        %v2648 = vpop.f32.mrf.mxu0
        %v2649 = vpop.f32.mrf.mxu0
        %2650 = vdwg.mxu0
        %v2652 = vsel %vm2098, %v1352, 0
        %v2655 = vsel %vm2098, %v1720, 0
        %2657 = vmatprep.subr.bf16.mxu0 0
        %2658 = vmatpush1.bf16.xpose.msra.mxu0 0
        %2659 = vmatprep.subr.bf16.mxu0 0
        %2660 = vmatpush1.bf16.xpose.msra.mxu0 0
        %2661 = vmatprep.subr.bf16.mxu0 0
        %2662 = vmatpush1.bf16.xpose.msra.mxu0 0
        %2663 = vmatprep.subr.bf16.mxu0 0
        %2664 = vmatpush1.bf16.xpose.msra.mxu0 0
        %2665 = vmatprep.subr.bf16.mxu0 0
        %2666 = vmatpush1.bf16.xpose.msra.mxu0 0
        %2667 = vmatprep.subr.bf16.mxu0 0
        %2668 = vmatpush1.bf16.xpose.msra.mxu0 0
        %2669 = vmatprep.subr.bf16.mxu0 0
        %2670 = vmatpush1.bf16.xpose.msra.mxu0 0
        %2671 = vmatprep.subr.bf16.mxu0 0
        %2672 = vmatpush1.bf16.xpose.msra.mxu0 %v2655
        %2673 = vmatprep.subr.bf16.mxu0 0
        %2674 = vmatpush2.bf16.xpose.msra.mxu0 0
        %2675 = vmatprep.subr.bf16.mxu0 0
        %2676 = vmatpush2.bf16.xpose.msra.mxu0 0
        %2677 = vmatprep.subr.bf16.mxu0 0
        %2678 = vmatpush2.bf16.xpose.msra.mxu0 0
        %2679 = vmatprep.subr.bf16.mxu0 0
        %2680 = vmatpush2.bf16.xpose.msra.mxu0 0
        %2681 = vmatprep.subr.bf16.mxu0 0
        %2682 = vmatpush2.bf16.xpose.msra.mxu0 0
        %2683 = vmatprep.subr.bf16.mxu0 0
        %2684 = vmatpush2.bf16.xpose.msra.mxu0 0
        %2685 = vmatprep.subr.bf16.mxu0 0
        %2686 = vmatpush2.bf16.xpose.msra.mxu0 0
        %2687 = vmatprep.subr.bf16.mxu0 0
        %2688 = vmatpush2.bf16.xpose.msra.mxu0 0
        %2689 = vmatprep.mubr.bf16.mxu0 0
        %2690 = vmatmul.mubr.bf16.gmra.mxu0 %v2652
        %v2691 = vpop.f32.mrf.mxu0
        %v2692 = vadd.f32 0.0, %v2691
        %v2693 = vpop.f32.mrf.mxu0
        %v2694 = vpop.f32.mrf.mxu0
        %v2695 = vpop.f32.mrf.mxu0
        %2696 = vdwg.mxu0
        %v2698 = vsel %vm2098, %v1355, 0
        %v2701 = vsel %vm2098, %v1723, 0
        %2703 = vmatprep.subr.bf16.mxu0 0
        %2704 = vmatpush1.bf16.xpose.msra.mxu0 0
        %2705 = vmatprep.subr.bf16.mxu0 0
        %2706 = vmatpush1.bf16.xpose.msra.mxu0 0
        %2707 = vmatprep.subr.bf16.mxu0 0
        %2708 = vmatpush1.bf16.xpose.msra.mxu0 0
        %2709 = vmatprep.subr.bf16.mxu0 0
        %2710 = vmatpush1.bf16.xpose.msra.mxu0 0
        %2711 = vmatprep.subr.bf16.mxu0 0
        %2712 = vmatpush1.bf16.xpose.msra.mxu0 0
        %2713 = vmatprep.subr.bf16.mxu0 0
        %2714 = vmatpush1.bf16.xpose.msra.mxu0 0
        %2715 = vmatprep.subr.bf16.mxu0 0
        %2716 = vmatpush1.bf16.xpose.msra.mxu0 0
        %2717 = vmatprep.subr.bf16.mxu0 0
        %2718 = vmatpush1.bf16.xpose.msra.mxu0 %v2701
        %2719 = vmatprep.subr.bf16.mxu0 0
        %2720 = vmatpush2.bf16.xpose.msra.mxu0 0
        %2721 = vmatprep.subr.bf16.mxu0 0
        %2722 = vmatpush2.bf16.xpose.msra.mxu0 0
        %2723 = vmatprep.subr.bf16.mxu0 0
        %2724 = vmatpush2.bf16.xpose.msra.mxu0 0
        %2725 = vmatprep.subr.bf16.mxu0 0
        %2726 = vmatpush2.bf16.xpose.msra.mxu0 0
        %2727 = vmatprep.subr.bf16.mxu0 0
        %2728 = vmatpush2.bf16.xpose.msra.mxu0 0
        %2729 = vmatprep.subr.bf16.mxu0 0
        %2730 = vmatpush2.bf16.xpose.msra.mxu0 0
        %2731 = vmatprep.subr.bf16.mxu0 0
        %2732 = vmatpush2.bf16.xpose.msra.mxu0 0
        %2733 = vmatprep.subr.bf16.mxu0 0
        %2734 = vmatpush2.bf16.xpose.msra.mxu0 0
        %2735 = vmatprep.mubr.bf16.mxu0 0
        %2736 = vmatmul.mubr.bf16.gmra.mxu0 %v2698
        %v2737 = vpop.f32.mrf.mxu0
        %v2738 = vadd.f32 0.0, %v2737
        %v2739 = vpop.f32.mrf.mxu0
        %v2740 = vpop.f32.mrf.mxu0
        %v2741 = vpop.f32.mrf.mxu0
        %2742 = vdwg.mxu0
        %v2744 = vsel %vm2098, %v1358, 0
        %v2747 = vsel %vm2098, %v1726, 0
        %2749 = vmatprep.subr.bf16.mxu0 0
        %2750 = vmatpush1.bf16.xpose.msra.mxu0 0
        %2751 = vmatprep.subr.bf16.mxu0 0
        %2752 = vmatpush1.bf16.xpose.msra.mxu0 0
        %2753 = vmatprep.subr.bf16.mxu0 0
        %2754 = vmatpush1.bf16.xpose.msra.mxu0 0
        %2755 = vmatprep.subr.bf16.mxu0 0
        %2756 = vmatpush1.bf16.xpose.msra.mxu0 0
        %2757 = vmatprep.subr.bf16.mxu0 0
        %2758 = vmatpush1.bf16.xpose.msra.mxu0 0
        %2759 = vmatprep.subr.bf16.mxu0 0
        %2760 = vmatpush1.bf16.xpose.msra.mxu0 0
        %2761 = vmatprep.subr.bf16.mxu0 0
        %2762 = vmatpush1.bf16.xpose.msra.mxu0 0
        %2763 = vmatprep.subr.bf16.mxu0 0
        %2764 = vmatpush1.bf16.xpose.msra.mxu0 %v2747
        %2765 = vmatprep.subr.bf16.mxu0 0
        %2766 = vmatpush2.bf16.xpose.msra.mxu0 0
        %2767 = vmatprep.subr.bf16.mxu0 0
        %2768 = vmatpush2.bf16.xpose.msra.mxu0 0
        %2769 = vmatprep.subr.bf16.mxu0 0
        %2770 = vmatpush2.bf16.xpose.msra.mxu0 0
        %2771 = vmatprep.subr.bf16.mxu0 0
        %2772 = vmatpush2.bf16.xpose.msra.mxu0 0
        %2773 = vmatprep.subr.bf16.mxu0 0
        %2774 = vmatpush2.bf16.xpose.msra.mxu0 0
        %2775 = vmatprep.subr.bf16.mxu0 0
        %2776 = vmatpush2.bf16.xpose.msra.mxu0 0
        %2777 = vmatprep.subr.bf16.mxu0 0
        %2778 = vmatpush2.bf16.xpose.msra.mxu0 0
        %2779 = vmatprep.subr.bf16.mxu0 0
        %2780 = vmatpush2.bf16.xpose.msra.mxu0 0
        %2781 = vmatprep.mubr.bf16.mxu0 0
        %2782 = vmatmul.mubr.bf16.gmra.mxu0 %v2744
        %v2783 = vpop.f32.mrf.mxu0
        %v2784 = vadd.f32 0.0, %v2783
        %v2785 = vpop.f32.mrf.mxu0
        %v2786 = vpop.f32.mrf.mxu0
        %v2787 = vpop.f32.mrf.mxu0
        %2788 = vdwg.mxu0
        %v2790 = vsel %vm2098, %v1361, 0
        %v2793 = vsel %vm2098, %v1729, 0
        %2795 = vmatprep.subr.bf16.mxu0 0
        %2796 = vmatpush1.bf16.xpose.msra.mxu0 0
        %2797 = vmatprep.subr.bf16.mxu0 0
        %2798 = vmatpush1.bf16.xpose.msra.mxu0 0
        %2799 = vmatprep.subr.bf16.mxu0 0
        %2800 = vmatpush1.bf16.xpose.msra.mxu0 0
        %2801 = vmatprep.subr.bf16.mxu0 0
        %2802 = vmatpush1.bf16.xpose.msra.mxu0 0
        %2803 = vmatprep.subr.bf16.mxu0 0
        %2804 = vmatpush1.bf16.xpose.msra.mxu0 0
        %2805 = vmatprep.subr.bf16.mxu0 0
        %2806 = vmatpush1.bf16.xpose.msra.mxu0 0
        %2807 = vmatprep.subr.bf16.mxu0 0
        %2808 = vmatpush1.bf16.xpose.msra.mxu0 0
        %2809 = vmatprep.subr.bf16.mxu0 0
        %2810 = vmatpush1.bf16.xpose.msra.mxu0 %v2793
        %2811 = vmatprep.subr.bf16.mxu0 0
        %2812 = vmatpush2.bf16.xpose.msra.mxu0 0
        %2813 = vmatprep.subr.bf16.mxu0 0
        %2814 = vmatpush2.bf16.xpose.msra.mxu0 0
        %2815 = vmatprep.subr.bf16.mxu0 0
        %2816 = vmatpush2.bf16.xpose.msra.mxu0 0
        %2817 = vmatprep.subr.bf16.mxu0 0
        %2818 = vmatpush2.bf16.xpose.msra.mxu0 0
        %2819 = vmatprep.subr.bf16.mxu0 0
        %2820 = vmatpush2.bf16.xpose.msra.mxu0 0
        %2821 = vmatprep.subr.bf16.mxu0 0
        %2822 = vmatpush2.bf16.xpose.msra.mxu0 0
        %2823 = vmatprep.subr.bf16.mxu0 0
        %2824 = vmatpush2.bf16.xpose.msra.mxu0 0
        %2825 = vmatprep.subr.bf16.mxu0 0
        %2826 = vmatpush2.bf16.xpose.msra.mxu0 0
        %2827 = vmatprep.mubr.bf16.mxu0 0
        %2828 = vmatmul.mubr.bf16.gmra.mxu0 %v2790
        %v2829 = vpop.f32.mrf.mxu0
        %v2830 = vadd.f32 0.0, %v2829
        %v2831 = vpop.f32.mrf.mxu0
        %v2832 = vpop.f32.mrf.mxu0
        %v2833 = vpop.f32.mrf.mxu0
        %2834 = vdwg.mxu0
        %vm2835 = vcmask 64512
        %v2836 = vsel %vm2835, %v2140, -inf
        %2837 = vmax.xlane.f32.xlu0 %v2836
        %v2838 = vpop.xlane.xlu0 %2837
        %v2839 = vsel %vm2835, %v2186, -inf
        %2840 = vmax.xlane.f32.xlu0 %v2839
        %v2841 = vpop.xlane.xlu0 %2840
        %v2842 = vsel %vm2835, %v2232, -inf
        %2843 = vmax.xlane.f32.xlu0 %v2842
        %v2844 = vpop.xlane.xlu0 %2843
        %v2845 = vsel %vm2835, %v2278, -inf
        %2846 = vmax.xlane.f32.xlu0 %v2845
        %v2847 = vpop.xlane.xlu0 %2846
        %v2848 = vsel %vm2835, %v2324, -inf
        %2849 = vmax.xlane.f32.xlu0 %v2848
        %v2850 = vpop.xlane.xlu0 %2849
        %v2851 = vsel %vm2835, %v2370, -inf
        %2852 = vmax.xlane.f32.xlu0 %v2851
        %v2853 = vpop.xlane.xlu0 %2852
        %v2854 = vsel %vm2835, %v2416, -inf
        %2855 = vmax.xlane.f32.xlu0 %v2854
        %v2856 = vpop.xlane.xlu0 %2855
        %v2857 = vsel %vm2835, %v2462, -inf
        %2858 = vmax.xlane.f32.xlu0 %v2857
        %v2859 = vpop.xlane.xlu0 %2858
        %v2860 = vsel %vm2835, %v2508, -inf
        %2861 = vmax.xlane.f32.xlu0 %v2860
        %v2862 = vpop.xlane.xlu0 %2861
        %v2863 = vsel %vm2835, %v2554, -inf
        %2864 = vmax.xlane.f32.xlu0 %v2863
        %v2865 = vpop.xlane.xlu0 %2864
        %v2866 = vsel %vm2835, %v2600, -inf
        %2867 = vmax.xlane.f32.xlu0 %v2866
        %v2868 = vpop.xlane.xlu0 %2867
        %v2869 = vsel %vm2835, %v2646, -inf
        %2870 = vmax.xlane.f32.xlu0 %v2869
        %v2871 = vpop.xlane.xlu0 %2870
        %v2872 = vsel %vm2835, %v2692, -inf
        %2873 = vmax.xlane.f32.xlu0 %v2872
        %v2874 = vpop.xlane.xlu0 %2873
        %v2875 = vsel %vm2835, %v2738, -inf
        %2876 = vmax.xlane.f32.xlu0 %v2875
        %v2877 = vpop.xlane.xlu0 %2876
        %v2878 = vsel %vm2835, %v2784, -inf
        %2879 = vmax.xlane.f32.xlu0 %v2878
        %v2880 = vpop.xlane.xlu0 %2879
        %v2881 = vsel %vm2835, %v2830, -inf
        %2882 = vmax.xlane.f32.xlu0 %v2881
        %v2883 = vpop.xlane.xlu0 %2882
        %v2884 = vsub.f32 %v2140, %v2838
        %v2885 = vsub.f32 %v2186, %v2841
        %v2886 = vsub.f32 %v2232, %v2844
        %v2887 = vsub.f32 %v2278, %v2847
        %v2888 = vsub.f32 %v2324, %v2850
        %v2889 = vsub.f32 %v2370, %v2853
        %v2890 = vsub.f32 %v2416, %v2856
        %v2891 = vsub.f32 %v2462, %v2859
        %v2892 = vsub.f32 %v2508, %v2862
        %v2893 = vsub.f32 %v2554, %v2865
        %v2894 = vsub.f32 %v2600, %v2868
        %v2895 = vsub.f32 %v2646, %v2871
        %v2896 = vsub.f32 %v2692, %v2874
        %v2897 = vsub.f32 %v2738, %v2877
        %v2898 = vsub.f32 %v2784, %v2880
        %v2899 = vsub.f32 %v2830, %v2883
        %v2900 = vmul.f32 %v2884, 1.442695
        %v2901 = vpow.pop %v2900
        %v2902 = vmul.f32 %v2885, 1.442695
        %v2903 = vpow.pop %v2902
        %v2904 = vmul.f32 %v2886, 1.442695
        %v2905 = vpow.pop %v2904
        %v2906 = vmul.f32 %v2887, 1.442695
        %v2907 = vpow.pop %v2906
        %v2908 = vmul.f32 %v2888, 1.442695
        %v2909 = vpow.pop %v2908
        %v2910 = vmul.f32 %v2889, 1.442695
        %v2911 = vpow.pop %v2910
        %v2912 = vmul.f32 %v2890, 1.442695
        %v2913 = vpow.pop %v2912
        %v2914 = vmul.f32 %v2891, 1.442695
        %v2915 = vpow.pop %v2914
        %v2916 = vmul.f32 %v2892, 1.442695
        %v2917 = vpow.pop %v2916
        %v2918 = vmul.f32 %v2893, 1.442695
        %v2919 = vpow.pop %v2918
        %v2920 = vmul.f32 %v2894, 1.442695
        %v2921 = vpow.pop %v2920
        %v2922 = vmul.f32 %v2895, 1.442695
        %v2923 = vpow.pop %v2922
        %v2924 = vmul.f32 %v2896, 1.442695
        %v2925 = vpow.pop %v2924
        %v2926 = vmul.f32 %v2897, 1.442695
        %v2927 = vpow.pop %v2926
        %v2928 = vmul.f32 %v2898, 1.442695
        %v2929 = vpow.pop %v2928
        %v2930 = vmul.f32 %v2899, 1.442695
        %v2931 = vpow.pop %v2930
        %v2932 = vsel %vm2835, %v2901, 0.0
        %2933 = vadd.xlane.f32.xlu0 %v2932
        %v2934 = vpop.xlane.xlu0 %2933
        %v2935 = vsel %vm2835, %v2903, 0.0
        %2936 = vadd.xlane.f32.xlu0 %v2935
        %v2937 = vpop.xlane.xlu0 %2936
        %v2938 = vsel %vm2835, %v2905, 0.0
        %2939 = vadd.xlane.f32.xlu0 %v2938
        %v2940 = vpop.xlane.xlu0 %2939
        %v2941 = vsel %vm2835, %v2907, 0.0
        %2942 = vadd.xlane.f32.xlu0 %v2941
        %v2943 = vpop.xlane.xlu0 %2942
        %v2944 = vsel %vm2835, %v2909, 0.0
        %2945 = vadd.xlane.f32.xlu0 %v2944
        %v2946 = vpop.xlane.xlu0 %2945
        %v2947 = vsel %vm2835, %v2911, 0.0
        %2948 = vadd.xlane.f32.xlu0 %v2947
        %v2949 = vpop.xlane.xlu0 %2948
        %v2950 = vsel %vm2835, %v2913, 0.0
        %2951 = vadd.xlane.f32.xlu0 %v2950
        %v2952 = vpop.xlane.xlu0 %2951
        %v2953 = vsel %vm2835, %v2915, 0.0
        %2954 = vadd.xlane.f32.xlu0 %v2953
        %v2955 = vpop.xlane.xlu0 %2954
        %v2956 = vsel %vm2835, %v2917, 0.0
        %2957 = vadd.xlane.f32.xlu0 %v2956
        %v2958 = vpop.xlane.xlu0 %2957
        %v2959 = vsel %vm2835, %v2919, 0.0
        %2960 = vadd.xlane.f32.xlu0 %v2959
        %v2961 = vpop.xlane.xlu0 %2960
        %v2962 = vsel %vm2835, %v2921, 0.0
        %2963 = vadd.xlane.f32.xlu0 %v2962
        %v2964 = vpop.xlane.xlu0 %2963
        %v2965 = vsel %vm2835, %v2923, 0.0
        %2966 = vadd.xlane.f32.xlu0 %v2965
        %v2967 = vpop.xlane.xlu0 %2966
        %v2968 = vsel %vm2835, %v2925, 0.0
        %2969 = vadd.xlane.f32.xlu0 %v2968
        %v2970 = vpop.xlane.xlu0 %2969
        %v2971 = vsel %vm2835, %v2927, 0.0
        %2972 = vadd.xlane.f32.xlu0 %v2971
        %v2973 = vpop.xlane.xlu0 %2972
        %v2974 = vsel %vm2835, %v2929, 0.0
        %2975 = vadd.xlane.f32.xlu0 %v2974
        %v2976 = vpop.xlane.xlu0 %2975
        %v2977 = vsel %vm2835, %v2931, 0.0
        %2978 = vadd.xlane.f32.xlu0 %v2977
        %v2979 = vpop.xlane.xlu0 %2978
        %v2980 = vrcp.pop %v2934
        %v2981 = vrcp.pop %v2937
        %v2982 = vrcp.pop %v2940
        %v2983 = vrcp.pop %v2943
        %v2984 = vrcp.pop %v2946
        %v2985 = vrcp.pop %v2949
        %v2986 = vrcp.pop %v2952
        %v2987 = vrcp.pop %v2955
        %v2988 = vrcp.pop %v2958
        %v2989 = vrcp.pop %v2961
        %v2990 = vrcp.pop %v2964
        %v2991 = vrcp.pop %v2967
        %v2992 = vrcp.pop %v2970
        %v2993 = vrcp.pop %v2973
        %v2994 = vrcp.pop %v2976
        %v2995 = vrcp.pop %v2979
        %v2996 = vmul.f32 %v2901, %v2980
        %v2997 = vmul.f32 %v2903, %v2981
        %v2998 = vmul.f32 %v2905, %v2982
        %v2999 = vmul.f32 %v2907, %v2983
        %v3000 = vmul.f32 %v2909, %v2984
        %v3001 = vmul.f32 %v2911, %v2985
        %v3002 = vmul.f32 %v2913, %v2986
        %v3003 = vmul.f32 %v2915, %v2987
        %v3004 = vmul.f32 %v2917, %v2988
        %v3005 = vmul.f32 %v2919, %v2989
        %v3006 = vmul.f32 %v2921, %v2990
        %v3007 = vmul.f32 %v2923, %v2991
        %v3008 = vmul.f32 %v2925, %v2992
        %v3009 = vmul.f32 %v2927, %v2993
        %v3010 = vmul.f32 %v2929, %v2994
        %v3011 = vmul.f32 %v2931, %v2995
        %v3012 = vpack.c.bf16 %v2996, %v2996
        %v3013 = vpack.c.bf16 %v2997, %v2997
        %v3014 = vpack.c.bf16 %v2998, %v2998
        %v3015 = vpack.c.bf16 %v2999, %v2999
        %v3016 = vpack.c.bf16 %v3000, %v3000
        %v3017 = vpack.c.bf16 %v3001, %v3001
        %v3018 = vpack.c.bf16 %v3002, %v3002
        %v3019 = vpack.c.bf16 %v3003, %v3003
        %v3020 = vpack.c.bf16 %v3004, %v3004
        %v3021 = vpack.c.bf16 %v3005, %v3005
        %v3022 = vpack.c.bf16 %v3006, %v3006
        %v3023 = vpack.c.bf16 %v3007, %v3007
        %v3024 = vpack.c.bf16 %v3008, %v3008
        %v3025 = vpack.c.bf16 %v3009, %v3009
        %v3026 = vpack.c.bf16 %v3010, %v3010
        %v3027 = vpack.c.bf16 %v3011, %v3011
        %v3029 = vsel %vm2835, %v3012, 0
        %vm3031 = vcmask 1043456
        %v3033 = vsel %vm3031, %v2052, 0
        %3035 = vmatprep.subr.bf16.mxu0 0
        %3036 = vmatpush1.bf16.msra.mxu0 0
        %3037 = vmatprep.subr.bf16.mxu0 0
        %3038 = vmatpush1.bf16.msra.mxu0 0
        %3039 = vmatprep.subr.bf16.mxu0 0
        %3040 = vmatpush1.bf16.msra.mxu0 0
        %3041 = vmatprep.subr.bf16.mxu0 0
        %3042 = vmatpush1.bf16.msra.mxu0 0
        %3043 = vmatprep.subr.bf16.mxu0 0
        %3044 = vmatpush1.bf16.msra.mxu0 0
        %3045 = vmatprep.subr.bf16.mxu0 0
        %3046 = vmatpush1.bf16.msra.mxu0 0
        %3047 = vmatprep.subr.bf16.mxu0 0
        %3048 = vmatpush1.bf16.msra.mxu0 0
        %3049 = vmatprep.subr.bf16.mxu0 0
        %3050 = vmatpush1.bf16.msra.mxu0 %v3033
        %3051 = vmatprep.subr.bf16.mxu0 0
        %3052 = vmatpush2.bf16.msra.mxu0 0
        %3053 = vmatprep.subr.bf16.mxu0 0
        %3054 = vmatpush2.bf16.msra.mxu0 0
        %3055 = vmatprep.subr.bf16.mxu0 0
        %3056 = vmatpush2.bf16.msra.mxu0 0
        %3057 = vmatprep.subr.bf16.mxu0 0
        %3058 = vmatpush2.bf16.msra.mxu0 0
        %3059 = vmatprep.subr.bf16.mxu0 0
        %3060 = vmatpush2.bf16.msra.mxu0 0
        %3061 = vmatprep.subr.bf16.mxu0 0
        %3062 = vmatpush2.bf16.msra.mxu0 0
        %3063 = vmatprep.subr.bf16.mxu0 0
        %3064 = vmatpush2.bf16.msra.mxu0 0
        %3065 = vmatprep.subr.bf16.mxu0 0
        %3066 = vmatpush2.bf16.msra.mxu0 0
        %3067 = vmatprep.mubr.bf16.mxu0 0
        %3068 = vmatmul.mubr.bf16.gmra.mxu0 %v3029
        %v3069 = vpop.f32.mrf.mxu0
        %v3070 = vadd.f32 0.0, %v3069
        %v3071 = vpop.f32.mrf.mxu0
        %v3072 = vpop.f32.mrf.mxu0
        %v3073 = vpop.f32.mrf.mxu0
        %3074 = vdwg.mxu0
        %v3076 = vsel %vm2835, %v3013, 0
        %v3079 = vsel %vm3031, %v2055, 0
        %3081 = vmatprep.subr.bf16.mxu0 0
        %3082 = vmatpush1.bf16.msra.mxu0 0
        %3083 = vmatprep.subr.bf16.mxu0 0
        %3084 = vmatpush1.bf16.msra.mxu0 0
        %3085 = vmatprep.subr.bf16.mxu0 0
        %3086 = vmatpush1.bf16.msra.mxu0 0
        %3087 = vmatprep.subr.bf16.mxu0 0
        %3088 = vmatpush1.bf16.msra.mxu0 0
        %3089 = vmatprep.subr.bf16.mxu0 0
        %3090 = vmatpush1.bf16.msra.mxu0 0
        %3091 = vmatprep.subr.bf16.mxu0 0
        %3092 = vmatpush1.bf16.msra.mxu0 0
        %3093 = vmatprep.subr.bf16.mxu0 0
        %3094 = vmatpush1.bf16.msra.mxu0 0
        %3095 = vmatprep.subr.bf16.mxu0 0
        %3096 = vmatpush1.bf16.msra.mxu0 %v3079
        %3097 = vmatprep.subr.bf16.mxu0 0
        %3098 = vmatpush2.bf16.msra.mxu0 0
        %3099 = vmatprep.subr.bf16.mxu0 0
        %3100 = vmatpush2.bf16.msra.mxu0 0
        %3101 = vmatprep.subr.bf16.mxu0 0
        %3102 = vmatpush2.bf16.msra.mxu0 0
        %3103 = vmatprep.subr.bf16.mxu0 0
        %3104 = vmatpush2.bf16.msra.mxu0 0
        %3105 = vmatprep.subr.bf16.mxu0 0
        %3106 = vmatpush2.bf16.msra.mxu0 0
        %3107 = vmatprep.subr.bf16.mxu0 0
        %3108 = vmatpush2.bf16.msra.mxu0 0
        %3109 = vmatprep.subr.bf16.mxu0 0
        %3110 = vmatpush2.bf16.msra.mxu0 0
        %3111 = vmatprep.subr.bf16.mxu0 0
        %3112 = vmatpush2.bf16.msra.mxu0 0
        %3113 = vmatprep.mubr.bf16.mxu0 0
        %3114 = vmatmul.mubr.bf16.gmra.mxu0 %v3076
        %v3115 = vpop.f32.mrf.mxu0
        %v3116 = vadd.f32 0.0, %v3115
        %v3117 = vpop.f32.mrf.mxu0
        %v3118 = vpop.f32.mrf.mxu0
        %v3119 = vpop.f32.mrf.mxu0
        %3120 = vdwg.mxu0
        %v3122 = vsel %vm2835, %v3014, 0
        %v3125 = vsel %vm3031, %v2058, 0
        %3127 = vmatprep.subr.bf16.mxu0 0
        %3128 = vmatpush1.bf16.msra.mxu0 0
        %3129 = vmatprep.subr.bf16.mxu0 0
        %3130 = vmatpush1.bf16.msra.mxu0 0
        %3131 = vmatprep.subr.bf16.mxu0 0
        %3132 = vmatpush1.bf16.msra.mxu0 0
        %3133 = vmatprep.subr.bf16.mxu0 0
        %3134 = vmatpush1.bf16.msra.mxu0 0
        %3135 = vmatprep.subr.bf16.mxu0 0
        %3136 = vmatpush1.bf16.msra.mxu0 0
        %3137 = vmatprep.subr.bf16.mxu0 0
        %3138 = vmatpush1.bf16.msra.mxu0 0
        %3139 = vmatprep.subr.bf16.mxu0 0
        %3140 = vmatpush1.bf16.msra.mxu0 0
        %3141 = vmatprep.subr.bf16.mxu0 0
        %3142 = vmatpush1.bf16.msra.mxu0 %v3125
        %3143 = vmatprep.subr.bf16.mxu0 0
        %3144 = vmatpush2.bf16.msra.mxu0 0
        %3145 = vmatprep.subr.bf16.mxu0 0
        %3146 = vmatpush2.bf16.msra.mxu0 0
        %3147 = vmatprep.subr.bf16.mxu0 0
        %3148 = vmatpush2.bf16.msra.mxu0 0
        %3149 = vmatprep.subr.bf16.mxu0 0
        %3150 = vmatpush2.bf16.msra.mxu0 0
        %3151 = vmatprep.subr.bf16.mxu0 0
        %3152 = vmatpush2.bf16.msra.mxu0 0
        %3153 = vmatprep.subr.bf16.mxu0 0
        %3154 = vmatpush2.bf16.msra.mxu0 0
        %3155 = vmatprep.subr.bf16.mxu0 0
        %3156 = vmatpush2.bf16.msra.mxu0 0
        %3157 = vmatprep.subr.bf16.mxu0 0
        %3158 = vmatpush2.bf16.msra.mxu0 0
        %3159 = vmatprep.mubr.bf16.mxu0 0
        %3160 = vmatmul.mubr.bf16.gmra.mxu0 %v3122
        %v3161 = vpop.f32.mrf.mxu0
        %v3162 = vadd.f32 0.0, %v3161
        %v3163 = vpop.f32.mrf.mxu0
        %v3164 = vpop.f32.mrf.mxu0
        %v3165 = vpop.f32.mrf.mxu0
        %3166 = vdwg.mxu0
        %v3168 = vsel %vm2835, %v3015, 0
        %v3171 = vsel %vm3031, %v2061, 0
        %3173 = vmatprep.subr.bf16.mxu0 0
        %3174 = vmatpush1.bf16.msra.mxu0 0
        %3175 = vmatprep.subr.bf16.mxu0 0
        %3176 = vmatpush1.bf16.msra.mxu0 0
        %3177 = vmatprep.subr.bf16.mxu0 0
        %3178 = vmatpush1.bf16.msra.mxu0 0
        %3179 = vmatprep.subr.bf16.mxu0 0
        %3180 = vmatpush1.bf16.msra.mxu0 0
        %3181 = vmatprep.subr.bf16.mxu0 0
        %3182 = vmatpush1.bf16.msra.mxu0 0
        %3183 = vmatprep.subr.bf16.mxu0 0
        %3184 = vmatpush1.bf16.msra.mxu0 0
        %3185 = vmatprep.subr.bf16.mxu0 0
        %3186 = vmatpush1.bf16.msra.mxu0 0
        %3187 = vmatprep.subr.bf16.mxu0 0
        %3188 = vmatpush1.bf16.msra.mxu0 %v3171
        %3189 = vmatprep.subr.bf16.mxu0 0
        %3190 = vmatpush2.bf16.msra.mxu0 0
        %3191 = vmatprep.subr.bf16.mxu0 0
        %3192 = vmatpush2.bf16.msra.mxu0 0
        %3193 = vmatprep.subr.bf16.mxu0 0
        %3194 = vmatpush2.bf16.msra.mxu0 0
        %3195 = vmatprep.subr.bf16.mxu0 0
        %3196 = vmatpush2.bf16.msra.mxu0 0
        %3197 = vmatprep.subr.bf16.mxu0 0
        %3198 = vmatpush2.bf16.msra.mxu0 0
        %3199 = vmatprep.subr.bf16.mxu0 0
        %3200 = vmatpush2.bf16.msra.mxu0 0
        %3201 = vmatprep.subr.bf16.mxu0 0
        %3202 = vmatpush2.bf16.msra.mxu0 0
        %3203 = vmatprep.subr.bf16.mxu0 0
        %3204 = vmatpush2.bf16.msra.mxu0 0
        %3205 = vmatprep.mubr.bf16.mxu0 0
        %3206 = vmatmul.mubr.bf16.gmra.mxu0 %v3168
        %v3207 = vpop.f32.mrf.mxu0
        %v3208 = vadd.f32 0.0, %v3207
        %v3209 = vpop.f32.mrf.mxu0
        %v3210 = vpop.f32.mrf.mxu0
        %v3211 = vpop.f32.mrf.mxu0
        %3212 = vdwg.mxu0
        %v3214 = vsel %vm2835, %v3016, 0
        %v3217 = vsel %vm3031, %v2064, 0
        %3219 = vmatprep.subr.bf16.mxu0 0
        %3220 = vmatpush1.bf16.msra.mxu0 0
        %3221 = vmatprep.subr.bf16.mxu0 0
        %3222 = vmatpush1.bf16.msra.mxu0 0
        %3223 = vmatprep.subr.bf16.mxu0 0
        %3224 = vmatpush1.bf16.msra.mxu0 0
        %3225 = vmatprep.subr.bf16.mxu0 0
        %3226 = vmatpush1.bf16.msra.mxu0 0
        %3227 = vmatprep.subr.bf16.mxu0 0
        %3228 = vmatpush1.bf16.msra.mxu0 0
        %3229 = vmatprep.subr.bf16.mxu0 0
        %3230 = vmatpush1.bf16.msra.mxu0 0
        %3231 = vmatprep.subr.bf16.mxu0 0
        %3232 = vmatpush1.bf16.msra.mxu0 0
        %3233 = vmatprep.subr.bf16.mxu0 0
        %3234 = vmatpush1.bf16.msra.mxu0 %v3217
        %3235 = vmatprep.subr.bf16.mxu0 0
        %3236 = vmatpush2.bf16.msra.mxu0 0
        %3237 = vmatprep.subr.bf16.mxu0 0
        %3238 = vmatpush2.bf16.msra.mxu0 0
        %3239 = vmatprep.subr.bf16.mxu0 0
        %3240 = vmatpush2.bf16.msra.mxu0 0
        %3241 = vmatprep.subr.bf16.mxu0 0
        %3242 = vmatpush2.bf16.msra.mxu0 0
        %3243 = vmatprep.subr.bf16.mxu0 0
        %3244 = vmatpush2.bf16.msra.mxu0 0
        %3245 = vmatprep.subr.bf16.mxu0 0
        %3246 = vmatpush2.bf16.msra.mxu0 0
        %3247 = vmatprep.subr.bf16.mxu0 0
        %3248 = vmatpush2.bf16.msra.mxu0 0
        %3249 = vmatprep.subr.bf16.mxu0 0
        %3250 = vmatpush2.bf16.msra.mxu0 0
        %3251 = vmatprep.mubr.bf16.mxu0 0
        %3252 = vmatmul.mubr.bf16.gmra.mxu0 %v3214
        %v3253 = vpop.f32.mrf.mxu0
        %v3254 = vadd.f32 0.0, %v3253
        %v3255 = vpop.f32.mrf.mxu0
        %v3256 = vpop.f32.mrf.mxu0
        %v3257 = vpop.f32.mrf.mxu0
        %3258 = vdwg.mxu0
        %v3260 = vsel %vm2835, %v3017, 0
        %v3263 = vsel %vm3031, %v2067, 0
        %3265 = vmatprep.subr.bf16.mxu0 0
        %3266 = vmatpush1.bf16.msra.mxu0 0
        %3267 = vmatprep.subr.bf16.mxu0 0
        %3268 = vmatpush1.bf16.msra.mxu0 0
        %3269 = vmatprep.subr.bf16.mxu0 0
        %3270 = vmatpush1.bf16.msra.mxu0 0
        %3271 = vmatprep.subr.bf16.mxu0 0
        %3272 = vmatpush1.bf16.msra.mxu0 0
        %3273 = vmatprep.subr.bf16.mxu0 0
        %3274 = vmatpush1.bf16.msra.mxu0 0
        %3275 = vmatprep.subr.bf16.mxu0 0
        %3276 = vmatpush1.bf16.msra.mxu0 0
        %3277 = vmatprep.subr.bf16.mxu0 0
        %3278 = vmatpush1.bf16.msra.mxu0 0
        %3279 = vmatprep.subr.bf16.mxu0 0
        %3280 = vmatpush1.bf16.msra.mxu0 %v3263
        %3281 = vmatprep.subr.bf16.mxu0 0
        %3282 = vmatpush2.bf16.msra.mxu0 0
        %3283 = vmatprep.subr.bf16.mxu0 0
        %3284 = vmatpush2.bf16.msra.mxu0 0
        %3285 = vmatprep.subr.bf16.mxu0 0
        %3286 = vmatpush2.bf16.msra.mxu0 0
        %3287 = vmatprep.subr.bf16.mxu0 0
        %3288 = vmatpush2.bf16.msra.mxu0 0
        %3289 = vmatprep.subr.bf16.mxu0 0
        %3290 = vmatpush2.bf16.msra.mxu0 0
        %3291 = vmatprep.subr.bf16.mxu0 0
        %3292 = vmatpush2.bf16.msra.mxu0 0
        %3293 = vmatprep.subr.bf16.mxu0 0
        %3294 = vmatpush2.bf16.msra.mxu0 0
        %3295 = vmatprep.subr.bf16.mxu0 0
        %3296 = vmatpush2.bf16.msra.mxu0 0
        %3297 = vmatprep.mubr.bf16.mxu0 0
        %3298 = vmatmul.mubr.bf16.gmra.mxu0 %v3260
        %v3299 = vpop.f32.mrf.mxu0
        %v3300 = vadd.f32 0.0, %v3299
        %v3301 = vpop.f32.mrf.mxu0
        %v3302 = vpop.f32.mrf.mxu0
        %v3303 = vpop.f32.mrf.mxu0
        %3304 = vdwg.mxu0
        %v3306 = vsel %vm2835, %v3018, 0
        %v3309 = vsel %vm3031, %v2070, 0
        %3311 = vmatprep.subr.bf16.mxu0 0
        %3312 = vmatpush1.bf16.msra.mxu0 0
        %3313 = vmatprep.subr.bf16.mxu0 0
        %3314 = vmatpush1.bf16.msra.mxu0 0
        %3315 = vmatprep.subr.bf16.mxu0 0
        %3316 = vmatpush1.bf16.msra.mxu0 0
        %3317 = vmatprep.subr.bf16.mxu0 0
        %3318 = vmatpush1.bf16.msra.mxu0 0
        %3319 = vmatprep.subr.bf16.mxu0 0
        %3320 = vmatpush1.bf16.msra.mxu0 0
        %3321 = vmatprep.subr.bf16.mxu0 0
        %3322 = vmatpush1.bf16.msra.mxu0 0
        %3323 = vmatprep.subr.bf16.mxu0 0
        %3324 = vmatpush1.bf16.msra.mxu0 0
        %3325 = vmatprep.subr.bf16.mxu0 0
        %3326 = vmatpush1.bf16.msra.mxu0 %v3309
        %3327 = vmatprep.subr.bf16.mxu0 0
        %3328 = vmatpush2.bf16.msra.mxu0 0
        %3329 = vmatprep.subr.bf16.mxu0 0
        %3330 = vmatpush2.bf16.msra.mxu0 0
        %3331 = vmatprep.subr.bf16.mxu0 0
        %3332 = vmatpush2.bf16.msra.mxu0 0
        %3333 = vmatprep.subr.bf16.mxu0 0
        %3334 = vmatpush2.bf16.msra.mxu0 0
        %3335 = vmatprep.subr.bf16.mxu0 0
        %3336 = vmatpush2.bf16.msra.mxu0 0
        %3337 = vmatprep.subr.bf16.mxu0 0
        %3338 = vmatpush2.bf16.msra.mxu0 0
        %3339 = vmatprep.subr.bf16.mxu0 0
        %3340 = vmatpush2.bf16.msra.mxu0 0
        %3341 = vmatprep.subr.bf16.mxu0 0
        %3342 = vmatpush2.bf16.msra.mxu0 0
        %3343 = vmatprep.mubr.bf16.mxu0 0
        %3344 = vmatmul.mubr.bf16.gmra.mxu0 %v3306
        %v3345 = vpop.f32.mrf.mxu0
        %v3346 = vadd.f32 0.0, %v3345
        %v3347 = vpop.f32.mrf.mxu0
        %v3348 = vpop.f32.mrf.mxu0
        %v3349 = vpop.f32.mrf.mxu0
        %3350 = vdwg.mxu0
        %v3352 = vsel %vm2835, %v3019, 0
        %v3355 = vsel %vm3031, %v2073, 0
        %3357 = vmatprep.subr.bf16.mxu0 0
        %3358 = vmatpush1.bf16.msra.mxu0 0
        %3359 = vmatprep.subr.bf16.mxu0 0
        %3360 = vmatpush1.bf16.msra.mxu0 0
        %3361 = vmatprep.subr.bf16.mxu0 0
        %3362 = vmatpush1.bf16.msra.mxu0 0
        %3363 = vmatprep.subr.bf16.mxu0 0
        %3364 = vmatpush1.bf16.msra.mxu0 0
        %3365 = vmatprep.subr.bf16.mxu0 0
        %3366 = vmatpush1.bf16.msra.mxu0 0
        %3367 = vmatprep.subr.bf16.mxu0 0
        %3368 = vmatpush1.bf16.msra.mxu0 0
        %3369 = vmatprep.subr.bf16.mxu0 0
        %3370 = vmatpush1.bf16.msra.mxu0 0
        %3371 = vmatprep.subr.bf16.mxu0 0
        %3372 = vmatpush1.bf16.msra.mxu0 %v3355
        %3373 = vmatprep.subr.bf16.mxu0 0
        %3374 = vmatpush2.bf16.msra.mxu0 0
        %3375 = vmatprep.subr.bf16.mxu0 0
        %3376 = vmatpush2.bf16.msra.mxu0 0
        %3377 = vmatprep.subr.bf16.mxu0 0
        %3378 = vmatpush2.bf16.msra.mxu0 0
        %3379 = vmatprep.subr.bf16.mxu0 0
        %3380 = vmatpush2.bf16.msra.mxu0 0
        %3381 = vmatprep.subr.bf16.mxu0 0
        %3382 = vmatpush2.bf16.msra.mxu0 0
        %3383 = vmatprep.subr.bf16.mxu0 0
        %3384 = vmatpush2.bf16.msra.mxu0 0
        %3385 = vmatprep.subr.bf16.mxu0 0
        %3386 = vmatpush2.bf16.msra.mxu0 0
        %3387 = vmatprep.subr.bf16.mxu0 0
        %3388 = vmatpush2.bf16.msra.mxu0 0
        %3389 = vmatprep.mubr.bf16.mxu0 0
        %3390 = vmatmul.mubr.bf16.gmra.mxu0 %v3352
        %v3391 = vpop.f32.mrf.mxu0
        %v3392 = vadd.f32 0.0, %v3391
        %v3393 = vpop.f32.mrf.mxu0
        %v3394 = vpop.f32.mrf.mxu0
        %v3395 = vpop.f32.mrf.mxu0
        %3396 = vdwg.mxu0
        %v3398 = vsel %vm2835, %v3020, 0
        %v3401 = vsel %vm3031, %v2076, 0
        %3403 = vmatprep.subr.bf16.mxu0 0
        %3404 = vmatpush1.bf16.msra.mxu0 0
        %3405 = vmatprep.subr.bf16.mxu0 0
        %3406 = vmatpush1.bf16.msra.mxu0 0
        %3407 = vmatprep.subr.bf16.mxu0 0
        %3408 = vmatpush1.bf16.msra.mxu0 0
        %3409 = vmatprep.subr.bf16.mxu0 0
        %3410 = vmatpush1.bf16.msra.mxu0 0
        %3411 = vmatprep.subr.bf16.mxu0 0
        %3412 = vmatpush1.bf16.msra.mxu0 0
        %3413 = vmatprep.subr.bf16.mxu0 0
        %3414 = vmatpush1.bf16.msra.mxu0 0
        %3415 = vmatprep.subr.bf16.mxu0 0
        %3416 = vmatpush1.bf16.msra.mxu0 0
        %3417 = vmatprep.subr.bf16.mxu0 0
        %3418 = vmatpush1.bf16.msra.mxu0 %v3401
        %3419 = vmatprep.subr.bf16.mxu0 0
        %3420 = vmatpush2.bf16.msra.mxu0 0
        %3421 = vmatprep.subr.bf16.mxu0 0
        %3422 = vmatpush2.bf16.msra.mxu0 0
        %3423 = vmatprep.subr.bf16.mxu0 0
        %3424 = vmatpush2.bf16.msra.mxu0 0
        %3425 = vmatprep.subr.bf16.mxu0 0
        %3426 = vmatpush2.bf16.msra.mxu0 0
        %3427 = vmatprep.subr.bf16.mxu0 0
        %3428 = vmatpush2.bf16.msra.mxu0 0
        %3429 = vmatprep.subr.bf16.mxu0 0
        %3430 = vmatpush2.bf16.msra.mxu0 0
        %3431 = vmatprep.subr.bf16.mxu0 0
        %3432 = vmatpush2.bf16.msra.mxu0 0
        %3433 = vmatprep.subr.bf16.mxu0 0
        %3434 = vmatpush2.bf16.msra.mxu0 0
        %3435 = vmatprep.mubr.bf16.mxu0 0
        %3436 = vmatmul.mubr.bf16.gmra.mxu0 %v3398
        %v3437 = vpop.f32.mrf.mxu0
        %v3438 = vadd.f32 0.0, %v3437
        %v3439 = vpop.f32.mrf.mxu0
        %v3440 = vpop.f32.mrf.mxu0
        %v3441 = vpop.f32.mrf.mxu0
        %3442 = vdwg.mxu0
        %v3444 = vsel %vm2835, %v3021, 0
        %v3447 = vsel %vm3031, %v2079, 0
        %3449 = vmatprep.subr.bf16.mxu0 0
        %3450 = vmatpush1.bf16.msra.mxu0 0
        %3451 = vmatprep.subr.bf16.mxu0 0
        %3452 = vmatpush1.bf16.msra.mxu0 0
        %3453 = vmatprep.subr.bf16.mxu0 0
        %3454 = vmatpush1.bf16.msra.mxu0 0
        %3455 = vmatprep.subr.bf16.mxu0 0
        %3456 = vmatpush1.bf16.msra.mxu0 0
        %3457 = vmatprep.subr.bf16.mxu0 0
        %3458 = vmatpush1.bf16.msra.mxu0 0
        %3459 = vmatprep.subr.bf16.mxu0 0
        %3460 = vmatpush1.bf16.msra.mxu0 0
        %3461 = vmatprep.subr.bf16.mxu0 0
        %3462 = vmatpush1.bf16.msra.mxu0 0
        %3463 = vmatprep.subr.bf16.mxu0 0
        %3464 = vmatpush1.bf16.msra.mxu0 %v3447
        %3465 = vmatprep.subr.bf16.mxu0 0
        %3466 = vmatpush2.bf16.msra.mxu0 0
        %3467 = vmatprep.subr.bf16.mxu0 0
        %3468 = vmatpush2.bf16.msra.mxu0 0
        %3469 = vmatprep.subr.bf16.mxu0 0
        %3470 = vmatpush2.bf16.msra.mxu0 0
        %3471 = vmatprep.subr.bf16.mxu0 0
        %3472 = vmatpush2.bf16.msra.mxu0 0
        %3473 = vmatprep.subr.bf16.mxu0 0
        %3474 = vmatpush2.bf16.msra.mxu0 0
        %3475 = vmatprep.subr.bf16.mxu0 0
        %3476 = vmatpush2.bf16.msra.mxu0 0
        %3477 = vmatprep.subr.bf16.mxu0 0
        %3478 = vmatpush2.bf16.msra.mxu0 0
        %3479 = vmatprep.subr.bf16.mxu0 0
        %3480 = vmatpush2.bf16.msra.mxu0 0
        %3481 = vmatprep.mubr.bf16.mxu0 0
        %3482 = vmatmul.mubr.bf16.gmra.mxu0 %v3444
        %v3483 = vpop.f32.mrf.mxu0
        %v3484 = vadd.f32 0.0, %v3483
        %v3485 = vpop.f32.mrf.mxu0
        %v3486 = vpop.f32.mrf.mxu0
        %v3487 = vpop.f32.mrf.mxu0
        %3488 = vdwg.mxu0
        %v3490 = vsel %vm2835, %v3022, 0
        %v3493 = vsel %vm3031, %v2082, 0
        %3495 = vmatprep.subr.bf16.mxu0 0
        %3496 = vmatpush1.bf16.msra.mxu0 0
        %3497 = vmatprep.subr.bf16.mxu0 0
        %3498 = vmatpush1.bf16.msra.mxu0 0
        %3499 = vmatprep.subr.bf16.mxu0 0
        %3500 = vmatpush1.bf16.msra.mxu0 0
        %3501 = vmatprep.subr.bf16.mxu0 0
        %3502 = vmatpush1.bf16.msra.mxu0 0
        %3503 = vmatprep.subr.bf16.mxu0 0
        %3504 = vmatpush1.bf16.msra.mxu0 0
        %3505 = vmatprep.subr.bf16.mxu0 0
        %3506 = vmatpush1.bf16.msra.mxu0 0
        %3507 = vmatprep.subr.bf16.mxu0 0
        %3508 = vmatpush1.bf16.msra.mxu0 0
        %3509 = vmatprep.subr.bf16.mxu0 0
        %3510 = vmatpush1.bf16.msra.mxu0 %v3493
        %3511 = vmatprep.subr.bf16.mxu0 0
        %3512 = vmatpush2.bf16.msra.mxu0 0
        %3513 = vmatprep.subr.bf16.mxu0 0
        %3514 = vmatpush2.bf16.msra.mxu0 0
        %3515 = vmatprep.subr.bf16.mxu0 0
        %3516 = vmatpush2.bf16.msra.mxu0 0
        %3517 = vmatprep.subr.bf16.mxu0 0
        %3518 = vmatpush2.bf16.msra.mxu0 0
        %3519 = vmatprep.subr.bf16.mxu0 0
        %3520 = vmatpush2.bf16.msra.mxu0 0
        %3521 = vmatprep.subr.bf16.mxu0 0
        %3522 = vmatpush2.bf16.msra.mxu0 0
        %3523 = vmatprep.subr.bf16.mxu0 0
        %3524 = vmatpush2.bf16.msra.mxu0 0
        %3525 = vmatprep.subr.bf16.mxu0 0
        %3526 = vmatpush2.bf16.msra.mxu0 0
        %3527 = vmatprep.mubr.bf16.mxu0 0
        %3528 = vmatmul.mubr.bf16.gmra.mxu0 %v3490
        %v3529 = vpop.f32.mrf.mxu0
        %v3530 = vadd.f32 0.0, %v3529
        %v3531 = vpop.f32.mrf.mxu0
        %v3532 = vpop.f32.mrf.mxu0
        %v3533 = vpop.f32.mrf.mxu0
        %3534 = vdwg.mxu0
        %v3536 = vsel %vm2835, %v3023, 0
        %v3539 = vsel %vm3031, %v2085, 0
        %3541 = vmatprep.subr.bf16.mxu0 0
        %3542 = vmatpush1.bf16.msra.mxu0 0
        %3543 = vmatprep.subr.bf16.mxu0 0
        %3544 = vmatpush1.bf16.msra.mxu0 0
        %3545 = vmatprep.subr.bf16.mxu0 0
        %3546 = vmatpush1.bf16.msra.mxu0 0
        %3547 = vmatprep.subr.bf16.mxu0 0
        %3548 = vmatpush1.bf16.msra.mxu0 0
        %3549 = vmatprep.subr.bf16.mxu0 0
        %3550 = vmatpush1.bf16.msra.mxu0 0
        %3551 = vmatprep.subr.bf16.mxu0 0
        %3552 = vmatpush1.bf16.msra.mxu0 0
        %3553 = vmatprep.subr.bf16.mxu0 0
        %3554 = vmatpush1.bf16.msra.mxu0 0
        %3555 = vmatprep.subr.bf16.mxu0 0
        %3556 = vmatpush1.bf16.msra.mxu0 %v3539
        %3557 = vmatprep.subr.bf16.mxu0 0
        %3558 = vmatpush2.bf16.msra.mxu0 0
        %3559 = vmatprep.subr.bf16.mxu0 0
        %3560 = vmatpush2.bf16.msra.mxu0 0
        %3561 = vmatprep.subr.bf16.mxu0 0
        %3562 = vmatpush2.bf16.msra.mxu0 0
        %3563 = vmatprep.subr.bf16.mxu0 0
        %3564 = vmatpush2.bf16.msra.mxu0 0
        %3565 = vmatprep.subr.bf16.mxu0 0
        %3566 = vmatpush2.bf16.msra.mxu0 0
        %3567 = vmatprep.subr.bf16.mxu0 0
        %3568 = vmatpush2.bf16.msra.mxu0 0
        %3569 = vmatprep.subr.bf16.mxu0 0
        %3570 = vmatpush2.bf16.msra.mxu0 0
        %3571 = vmatprep.subr.bf16.mxu0 0
        %3572 = vmatpush2.bf16.msra.mxu0 0
        %3573 = vmatprep.mubr.bf16.mxu0 0
        %3574 = vmatmul.mubr.bf16.gmra.mxu0 %v3536
        %v3575 = vpop.f32.mrf.mxu0
        %v3576 = vadd.f32 0.0, %v3575
        %v3577 = vpop.f32.mrf.mxu0
        %v3578 = vpop.f32.mrf.mxu0
        %v3579 = vpop.f32.mrf.mxu0
        %3580 = vdwg.mxu0
        %v3582 = vsel %vm2835, %v3024, 0
        %v3585 = vsel %vm3031, %v2088, 0
        %3587 = vmatprep.subr.bf16.mxu0 0
        %3588 = vmatpush1.bf16.msra.mxu0 0
        %3589 = vmatprep.subr.bf16.mxu0 0
        %3590 = vmatpush1.bf16.msra.mxu0 0
        %3591 = vmatprep.subr.bf16.mxu0 0
        %3592 = vmatpush1.bf16.msra.mxu0 0
        %3593 = vmatprep.subr.bf16.mxu0 0
        %3594 = vmatpush1.bf16.msra.mxu0 0
        %3595 = vmatprep.subr.bf16.mxu0 0
        %3596 = vmatpush1.bf16.msra.mxu0 0
        %3597 = vmatprep.subr.bf16.mxu0 0
        %3598 = vmatpush1.bf16.msra.mxu0 0
        %3599 = vmatprep.subr.bf16.mxu0 0
        %3600 = vmatpush1.bf16.msra.mxu0 0
        %3601 = vmatprep.subr.bf16.mxu0 0
        %3602 = vmatpush1.bf16.msra.mxu0 %v3585
        %3603 = vmatprep.subr.bf16.mxu0 0
        %3604 = vmatpush2.bf16.msra.mxu0 0
        %3605 = vmatprep.subr.bf16.mxu0 0
        %3606 = vmatpush2.bf16.msra.mxu0 0
        %3607 = vmatprep.subr.bf16.mxu0 0
        %3608 = vmatpush2.bf16.msra.mxu0 0
        %3609 = vmatprep.subr.bf16.mxu0 0
        %3610 = vmatpush2.bf16.msra.mxu0 0
        %3611 = vmatprep.subr.bf16.mxu0 0
        %3612 = vmatpush2.bf16.msra.mxu0 0
        %3613 = vmatprep.subr.bf16.mxu0 0
        %3614 = vmatpush2.bf16.msra.mxu0 0
        %3615 = vmatprep.subr.bf16.mxu0 0
        %3616 = vmatpush2.bf16.msra.mxu0 0
        %3617 = vmatprep.subr.bf16.mxu0 0
        %3618 = vmatpush2.bf16.msra.mxu0 0
        %3619 = vmatprep.mubr.bf16.mxu0 0
        %3620 = vmatmul.mubr.bf16.gmra.mxu0 %v3582
        %v3621 = vpop.f32.mrf.mxu0
        %v3622 = vadd.f32 0.0, %v3621
        %v3623 = vpop.f32.mrf.mxu0
        %v3624 = vpop.f32.mrf.mxu0
        %v3625 = vpop.f32.mrf.mxu0
        %3626 = vdwg.mxu0
        %v3628 = vsel %vm2835, %v3025, 0
        %v3631 = vsel %vm3031, %v2091, 0
        %3633 = vmatprep.subr.bf16.mxu0 0
        %3634 = vmatpush1.bf16.msra.mxu0 0
        %3635 = vmatprep.subr.bf16.mxu0 0
        %3636 = vmatpush1.bf16.msra.mxu0 0
        %3637 = vmatprep.subr.bf16.mxu0 0
        %3638 = vmatpush1.bf16.msra.mxu0 0
        %3639 = vmatprep.subr.bf16.mxu0 0
        %3640 = vmatpush1.bf16.msra.mxu0 0
        %3641 = vmatprep.subr.bf16.mxu0 0
        %3642 = vmatpush1.bf16.msra.mxu0 0
        %3643 = vmatprep.subr.bf16.mxu0 0
        %3644 = vmatpush1.bf16.msra.mxu0 0
        %3645 = vmatprep.subr.bf16.mxu0 0
        %3646 = vmatpush1.bf16.msra.mxu0 0
        %3647 = vmatprep.subr.bf16.mxu0 0
        %3648 = vmatpush1.bf16.msra.mxu0 %v3631
        %3649 = vmatprep.subr.bf16.mxu0 0
        %3650 = vmatpush2.bf16.msra.mxu0 0
        %3651 = vmatprep.subr.bf16.mxu0 0
        %3652 = vmatpush2.bf16.msra.mxu0 0
        %3653 = vmatprep.subr.bf16.mxu0 0
        %3654 = vmatpush2.bf16.msra.mxu0 0
        %3655 = vmatprep.subr.bf16.mxu0 0
        %3656 = vmatpush2.bf16.msra.mxu0 0
        %3657 = vmatprep.subr.bf16.mxu0 0
        %3658 = vmatpush2.bf16.msra.mxu0 0
        %3659 = vmatprep.subr.bf16.mxu0 0
        %3660 = vmatpush2.bf16.msra.mxu0 0
        %3661 = vmatprep.subr.bf16.mxu0 0
        %3662 = vmatpush2.bf16.msra.mxu0 0
        %3663 = vmatprep.subr.bf16.mxu0 0
        %3664 = vmatpush2.bf16.msra.mxu0 0
        %3665 = vmatprep.mubr.bf16.mxu0 0
        %3666 = vmatmul.mubr.bf16.gmra.mxu0 %v3628
        %v3667 = vpop.f32.mrf.mxu0
        %v3668 = vadd.f32 0.0, %v3667
        %v3669 = vpop.f32.mrf.mxu0
        %v3670 = vpop.f32.mrf.mxu0
        %v3671 = vpop.f32.mrf.mxu0
        %3672 = vdwg.mxu0
        %v3674 = vsel %vm2835, %v3026, 0
        %v3677 = vsel %vm3031, %v2094, 0
        %3679 = vmatprep.subr.bf16.mxu0 0
        %3680 = vmatpush1.bf16.msra.mxu0 0
        %3681 = vmatprep.subr.bf16.mxu0 0
        %3682 = vmatpush1.bf16.msra.mxu0 0
        %3683 = vmatprep.subr.bf16.mxu0 0
        %3684 = vmatpush1.bf16.msra.mxu0 0
        %3685 = vmatprep.subr.bf16.mxu0 0
        %3686 = vmatpush1.bf16.msra.mxu0 0
        %3687 = vmatprep.subr.bf16.mxu0 0
        %3688 = vmatpush1.bf16.msra.mxu0 0
        %3689 = vmatprep.subr.bf16.mxu0 0
        %3690 = vmatpush1.bf16.msra.mxu0 0
        %3691 = vmatprep.subr.bf16.mxu0 0
        %3692 = vmatpush1.bf16.msra.mxu0 0
        %3693 = vmatprep.subr.bf16.mxu0 0
        %3694 = vmatpush1.bf16.msra.mxu0 %v3677
        %3695 = vmatprep.subr.bf16.mxu0 0
        %3696 = vmatpush2.bf16.msra.mxu0 0
        %3697 = vmatprep.subr.bf16.mxu0 0
        %3698 = vmatpush2.bf16.msra.mxu0 0
        %3699 = vmatprep.subr.bf16.mxu0 0
        %3700 = vmatpush2.bf16.msra.mxu0 0
        %3701 = vmatprep.subr.bf16.mxu0 0
        %3702 = vmatpush2.bf16.msra.mxu0 0
        %3703 = vmatprep.subr.bf16.mxu0 0
        %3704 = vmatpush2.bf16.msra.mxu0 0
        %3705 = vmatprep.subr.bf16.mxu0 0
        %3706 = vmatpush2.bf16.msra.mxu0 0
        %3707 = vmatprep.subr.bf16.mxu0 0
        %3708 = vmatpush2.bf16.msra.mxu0 0
        %3709 = vmatprep.subr.bf16.mxu0 0
        %3710 = vmatpush2.bf16.msra.mxu0 0
        %3711 = vmatprep.mubr.bf16.mxu0 0
        %3712 = vmatmul.mubr.bf16.gmra.mxu0 %v3674
        %v3713 = vpop.f32.mrf.mxu0
        %v3714 = vadd.f32 0.0, %v3713
        %v3715 = vpop.f32.mrf.mxu0
        %v3716 = vpop.f32.mrf.mxu0
        %v3717 = vpop.f32.mrf.mxu0
        %3718 = vdwg.mxu0
        %v3720 = vsel %vm2835, %v3027, 0
        %v3723 = vsel %vm3031, %v2097, 0
        %3725 = vmatprep.subr.bf16.mxu0 0
        %3726 = vmatpush1.bf16.msra.mxu0 0
        %3727 = vmatprep.subr.bf16.mxu0 0
        %3728 = vmatpush1.bf16.msra.mxu0 0
        %3729 = vmatprep.subr.bf16.mxu0 0
        %3730 = vmatpush1.bf16.msra.mxu0 0
        %3731 = vmatprep.subr.bf16.mxu0 0
        %3732 = vmatpush1.bf16.msra.mxu0 0
        %3733 = vmatprep.subr.bf16.mxu0 0
        %3734 = vmatpush1.bf16.msra.mxu0 0
        %3735 = vmatprep.subr.bf16.mxu0 0
        %3736 = vmatpush1.bf16.msra.mxu0 0
        %3737 = vmatprep.subr.bf16.mxu0 0
        %3738 = vmatpush1.bf16.msra.mxu0 0
        %3739 = vmatprep.subr.bf16.mxu0 0
        %3740 = vmatpush1.bf16.msra.mxu0 %v3723
        %3741 = vmatprep.subr.bf16.mxu0 0
        %3742 = vmatpush2.bf16.msra.mxu0 0
        %3743 = vmatprep.subr.bf16.mxu0 0
        %3744 = vmatpush2.bf16.msra.mxu0 0
        %3745 = vmatprep.subr.bf16.mxu0 0
        %3746 = vmatpush2.bf16.msra.mxu0 0
        %3747 = vmatprep.subr.bf16.mxu0 0
        %3748 = vmatpush2.bf16.msra.mxu0 0
        %3749 = vmatprep.subr.bf16.mxu0 0
        %3750 = vmatpush2.bf16.msra.mxu0 0
        %3751 = vmatprep.subr.bf16.mxu0 0
        %3752 = vmatpush2.bf16.msra.mxu0 0
        %3753 = vmatprep.subr.bf16.mxu0 0
        %3754 = vmatpush2.bf16.msra.mxu0 0
        %3755 = vmatprep.subr.bf16.mxu0 0
        %3756 = vmatpush2.bf16.msra.mxu0 0
        %3757 = vmatprep.mubr.bf16.mxu0 0
        %3758 = vmatmul.mubr.bf16.gmra.mxu0 %v3720
        %v3759 = vpop.f32.mrf.mxu0
        %v3760 = vadd.f32 0.0, %v3759
        %v3761 = vpop.f32.mrf.mxu0
        %v3762 = vpop.f32.mrf.mxu0
        %v3763 = vpop.f32.mrf.mxu0
        %3764 = vdwg.mxu0
        %v3765 = vpack.c.bf16 %v3070, %v3070
        %v3766 = vpack.c.bf16 %v3116, %v3116
        %v3767 = vpack.c.bf16 %v3162, %v3162
        %v3768 = vpack.c.bf16 %v3208, %v3208
        %v3769 = vpack.c.bf16 %v3254, %v3254
        %v3770 = vpack.c.bf16 %v3300, %v3300
        %v3771 = vpack.c.bf16 %v3346, %v3346
        %v3772 = vpack.c.bf16 %v3392, %v3392
        %v3773 = vpack.c.bf16 %v3438, %v3438
        %v3774 = vpack.c.bf16 %v3484, %v3484
        %v3775 = vpack.c.bf16 %v3530, %v3530
        %v3776 = vpack.c.bf16 %v3576, %v3576
        %v3777 = vpack.c.bf16 %v3622, %v3622
        %v3778 = vpack.c.bf16 %v3668, %v3668
        %v3779 = vpack.c.bf16 %v3714, %v3714
        %v3780 = vpack.c.bf16 %v3760, %v3760
        %v3781 = vcombine.low %v3765, %v3769
        %v3783 = vunpack.c.l.s4 1983009808
        %v3784 = vunpack.c.0.s8 %v3783
        %v3785 = vlaneseq
        %v3786 = vshrl.u32 %v3785, 7
        %v3787 = vsub.s32 %v3784, %v3786
        %v3788 = vrot.slane %v3781, %v3787
        %v3789 = vcombine.low %v3767, %v3771
        %v3791 = vunpack.c.l.s4 1983009808
        %v3792 = vunpack.c.0.s8 %v3791
        %v3793 = vlaneseq
        %v3794 = vshrl.u32 %v3793, 7
        %v3795 = vsub.s32 %v3792, %v3794
        %v3796 = vrot.slane %v3789, %v3795
        %v3797 = vcombine.low %v3788, %v3796
        %v3798 = vcombine.high %v3788, %v3796
        %v3800 = vunpack.c.l.s4 1934713408
        %v3801 = vunpack.c.0.s8 %v3800
        %v3802 = vlaneseq
        %v3803 = vshrl.u32 %v3802, 7
        %v3804 = vsub.s32 %v3801, %v3803
        %v3805 = vrot.slane %v3797, %v3804
        %v3807 = vunpack.c.l.s4 1934713408
        %v3808 = vunpack.c.0.s8 %v3807
        %v3809 = vlaneseq
        %v3810 = vshrl.u32 %v3809, 7
        %v3811 = vsub.s32 %v3808, %v3810
        %v3812 = vrot.slane %v3798, %v3811
        %v3813 = vcombine.high %v3805, 0
        %v3814 = vcombine.high %v3812, 0
        %v3815 = vcombine.low %v3766, %v3770
        %v3817 = vunpack.c.l.s4 1983009808
        %v3818 = vunpack.c.0.s8 %v3817
        %v3819 = vlaneseq
        %v3820 = vshrl.u32 %v3819, 7
        %v3821 = vsub.s32 %v3818, %v3820
        %v3822 = vrot.slane %v3815, %v3821
        %v3823 = vcombine.low %v3768, %v3772
        %v3825 = vunpack.c.l.s4 1983009808
        %v3826 = vunpack.c.0.s8 %v3825
        %v3827 = vlaneseq
        %v3828 = vshrl.u32 %v3827, 7
        %v3829 = vsub.s32 %v3826, %v3828
        %v3830 = vrot.slane %v3823, %v3829
        %v3831 = vcombine.low %v3822, %v3830
        %v3832 = vcombine.high %v3822, %v3830
        %v3834 = vunpack.c.l.s4 1934713408
        %v3835 = vunpack.c.0.s8 %v3834
        %v3836 = vlaneseq
        %v3837 = vshrl.u32 %v3836, 7
        %v3838 = vsub.s32 %v3835, %v3837
        %v3839 = vrot.slane %v3831, %v3838
        %v3841 = vunpack.c.l.s4 1934713408
        %v3842 = vunpack.c.0.s8 %v3841
        %v3843 = vlaneseq
        %v3844 = vshrl.u32 %v3843, 7
        %v3845 = vsub.s32 %v3842, %v3844
        %v3846 = vrot.slane %v3832, %v3845
        %v3847 = vcombine.high %v3839, 0
        %v3848 = vcombine.high %v3846, 0
        %v3849 = vcombine.low %v3773, %v3777
        %v3851 = vunpack.c.l.s4 1983009808
        %v3852 = vunpack.c.0.s8 %v3851
        %v3853 = vlaneseq
        %v3854 = vshrl.u32 %v3853, 7
        %v3855 = vsub.s32 %v3852, %v3854
        %v3856 = vrot.slane %v3849, %v3855
        %v3857 = vcombine.low %v3775, %v3779
        %v3859 = vunpack.c.l.s4 1983009808
        %v3860 = vunpack.c.0.s8 %v3859
        %v3861 = vlaneseq
        %v3862 = vshrl.u32 %v3861, 7
        %v3863 = vsub.s32 %v3860, %v3862
        %v3864 = vrot.slane %v3857, %v3863
        %v3865 = vcombine.low %v3856, %v3864
        %v3866 = vcombine.high %v3856, %v3864
        %v3868 = vunpack.c.l.s4 1934713408
        %v3869 = vunpack.c.0.s8 %v3868
        %v3870 = vlaneseq
        %v3871 = vshrl.u32 %v3870, 7
        %v3872 = vsub.s32 %v3869, %v3871
        %v3873 = vrot.slane %v3865, %v3872
        %v3875 = vunpack.c.l.s4 1934713408
        %v3876 = vunpack.c.0.s8 %v3875
        %v3877 = vlaneseq
        %v3878 = vshrl.u32 %v3877, 7
        %v3879 = vsub.s32 %v3876, %v3878
        %v3880 = vrot.slane %v3866, %v3879
        %v3881 = vcombine.high %v3873, 0
        %v3882 = vcombine.high %v3880, 0
        %v3883 = vcombine.low %v3774, %v3778
        %v3885 = vunpack.c.l.s4 1983009808
        %v3886 = vunpack.c.0.s8 %v3885
        %v3887 = vlaneseq
        %v3888 = vshrl.u32 %v3887, 7
        %v3889 = vsub.s32 %v3886, %v3888
        %v3890 = vrot.slane %v3883, %v3889
        %v3891 = vcombine.low %v3776, %v3780
        %v3893 = vunpack.c.l.s4 1983009808
        %v3894 = vunpack.c.0.s8 %v3893
        %v3895 = vlaneseq
        %v3896 = vshrl.u32 %v3895, 7
        %v3897 = vsub.s32 %v3894, %v3896
        %v3898 = vrot.slane %v3891, %v3897
        %v3899 = vcombine.low %v3890, %v3898
        %v3900 = vcombine.high %v3890, %v3898
        %v3902 = vunpack.c.l.s4 1934713408
        %v3903 = vunpack.c.0.s8 %v3902
        %v3904 = vlaneseq
        %v3905 = vshrl.u32 %v3904, 7
        %v3906 = vsub.s32 %v3903, %v3905
        %v3907 = vrot.slane %v3899, %v3906
        %v3909 = vunpack.c.l.s4 1934713408
        %v3910 = vunpack.c.0.s8 %v3909
        %v3911 = vlaneseq
        %v3912 = vshrl.u32 %v3911, 7
        %v3913 = vsub.s32 %v3910, %v3912
        %v3914 = vrot.slane %v3900, %v3913
        %v3915 = vcombine.high %v3907, 0
        %v3916 = vcombine.high %v3914, 0
        %v3919 = vpack.i.b16 %v3839, %v3805
        %v3921 = vshrl.u32 %v3805, 16
        %v3922 = vshrl.u32 %v3839, 16
        %v3923 = vpack.i.b16 %v3922, %v3921
        %v3927 = vpack.i.b16 %v3847, %v3813
        %v3929 = vshrl.u32 %v3813, 16
        %v3930 = vshrl.u32 %v3847, 16
        %v3931 = vpack.i.b16 %v3930, %v3929
        %v3935 = vpack.i.b16 %v3846, %v3812
        %v3937 = vshrl.u32 %v3812, 16
        %v3938 = vshrl.u32 %v3846, 16
        %v3939 = vpack.i.b16 %v3938, %v3937
        %v3943 = vpack.i.b16 %v3848, %v3814
        %v3945 = vshrl.u32 %v3814, 16
        %v3946 = vshrl.u32 %v3848, 16
        %v3947 = vpack.i.b16 %v3946, %v3945
        %v3951 = vpack.i.b16 %v3907, %v3873
        %v3953 = vshrl.u32 %v3873, 16
        %v3954 = vshrl.u32 %v3907, 16
        %v3955 = vpack.i.b16 %v3954, %v3953
        %v3959 = vpack.i.b16 %v3915, %v3881
        %v3961 = vshrl.u32 %v3881, 16
        %v3962 = vshrl.u32 %v3915, 16
        %v3963 = vpack.i.b16 %v3962, %v3961
        %v3967 = vpack.i.b16 %v3914, %v3880
        %v3969 = vshrl.u32 %v3880, 16
        %v3970 = vshrl.u32 %v3914, 16
        %v3971 = vpack.i.b16 %v3970, %v3969
        %v3975 = vpack.i.b16 %v3916, %v3882
        %v3977 = vshrl.u32 %v3882, 16
        %v3978 = vshrl.u32 %v3916, 16
        %v3979 = vpack.i.b16 %v3978, %v3977
        %v3981 = vcombine.low %v3919, %v3935
        %v3983 = vunpack.c.l.s4 1983009808
        %v3984 = vunpack.c.0.s8 %v3983
        %v3985 = vlaneseq
        %v3986 = vshrl.u32 %v3985, 7
        %v3987 = vsub.s32 %v3984, %v3986
        %v3988 = vrot.slane %v3981, %v3987
        %v3989 = vcombine.low %v3927, %v3943
        %v3991 = vunpack.c.l.s4 1983009808
        %v3992 = vunpack.c.0.s8 %v3991
        %v3993 = vlaneseq
        %v3994 = vshrl.u32 %v3993, 7
        %v3995 = vsub.s32 %v3992, %v3994
        %v3996 = vrot.slane %v3989, %v3995
        %v3997 = vcombine.low %v3951, %v3967
        %v3999 = vunpack.c.l.s4 1983009808
        %v4000 = vunpack.c.0.s8 %v3999
        %v4001 = vlaneseq
        %v4002 = vshrl.u32 %v4001, 7
        %v4003 = vsub.s32 %v4000, %v4002
        %v4004 = vrot.slane %v3997, %v4003
        %v4005 = vcombine.low %v3959, %v3975
        %v4007 = vunpack.c.l.s4 1983009808
        %v4008 = vunpack.c.0.s8 %v4007
        %v4009 = vlaneseq
        %v4010 = vshrl.u32 %v4009, 7
        %v4011 = vsub.s32 %v4008, %v4010
        %v4012 = vrot.slane %v4005, %v4011
        %v4013 = vcombine.low %v3988, %v3996
        %v4014 = vcombine.high %v3988, %v3996
        %v4016 = vunpack.c.l.s4 1934713408
        %v4017 = vunpack.c.0.s8 %v4016
        %v4018 = vlaneseq
        %v4019 = vshrl.u32 %v4018, 7
        %v4020 = vsub.s32 %v4017, %v4019
        %v4021 = vrot.slane %v4013, %v4020
        %v4023 = vunpack.c.l.s4 1934713408
        %v4024 = vunpack.c.0.s8 %v4023
        %v4025 = vlaneseq
        %v4026 = vshrl.u32 %v4025, 7
        %v4027 = vsub.s32 %v4024, %v4026
        %v4028 = vrot.slane %v4014, %v4027
        %v4029 = vcombine.low %v4004, %v4012
        %v4030 = vcombine.high %v4004, %v4012
        %v4032 = vunpack.c.l.s4 1934713408
        %v4033 = vunpack.c.0.s8 %v4032
        %v4034 = vlaneseq
        %v4035 = vshrl.u32 %v4034, 7
        %v4036 = vsub.s32 %v4033, %v4035
        %v4037 = vrot.slane %v4029, %v4036
        %v4039 = vunpack.c.l.s4 1934713408
        %v4040 = vunpack.c.0.s8 %v4039
        %v4041 = vlaneseq
        %v4042 = vshrl.u32 %v4041, 7
        %v4043 = vsub.s32 %v4040, %v4042
        %v4044 = vrot.slane %v4030, %v4043
        %v4045 = vcombine.low %v4021, %v4037
        %v4046 = vcombine.high %v4021, %v4037
        %v4047 = vcombine.low %v4028, %v4044
        %v4048 = vcombine.high %v4028, %v4044
        %v4049 = vcombine.low %v3923, %v3939
        %v4051 = vunpack.c.l.s4 1983009808
        %v4052 = vunpack.c.0.s8 %v4051
        %v4053 = vlaneseq
        %v4054 = vshrl.u32 %v4053, 7
        %v4055 = vsub.s32 %v4052, %v4054
        %v4056 = vrot.slane %v4049, %v4055
        %v4057 = vcombine.low %v3931, %v3947
        %v4059 = vunpack.c.l.s4 1983009808
        %v4060 = vunpack.c.0.s8 %v4059
        %v4061 = vlaneseq
        %v4062 = vshrl.u32 %v4061, 7
        %v4063 = vsub.s32 %v4060, %v4062
        %v4064 = vrot.slane %v4057, %v4063
        %v4065 = vcombine.low %v3955, %v3971
        %v4067 = vunpack.c.l.s4 1983009808
        %v4068 = vunpack.c.0.s8 %v4067
        %v4069 = vlaneseq
        %v4070 = vshrl.u32 %v4069, 7
        %v4071 = vsub.s32 %v4068, %v4070
        %v4072 = vrot.slane %v4065, %v4071
        %v4073 = vcombine.low %v3963, %v3979
        %v4075 = vunpack.c.l.s4 1983009808
        %v4076 = vunpack.c.0.s8 %v4075
        %v4077 = vlaneseq
        %v4078 = vshrl.u32 %v4077, 7
        %v4079 = vsub.s32 %v4076, %v4078
        %v4080 = vrot.slane %v4073, %v4079
        %v4081 = vcombine.low %v4056, %v4064
        %v4082 = vcombine.high %v4056, %v4064
        %v4084 = vunpack.c.l.s4 1934713408
        %v4085 = vunpack.c.0.s8 %v4084
        %v4086 = vlaneseq
        %v4087 = vshrl.u32 %v4086, 7
        %v4088 = vsub.s32 %v4085, %v4087
        %v4089 = vrot.slane %v4081, %v4088
        %v4091 = vunpack.c.l.s4 1934713408
        %v4092 = vunpack.c.0.s8 %v4091
        %v4093 = vlaneseq
        %v4094 = vshrl.u32 %v4093, 7
        %v4095 = vsub.s32 %v4092, %v4094
        %v4096 = vrot.slane %v4082, %v4095
        %v4097 = vcombine.low %v4072, %v4080
        %v4098 = vcombine.high %v4072, %v4080
        %v4100 = vunpack.c.l.s4 1934713408
        %v4101 = vunpack.c.0.s8 %v4100
        %v4102 = vlaneseq
        %v4103 = vshrl.u32 %v4102, 7
        %v4104 = vsub.s32 %v4101, %v4103
        %v4105 = vrot.slane %v4097, %v4104
        %v4107 = vunpack.c.l.s4 1934713408
        %v4108 = vunpack.c.0.s8 %v4107
        %v4109 = vlaneseq
        %v4110 = vshrl.u32 %v4109, 7
        %v4111 = vsub.s32 %v4108, %v4110
        %v4112 = vrot.slane %v4098, %v4111
        %v4113 = vcombine.low %v4089, %v4105
        %v4114 = vcombine.high %v4089, %v4105
        %v4115 = vcombine.low %v4096, %v4112
        %v4116 = vcombine.high %v4096, %v4112
        %v4119 = vpack.i.b16 %v4113, %v4045
        %v4120 = vshrl.u32 %v4045, 16
        %v4121 = vshrl.u32 %v4113, 16
        %v4122 = vpack.i.b16 %v4121, %v4120
        %v4125 = vpack.i.b16 %v4114, %v4046
        %v4126 = vshrl.u32 %v4046, 16
        %v4127 = vshrl.u32 %v4114, 16
        %v4128 = vpack.i.b16 %v4127, %v4126
        %v4131 = vpack.i.b16 %v4115, %v4047
        %v4132 = vshrl.u32 %v4047, 16
        %v4133 = vshrl.u32 %v4115, 16
        %v4134 = vpack.i.b16 %v4133, %v4132
        %v4137 = vpack.i.b16 %v4116, %v4048
        %v4138 = vshrl.u32 %v4048, 16
        %v4139 = vshrl.u32 %v4116, 16
        %v4140 = vpack.i.b16 %v4139, %v4138
        %4141 = vrot.lane.b32.xlu0 %v4122, 16
        %v4142 = vpop.permute.xlu0 %4141
        %4143 = vrot.lane.b32.xlu0 %v4125, 32
        %v4144 = vpop.permute.xlu0 %4143
        %4145 = vrot.lane.b32.xlu0 %v4128, 48
        %v4146 = vpop.permute.xlu0 %4145
        %4147 = vrot.lane.b32.xlu0 %v4131, 64
        %v4148 = vpop.permute.xlu0 %4147
        %4149 = vrot.lane.b32.xlu0 %v4134, 80
        %v4150 = vpop.permute.xlu0 %4149
        %4151 = vrot.lane.b32.xlu0 %v4137, 96
        %v4152 = vpop.permute.xlu0 %4151
        %4153 = vrot.lane.b32.xlu0 %v4140, 112
        %v4154 = vpop.permute.xlu0 %4153
        %v4157 = vsel %vm2098, %v4119, %v4142
        %vm4158 = vcmask 261120
        %v4160 = vsel %vm4158, %v4157, %v4144
        %vm4161 = vcmask 392192
        %v4163 = vsel %vm4161, %v4160, %v4146
        %vm4164 = vcmask 523264
        %v4166 = vsel %vm4164, %v4163, %v4148
        %vm4167 = vcmask 654336
        %v4169 = vsel %vm4167, %v4166, %v4150
        %vm4170 = vcmask 785408
        %v4172 = vsel %vm4170, %v4169, %v4152
        %vm4173 = vcmask 916480
        %v4175 = vsel %vm4173, %v4172, %v4154
        %v4177 = vld [vmem:[%s596] sm:$0xf]
        %v4178 = vld [vmem:[%s596 + $0x4] sm:$0xf]
        %v4179 = vld [vmem:[%s596 + $0x8] sm:$0xf]
        %v4180 = vld [vmem:[%s596 + $0xc] sm:$0xf]
        %v4181 = vld [vmem:[%s596 + $0x10] sm:$0xf]
        %v4182 = vld [vmem:[%s596 + $0x14] sm:$0xf]
        %v4183 = vld [vmem:[%s596 + $0x18] sm:$0xf]
        %v4184 = vld [vmem:[%s596 + $0x1c] sm:$0xf]
        %v4185 = vld [vmem:[%s596 + $0x20] sm:$0xf]
        %v4186 = vld [vmem:[%s596 + $0x24] sm:$0xf]
        %v4187 = vld [vmem:[%s596 + $0x28] sm:$0xf]
        %v4188 = vld [vmem:[%s596 + $0x2c] sm:$0xf]
        %v4189 = vld [vmem:[%s596 + $0x30] sm:$0xf]
        %v4190 = vld [vmem:[%s596 + $0x34] sm:$0xf]
        %v4191 = vld [vmem:[%s596 + $0x38] sm:$0xf]
        %v4192 = vld [vmem:[%s596 + $0x3c] sm:$0xf]
        %v4193 = vld [vmem:[%s700] sm:$0x1]
        %v4195 = vlaneseq
        %v4196 = vshrl.u32 %v4195, 7
        %v4197 = vsub.s32 0, %v4196
        %v4198 = vrot.slane %v4193, %v4197
        %v4216 = vunpack.c.l.b16 %v4177
        %v4217 = vunpack.c.l.b16 %v4178
        %v4218 = vunpack.c.l.b16 %v4179
        %v4219 = vunpack.c.l.b16 %v4180
        %v4220 = vunpack.c.l.b16 %v4181
        %v4221 = vunpack.c.l.b16 %v4182
        %v4222 = vunpack.c.l.b16 %v4183
        %v4223 = vunpack.c.l.b16 %v4184
        %v4224 = vunpack.c.l.b16 %v4185
        %v4225 = vunpack.c.l.b16 %v4186
        %v4226 = vunpack.c.l.b16 %v4187
        %v4227 = vunpack.c.l.b16 %v4188
        %v4228 = vunpack.c.l.b16 %v4189
        %v4229 = vunpack.c.l.b16 %v4190
        %v4230 = vunpack.c.l.b16 %v4191
        %v4231 = vunpack.c.l.b16 %v4192
        %v4232 = vpack.c.b16 %v4217, %v4216
        %v4233 = vpack.c.b16 %v4219, %v4218
        %v4234 = vpack.c.b16 %v4221, %v4220
        %v4235 = vpack.c.b16 %v4223, %v4222
        %v4236 = vpack.c.b16 %v4225, %v4224
        %v4237 = vpack.c.b16 %v4227, %v4226
        %v4238 = vpack.c.b16 %v4229, %v4228
        %v4239 = vpack.c.b16 %v4231, %v4230
        %4248 = vmatprep.subr.bf16.mxu0 0
        %4249 = vmatpush1.bf16.msra.mxu0 %v4239
        %4250 = vmatprep.subr.bf16.mxu0 0
        %4251 = vmatpush1.bf16.msra.mxu0 %v4238
        %4252 = vmatprep.subr.bf16.mxu0 0
        %4253 = vmatpush1.bf16.msra.mxu0 %v4237
        %4254 = vmatprep.subr.bf16.mxu0 0
        %4255 = vmatpush1.bf16.msra.mxu0 %v4236
        %4256 = vmatprep.subr.bf16.mxu0 0
        %4257 = vmatpush1.bf16.msra.mxu0 %v4235
        %4258 = vmatprep.subr.bf16.mxu0 0
        %4259 = vmatpush1.bf16.msra.mxu0 %v4234
        %4260 = vmatprep.subr.bf16.mxu0 0
        %4261 = vmatpush1.bf16.msra.mxu0 %v4233
        %4262 = vmatprep.subr.bf16.mxu0 0
        %4263 = vmatpush1.bf16.msra.mxu0 %v4232
        %4264 = vmatprep.subr.bf16.mxu0 0
        %4265 = vmatpush2.bf16.msra.mxu0 0
        %4266 = vmatprep.subr.bf16.mxu0 0
        %4267 = vmatpush2.bf16.msra.mxu0 0
        %4268 = vmatprep.subr.bf16.mxu0 0
        %4269 = vmatpush2.bf16.msra.mxu0 0
        %4270 = vmatprep.subr.bf16.mxu0 0
        %4271 = vmatpush2.bf16.msra.mxu0 0
        %4272 = vmatprep.subr.bf16.mxu0 0
        %4273 = vmatpush2.bf16.msra.mxu0 0
        %4274 = vmatprep.subr.bf16.mxu0 0
        %4275 = vmatpush2.bf16.msra.mxu0 0
        %4276 = vmatprep.subr.bf16.mxu0 0
        %4277 = vmatpush2.bf16.msra.mxu0 0
        %4278 = vmatprep.subr.bf16.mxu0 0
        %4279 = vmatpush2.bf16.msra.mxu0 0
        %4280 = vmatprep.mubr.bf16.mxu0 0
        %4281 = vmatmul.mubr.bf16.gmra.mxu0 %v4175
        %v4282 = vpop.f32.mrf.mxu0
        %v4283 = vadd.f32 %v4198, %v4282
        %v4284 = vpop.f32.mrf.mxu0
        %v4285 = vpop.f32.mrf.mxu0
        %v4286 = vadd.f32 %v4198, %v4285
        %v4287 = vpop.f32.mrf.mxu0
        %4288 = vdwg.mxu0
        %v4289 = vadd.f32 %v730, %v4283
        %v4290 = vadd.f32 %v731, %v4286
        %v4291 = vld [vmem:[%s703] sm:$0x1]
        %v4292 = vld [vmem:[%s706] sm:$0x1]
        %4293 = vadd.xlane.f32.xlu0 %v4289
        %v4294 = vpop.xlane.xlu0 %4293
        %4295 = vadd.xlane.f32.xlu0 %v4290
        %v4296 = vpop.xlane.xlu0 %4295
        %v4297 = vrcp.pop 128.0
        %v4298 = vmul.f32 %v4294, %v4297
        %v4299 = vmul.f32 %v4296, %v4297
        %v4300 = vsub.f32 %v4289, %v4298
        %v4301 = vsub.f32 %v4290, %v4299
        %v4302 = vmul.f32 %v4300, %v4300
        %v4303 = vmul.f32 %v4301, %v4301
        %4304 = vadd.xlane.f32.xlu0 %v4302
        %v4305 = vpop.xlane.xlu0 %4304
        %4306 = vadd.xlane.f32.xlu0 %v4303
        %v4307 = vpop.xlane.xlu0 %4306
        %v4308 = vmul.f32 %v4305, %v4297
        %v4309 = vmul.f32 %v4307, %v4297
        %v4310 = vadd.f32 %v4308, 1e-05
        %v4311 = vadd.f32 %v4309, 1e-05
        %v4312 = vrsqrt.pop %v4310
        %v4313 = vrsqrt.pop %v4311
        %v4314 = vmul.f32 %v4300, %v4312
        %v4315 = vmul.f32 %v4301, %v4313
        %v4317 = vlaneseq
        %v4318 = vshrl.u32 %v4317, 7
        %v4319 = vsub.s32 0, %v4318
        %v4320 = vrot.slane %v4291, %v4319
        %v4322 = vmul.f32 %v4314, %v4320
        %v4323 = vmul.f32 %v4315, %v4320
        %v4325 = vlaneseq
        %v4326 = vshrl.u32 %v4325, 7
        %v4327 = vsub.s32 0, %v4326
        %v4328 = vrot.slane %v4292, %v4327
        %v4330 = vadd.f32 %v4322, %v4328
        %v4331 = vadd.f32 %v4323, %v4328
        %v4332 = vld [vmem:[%s605] sm:$0xff]
        %v4333 = vld [vmem:[%s605 + $0x8] sm:$0xff]
        %v4334 = vld [vmem:[%s605 + $0x10] sm:$0xff]
        %v4335 = vld [vmem:[%s605 + $0x18] sm:$0xff]
        %v4336 = vld [vmem:[%s605 + $0x20] sm:$0xff]
        %v4337 = vld [vmem:[%s605 + $0x28] sm:$0xff]
        %v4338 = vld [vmem:[%s605 + $0x30] sm:$0xff]
        %v4339 = vld [vmem:[%s605 + $0x38] sm:$0xff]
        %v4340 = vld [vmem:[%s605 + $0x40] sm:$0xff]
        %v4341 = vld [vmem:[%s605 + $0x48] sm:$0xff]
        %v4342 = vld [vmem:[%s605 + $0x50] sm:$0xff]
        %v4343 = vld [vmem:[%s605 + $0x58] sm:$0xff]
        %v4344 = vld [vmem:[%s605 + $0x60] sm:$0xff]
        %v4345 = vld [vmem:[%s605 + $0x68] sm:$0xff]
        %v4346 = vld [vmem:[%s605 + $0x70] sm:$0xff]
        %v4347 = vld [vmem:[%s605 + $0x78] sm:$0xff]
        %v4348 = vld [vmem:[%s605 + $0x80] sm:$0xff]
        %v4349 = vld [vmem:[%s605 + $0x88] sm:$0xff]
        %v4350 = vld [vmem:[%s605 + $0x90] sm:$0xff]
        %v4351 = vld [vmem:[%s605 + $0x98] sm:$0xff]
        %v4352 = vld [vmem:[%s605 + $0xa0] sm:$0xff]
        %v4353 = vld [vmem:[%s605 + $0xa8] sm:$0xff]
        %v4354 = vld [vmem:[%s605 + $0xb0] sm:$0xff]
        %v4355 = vld [vmem:[%s605 + $0xb8] sm:$0xff]
        %v4356 = vld [vmem:[%s605 + $0xc0] sm:$0xff]
        %v4357 = vld [vmem:[%s605 + $0xc8] sm:$0xff]
        %v4358 = vld [vmem:[%s605 + $0xd0] sm:$0xff]
        %v4359 = vld [vmem:[%s605 + $0xd8] sm:$0xff]
        %v4360 = vld [vmem:[%s605 + $0xe0] sm:$0xff]
        %v4361 = vld [vmem:[%s605 + $0xe8] sm:$0xff]
        %v4362 = vld [vmem:[%s605 + $0xf0] sm:$0xff]
        %v4363 = vld [vmem:[%s605 + $0xf8] sm:$0xff]
        %v4364 = vpack.c.bf16 %v4331, %v4330
        %v4365 = vld [vmem:[%s710] sm:$0xf]
        %v4367 = vlaneseq
        %v4368 = vshrl.u32 %v4367, 7
        %v4369 = vsub.s32 0, %v4368
        %v4370 = vrot.slane %v4365, %v4369
        %v4371 = vlaneseq
        %v4372 = vshrl.u32 %v4371, 7
        %v4373 = vsub.s32 1, %v4372
        %v4374 = vrot.slane %v4365, %v4373
        %v4375 = vlaneseq
        %v4376 = vshrl.u32 %v4375, 7
        %v4377 = vsub.s32 2, %v4376
        %v4378 = vrot.slane %v4365, %v4377
        %v4379 = vlaneseq
        %v4380 = vshrl.u32 %v4379, 7
        %v4381 = vsub.s32 3, %v4380
        %v4382 = vrot.slane %v4365, %v4381
        %v4419 = vunpack.c.l.b16 %v4332
        %v4420 = vunpack.c.h.b16 %v4332
        %v4421 = vunpack.c.l.b16 %v4333
        %v4422 = vunpack.c.h.b16 %v4333
        %v4423 = vunpack.c.l.b16 %v4334
        %v4424 = vunpack.c.h.b16 %v4334
        %v4425 = vunpack.c.l.b16 %v4335
        %v4426 = vunpack.c.h.b16 %v4335
        %v4427 = vunpack.c.l.b16 %v4336
        %v4428 = vunpack.c.h.b16 %v4336
        %v4429 = vunpack.c.l.b16 %v4337
        %v4430 = vunpack.c.h.b16 %v4337
        %v4431 = vunpack.c.l.b16 %v4338
        %v4432 = vunpack.c.h.b16 %v4338
        %v4433 = vunpack.c.l.b16 %v4339
        %v4434 = vunpack.c.h.b16 %v4339
        %v4435 = vunpack.c.l.b16 %v4340
        %v4436 = vunpack.c.h.b16 %v4340
        %v4437 = vunpack.c.l.b16 %v4341
        %v4438 = vunpack.c.h.b16 %v4341
        %v4439 = vunpack.c.l.b16 %v4342
        %v4440 = vunpack.c.h.b16 %v4342
        %v4441 = vunpack.c.l.b16 %v4343
        %v4442 = vunpack.c.h.b16 %v4343
        %v4443 = vunpack.c.l.b16 %v4344
        %v4444 = vunpack.c.h.b16 %v4344
        %v4445 = vunpack.c.l.b16 %v4345
        %v4446 = vunpack.c.h.b16 %v4345
        %v4447 = vunpack.c.l.b16 %v4346
        %v4448 = vunpack.c.h.b16 %v4346
        %v4449 = vunpack.c.l.b16 %v4347
        %v4450 = vunpack.c.h.b16 %v4347
        %v4451 = vunpack.c.l.b16 %v4348
        %v4452 = vunpack.c.h.b16 %v4348
        %v4453 = vunpack.c.l.b16 %v4349
        %v4454 = vunpack.c.h.b16 %v4349
        %v4455 = vunpack.c.l.b16 %v4350
        %v4456 = vunpack.c.h.b16 %v4350
        %v4457 = vunpack.c.l.b16 %v4351
        %v4458 = vunpack.c.h.b16 %v4351
        %v4459 = vunpack.c.l.b16 %v4352
        %v4460 = vunpack.c.h.b16 %v4352
        %v4461 = vunpack.c.l.b16 %v4353
        %v4462 = vunpack.c.h.b16 %v4353
        %v4463 = vunpack.c.l.b16 %v4354
        %v4464 = vunpack.c.h.b16 %v4354
        %v4465 = vunpack.c.l.b16 %v4355
        %v4466 = vunpack.c.h.b16 %v4355
        %v4467 = vunpack.c.l.b16 %v4356
        %v4468 = vunpack.c.h.b16 %v4356
        %v4469 = vunpack.c.l.b16 %v4357
        %v4470 = vunpack.c.h.b16 %v4357
        %v4471 = vunpack.c.l.b16 %v4358
        %v4472 = vunpack.c.h.b16 %v4358
        %v4473 = vunpack.c.l.b16 %v4359
        %v4474 = vunpack.c.h.b16 %v4359
        %v4475 = vunpack.c.l.b16 %v4360
        %v4476 = vunpack.c.h.b16 %v4360
        %v4477 = vunpack.c.l.b16 %v4361
        %v4478 = vunpack.c.h.b16 %v4361
        %v4479 = vunpack.c.l.b16 %v4362
        %v4480 = vunpack.c.h.b16 %v4362
        %v4481 = vunpack.c.l.b16 %v4363
        %v4482 = vunpack.c.h.b16 %v4363
        %v4483 = vpack.c.b16 %v4423, %v4419
        %v4484 = vpack.c.b16 %v4424, %v4420
        %v4485 = vpack.c.b16 %v4425, %v4421
        %v4486 = vpack.c.b16 %v4426, %v4422
        %v4487 = vpack.c.b16 %v4431, %v4427
        %v4488 = vpack.c.b16 %v4432, %v4428
        %v4489 = vpack.c.b16 %v4433, %v4429
        %v4490 = vpack.c.b16 %v4434, %v4430
        %v4491 = vpack.c.b16 %v4439, %v4435
        %v4492 = vpack.c.b16 %v4440, %v4436
        %v4493 = vpack.c.b16 %v4441, %v4437
        %v4494 = vpack.c.b16 %v4442, %v4438
        %v4495 = vpack.c.b16 %v4447, %v4443
        %v4496 = vpack.c.b16 %v4448, %v4444
        %v4497 = vpack.c.b16 %v4449, %v4445
        %v4498 = vpack.c.b16 %v4450, %v4446
        %v4499 = vpack.c.b16 %v4455, %v4451
        %v4500 = vpack.c.b16 %v4456, %v4452
        %v4501 = vpack.c.b16 %v4457, %v4453
        %v4502 = vpack.c.b16 %v4458, %v4454
        %v4503 = vpack.c.b16 %v4463, %v4459
        %v4504 = vpack.c.b16 %v4464, %v4460
        %v4505 = vpack.c.b16 %v4465, %v4461
        %v4506 = vpack.c.b16 %v4466, %v4462
        %v4507 = vpack.c.b16 %v4471, %v4467
        %v4508 = vpack.c.b16 %v4472, %v4468
        %v4509 = vpack.c.b16 %v4473, %v4469
        %v4510 = vpack.c.b16 %v4474, %v4470
        %v4511 = vpack.c.b16 %v4479, %v4475
        %v4512 = vpack.c.b16 %v4480, %v4476
        %v4513 = vpack.c.b16 %v4481, %v4477
        %v4514 = vpack.c.b16 %v4482, %v4478
        %4547 = vmatprep.subr.bf16.mxu0 %v4512
        %4548 = vmatpush1.bf16.msra.mxu0 %v4511
        %4549 = vmatprep.subr.bf16.mxu0 %v4508
        %4550 = vmatpush1.bf16.msra.mxu0 %v4507
        %4551 = vmatprep.subr.bf16.mxu0 %v4504
        %4552 = vmatpush1.bf16.msra.mxu0 %v4503
        %4553 = vmatprep.subr.bf16.mxu0 %v4500
        %4554 = vmatpush1.bf16.msra.mxu0 %v4499
        %4555 = vmatprep.subr.bf16.mxu0 %v4496
        %4556 = vmatpush1.bf16.msra.mxu0 %v4495
        %4557 = vmatprep.subr.bf16.mxu0 %v4492
        %4558 = vmatpush1.bf16.msra.mxu0 %v4491
        %4559 = vmatprep.subr.bf16.mxu0 %v4488
        %4560 = vmatpush1.bf16.msra.mxu0 %v4487
        %4561 = vmatprep.subr.bf16.mxu0 %v4484
        %4562 = vmatpush1.bf16.msra.mxu0 %v4483
        %4563 = vmatprep.subr.bf16.mxu0 0
        %4564 = vmatpush2.bf16.msra.mxu0 0
        %4565 = vmatprep.subr.bf16.mxu0 0
        %4566 = vmatpush2.bf16.msra.mxu0 0
        %4567 = vmatprep.subr.bf16.mxu0 0
        %4568 = vmatpush2.bf16.msra.mxu0 0
        %4569 = vmatprep.subr.bf16.mxu0 0
        %4570 = vmatpush2.bf16.msra.mxu0 0
        %4571 = vmatprep.subr.bf16.mxu0 0
        %4572 = vmatpush2.bf16.msra.mxu0 0
        %4573 = vmatprep.subr.bf16.mxu0 0
        %4574 = vmatpush2.bf16.msra.mxu0 0
        %4575 = vmatprep.subr.bf16.mxu0 0
        %4576 = vmatpush2.bf16.msra.mxu0 0
        %4577 = vmatprep.subr.bf16.mxu0 0
        %4578 = vmatpush2.bf16.msra.mxu0 0
        %4579 = vmatprep.mubr.bf16.mxu0 0
        %4580 = vmatmul.mubr.bf16.gmra.mxu0 %v4364
        %v4581 = vpop.f32.mrf.mxu0
        %v4582 = vadd.f32 %v4370, %v4581
        %v4583 = vpop.f32.mrf.mxu0
        %v4584 = vadd.f32 %v4374, %v4583
        %v4585 = vpop.f32.mrf.mxu0
        %v4586 = vadd.f32 %v4370, %v4585
        %v4587 = vpop.f32.mrf.mxu0
        %v4588 = vadd.f32 %v4374, %v4587
        %4589 = vdwg.mxu0
        %4590 = vmatprep.subr.bf16.mxu0 %v4514
        %4591 = vmatpush1.bf16.msra.mxu0 %v4513
        %4592 = vmatprep.subr.bf16.mxu0 %v4510
        %4593 = vmatpush1.bf16.msra.mxu0 %v4509
        %4594 = vmatprep.subr.bf16.mxu0 %v4506
        %4595 = vmatpush1.bf16.msra.mxu0 %v4505
        %4596 = vmatprep.subr.bf16.mxu0 %v4502
        %4597 = vmatpush1.bf16.msra.mxu0 %v4501
        %4598 = vmatprep.subr.bf16.mxu0 %v4498
        %4599 = vmatpush1.bf16.msra.mxu0 %v4497
        %4600 = vmatprep.subr.bf16.mxu0 %v4494
        %4601 = vmatpush1.bf16.msra.mxu0 %v4493
        %4602 = vmatprep.subr.bf16.mxu0 %v4490
        %4603 = vmatpush1.bf16.msra.mxu0 %v4489
        %4604 = vmatprep.subr.bf16.mxu0 %v4486
        %4605 = vmatpush1.bf16.msra.mxu0 %v4485
        %4606 = vmatprep.subr.bf16.mxu0 0
        %4607 = vmatpush2.bf16.msra.mxu0 0
        %4608 = vmatprep.subr.bf16.mxu0 0
        %4609 = vmatpush2.bf16.msra.mxu0 0
        %4610 = vmatprep.subr.bf16.mxu0 0
        %4611 = vmatpush2.bf16.msra.mxu0 0
        %4612 = vmatprep.subr.bf16.mxu0 0
        %4613 = vmatpush2.bf16.msra.mxu0 0
        %4614 = vmatprep.subr.bf16.mxu0 0
        %4615 = vmatpush2.bf16.msra.mxu0 0
        %4616 = vmatprep.subr.bf16.mxu0 0
        %4617 = vmatpush2.bf16.msra.mxu0 0
        %4618 = vmatprep.subr.bf16.mxu0 0
        %4619 = vmatpush2.bf16.msra.mxu0 0
        %4620 = vmatprep.subr.bf16.mxu0 0
        %4621 = vmatpush2.bf16.msra.mxu0 0
        %4622 = vmatprep.mubr.bf16.mxu0 0
        %4623 = vmatmul.mubr.bf16.gmra.mxu0 %v4364
        %v4624 = vpop.f32.mrf.mxu0
        %v4625 = vadd.f32 %v4378, %v4624
        %v4626 = vpop.f32.mrf.mxu0
        %v4627 = vadd.f32 %v4382, %v4626
        %v4628 = vpop.f32.mrf.mxu0
        %v4629 = vadd.f32 %v4378, %v4628
        %v4630 = vpop.f32.mrf.mxu0
        %v4631 = vadd.f32 %v4382, %v4630
        %4632 = vdwg.mxu0
        %v4633 = vmul.f32 %v4582, 0.5
        %v4634 = vmul.f32 %v4584, 0.5
        %v4635 = vmul.f32 %v4625, 0.5
        %v4636 = vmul.f32 %v4627, 0.5
        %v4637 = vmul.f32 %v4586, 0.5
        %v4638 = vmul.f32 %v4588, 0.5
        %v4639 = vmul.f32 %v4629, 0.5
        %v4640 = vmul.f32 %v4631, 0.5
        %v4641 = vmul.f32 %v4582, 0.70710677
        %v4642 = vmul.f32 %v4584, 0.70710677
        %v4643 = vmul.f32 %v4625, 0.70710677
        %v4644 = vmul.f32 %v4627, 0.70710677
        %v4645 = vmul.f32 %v4586, 0.70710677
        %v4646 = vmul.f32 %v4588, 0.70710677
        %v4647 = vmul.f32 %v4629, 0.70710677
        %v4648 = vmul.f32 %v4631, 0.70710677
        %v4649 = vand.u32 2147483647, %v4641
        %v4650 = vand.u32 2147483647, %v4642
        %v4651 = vand.u32 2147483647, %v4643
        %v4652 = vand.u32 2147483647, %v4644
        %v4653 = vand.u32 2147483647, %v4645
        %v4654 = vand.u32 2147483647, %v4646
        %v4655 = vand.u32 2147483647, %v4647
        %v4656 = vand.u32 2147483647, %v4648
        %v4657 = vmul.f32 %v4649, 0.3275911
        %v4658 = vmul.f32 %v4650, 0.3275911
        %v4659 = vmul.f32 %v4651, 0.3275911
        %v4660 = vmul.f32 %v4652, 0.3275911
        %v4661 = vmul.f32 %v4653, 0.3275911
        %v4662 = vmul.f32 %v4654, 0.3275911
        %v4663 = vmul.f32 %v4655, 0.3275911
        %v4664 = vmul.f32 %v4656, 0.3275911
        %v4665 = vadd.f32 %v4657, 1.0
        %v4666 = vadd.f32 %v4658, 1.0
        %v4667 = vadd.f32 %v4659, 1.0
        %v4668 = vadd.f32 %v4660, 1.0
        %v4669 = vadd.f32 %v4661, 1.0
        %v4670 = vadd.f32 %v4662, 1.0
        %v4671 = vadd.f32 %v4663, 1.0
        %v4672 = vadd.f32 %v4664, 1.0
        %v4673 = vrcp.pop %v4665
        %v4674 = vmul.f32 1.0, %v4673
        %v4675 = vrcp.pop %v4666
        %v4676 = vmul.f32 1.0, %v4675
        %v4677 = vrcp.pop %v4667
        %v4678 = vmul.f32 1.0, %v4677
        %v4679 = vrcp.pop %v4668
        %v4680 = vmul.f32 1.0, %v4679
        %v4681 = vrcp.pop %v4669
        %v4682 = vmul.f32 1.0, %v4681
        %v4683 = vrcp.pop %v4670
        %v4684 = vmul.f32 1.0, %v4683
        %v4685 = vrcp.pop %v4671
        %v4686 = vmul.f32 1.0, %v4685
        %v4687 = vrcp.pop %v4672
        %v4688 = vmul.f32 1.0, %v4687
        %v4689 = vmul.f32 %v4674, 1.0614054
        %v4690 = vmul.f32 %v4676, 1.0614054
        %v4691 = vmul.f32 %v4678, 1.0614054
        %v4692 = vmul.f32 %v4680, 1.0614054
        %v4693 = vmul.f32 %v4682, 1.0614054
        %v4694 = vmul.f32 %v4684, 1.0614054
        %v4695 = vmul.f32 %v4686, 1.0614054
        %v4696 = vmul.f32 %v4688, 1.0614054
        %v4697 = vadd.f32 %v4689, -1.4531521
        %v4698 = vadd.f32 %v4690, -1.4531521
        %v4699 = vadd.f32 %v4691, -1.4531521
        %v4700 = vadd.f32 %v4692, -1.4531521
        %v4701 = vadd.f32 %v4693, -1.4531521
        %v4702 = vadd.f32 %v4694, -1.4531521
        %v4703 = vadd.f32 %v4695, -1.4531521
        %v4704 = vadd.f32 %v4696, -1.4531521
        %v4705 = vmul.f32 %v4697, %v4674
        %v4706 = vmul.f32 %v4698, %v4676
        %v4707 = vmul.f32 %v4699, %v4678
        %v4708 = vmul.f32 %v4700, %v4680
        %v4709 = vmul.f32 %v4701, %v4682
        %v4710 = vmul.f32 %v4702, %v4684
        %v4711 = vmul.f32 %v4703, %v4686
        %v4712 = vmul.f32 %v4704, %v4688
        %v4713 = vadd.f32 %v4705, 1.4214138
        %v4714 = vadd.f32 %v4706, 1.4214138
        %v4715 = vadd.f32 %v4707, 1.4214138
        %v4716 = vadd.f32 %v4708, 1.4214138
        %v4717 = vadd.f32 %v4709, 1.4214138
        %v4718 = vadd.f32 %v4710, 1.4214138
        %v4719 = vadd.f32 %v4711, 1.4214138
        %v4720 = vadd.f32 %v4712, 1.4214138
        %v4721 = vmul.f32 %v4713, %v4674
        %v4722 = vmul.f32 %v4714, %v4676
        %v4723 = vmul.f32 %v4715, %v4678
        %v4724 = vmul.f32 %v4716, %v4680
        %v4725 = vmul.f32 %v4717, %v4682
        %v4726 = vmul.f32 %v4718, %v4684
        %v4727 = vmul.f32 %v4719, %v4686
        %v4728 = vmul.f32 %v4720, %v4688
        %v4729 = vadd.f32 %v4721, -0.28449672
        %v4730 = vadd.f32 %v4722, -0.28449672
        %v4731 = vadd.f32 %v4723, -0.28449672
        %v4732 = vadd.f32 %v4724, -0.28449672
        %v4733 = vadd.f32 %v4725, -0.28449672
        %v4734 = vadd.f32 %v4726, -0.28449672
        %v4735 = vadd.f32 %v4727, -0.28449672
        %v4736 = vadd.f32 %v4728, -0.28449672
        %v4737 = vmul.f32 %v4729, %v4674
        %v4738 = vmul.f32 %v4730, %v4676
        %v4739 = vmul.f32 %v4731, %v4678
        %v4740 = vmul.f32 %v4732, %v4680
        %v4741 = vmul.f32 %v4733, %v4682
        %v4742 = vmul.f32 %v4734, %v4684
        %v4743 = vmul.f32 %v4735, %v4686
        %v4744 = vmul.f32 %v4736, %v4688
        %v4745 = vadd.f32 %v4737, 0.2548296
        %v4746 = vadd.f32 %v4738, 0.2548296
        %v4747 = vadd.f32 %v4739, 0.2548296
        %v4748 = vadd.f32 %v4740, 0.2548296
        %v4749 = vadd.f32 %v4741, 0.2548296
        %v4750 = vadd.f32 %v4742, 0.2548296
        %v4751 = vadd.f32 %v4743, 0.2548296
        %v4752 = vadd.f32 %v4744, 0.2548296
        %v4753 = vmul.f32 %v4745, %v4674
        %v4754 = vmul.f32 %v4746, %v4676
        %v4755 = vmul.f32 %v4747, %v4678
        %v4756 = vmul.f32 %v4748, %v4680
        %v4757 = vmul.f32 %v4749, %v4682
        %v4758 = vmul.f32 %v4750, %v4684
        %v4759 = vmul.f32 %v4751, %v4686
        %v4760 = vmul.f32 %v4752, %v4688
        %v4761 = vsub.f32 0.0, %v4649
        %v4762 = vsub.f32 0.0, %v4650
        %v4763 = vsub.f32 0.0, %v4651
        %v4764 = vsub.f32 0.0, %v4652
        %v4765 = vsub.f32 0.0, %v4653
        %v4766 = vsub.f32 0.0, %v4654
        %v4767 = vsub.f32 0.0, %v4655
        %v4768 = vsub.f32 0.0, %v4656
        %v4769 = vmul.f32 %v4761, %v4649
        %v4770 = vmul.f32 %v4762, %v4650
        %v4771 = vmul.f32 %v4763, %v4651
        %v4772 = vmul.f32 %v4764, %v4652
        %v4773 = vmul.f32 %v4765, %v4653
        %v4774 = vmul.f32 %v4766, %v4654
        %v4775 = vmul.f32 %v4767, %v4655
        %v4776 = vmul.f32 %v4768, %v4656
        %v4777 = vmul.f32 %v4769, 1.442695
        %v4778 = vpow.pop %v4777
        %v4779 = vmul.f32 %v4770, 1.442695
        %v4780 = vpow.pop %v4779
        %v4781 = vmul.f32 %v4771, 1.442695
        %v4782 = vpow.pop %v4781
        %v4783 = vmul.f32 %v4772, 1.442695
        %v4784 = vpow.pop %v4783
        %v4785 = vmul.f32 %v4773, 1.442695
        %v4786 = vpow.pop %v4785
        %v4787 = vmul.f32 %v4774, 1.442695
        %v4788 = vpow.pop %v4787
        %v4789 = vmul.f32 %v4775, 1.442695
        %v4790 = vpow.pop %v4789
        %v4791 = vmul.f32 %v4776, 1.442695
        %v4792 = vpow.pop %v4791
        %v4793 = vmul.f32 %v4753, %v4778
        %v4794 = vmul.f32 %v4754, %v4780
        %v4795 = vmul.f32 %v4755, %v4782
        %v4796 = vmul.f32 %v4756, %v4784
        %v4797 = vmul.f32 %v4757, %v4786
        %v4798 = vmul.f32 %v4758, %v4788
        %v4799 = vmul.f32 %v4759, %v4790
        %v4800 = vmul.f32 %v4760, %v4792
        %v4801 = vsub.f32 1.0, %v4793
        %v4802 = vsub.f32 1.0, %v4794
        %v4803 = vsub.f32 1.0, %v4795
        %v4804 = vsub.f32 1.0, %v4796
        %v4805 = vsub.f32 1.0, %v4797
        %v4806 = vsub.f32 1.0, %v4798
        %v4807 = vsub.f32 1.0, %v4799
        %v4808 = vsub.f32 1.0, %v4800
        %vm4809 = vcmp.ge.f32.partialorder %v4641, 0.0
        %vm4810 = vcmp.ge.f32.partialorder %v4642, 0.0
        %vm4811 = vcmp.ge.f32.partialorder %v4643, 0.0
        %vm4812 = vcmp.ge.f32.partialorder %v4644, 0.0
        %vm4813 = vcmp.ge.f32.partialorder %v4645, 0.0
        %vm4814 = vcmp.ge.f32.partialorder %v4646, 0.0
        %vm4815 = vcmp.ge.f32.partialorder %v4647, 0.0
        %vm4816 = vcmp.ge.f32.partialorder %v4648, 0.0
        %v4817 = vsub.f32 0.0, %v4801
        %v4818 = vsub.f32 0.0, %v4802
        %v4819 = vsub.f32 0.0, %v4803
        %v4820 = vsub.f32 0.0, %v4804
        %v4821 = vsub.f32 0.0, %v4805
        %v4822 = vsub.f32 0.0, %v4806
        %v4823 = vsub.f32 0.0, %v4807
        %v4824 = vsub.f32 0.0, %v4808
        %v4825 = vsel %vm4809, %v4801, %v4817
        %v4826 = vsel %vm4810, %v4802, %v4818
        %v4827 = vsel %vm4811, %v4803, %v4819
        %v4828 = vsel %vm4812, %v4804, %v4820
        %v4829 = vsel %vm4813, %v4805, %v4821
        %v4830 = vsel %vm4814, %v4806, %v4822
        %v4831 = vsel %vm4815, %v4807, %v4823
        %v4832 = vsel %vm4816, %v4808, %v4824
        %v4833 = vadd.f32 %v4825, 1.0
        %v4834 = vadd.f32 %v4826, 1.0
        %v4835 = vadd.f32 %v4827, 1.0
        %v4836 = vadd.f32 %v4828, 1.0
        %v4837 = vadd.f32 %v4829, 1.0
        %v4838 = vadd.f32 %v4830, 1.0
        %v4839 = vadd.f32 %v4831, 1.0
        %v4840 = vadd.f32 %v4832, 1.0
        %v4841 = vmul.f32 %v4633, %v4833
        %v4842 = vmul.f32 %v4634, %v4834
        %v4843 = vmul.f32 %v4635, %v4835
        %v4844 = vmul.f32 %v4636, %v4836
        %v4845 = vmul.f32 %v4637, %v4837
        %v4846 = vmul.f32 %v4638, %v4838
        %v4847 = vmul.f32 %v4639, %v4839
        %v4848 = vmul.f32 %v4640, %v4840
        %v4849 = vld [vmem:[%s614] sm:$0xf]
        %v4850 = vld [vmem:[%s614 + $0x4] sm:$0xf]
        %v4851 = vld [vmem:[%s614 + $0x8] sm:$0xf]
        %v4852 = vld [vmem:[%s614 + $0xc] sm:$0xf]
        %v4853 = vld [vmem:[%s614 + $0x10] sm:$0xf]
        %v4854 = vld [vmem:[%s614 + $0x14] sm:$0xf]
        %v4855 = vld [vmem:[%s614 + $0x18] sm:$0xf]
        %v4856 = vld [vmem:[%s614 + $0x1c] sm:$0xf]
        %v4857 = vld [vmem:[%s614 + $0x20] sm:$0xf]
        %v4858 = vld [vmem:[%s614 + $0x24] sm:$0xf]
        %v4859 = vld [vmem:[%s614 + $0x28] sm:$0xf]
        %v4860 = vld [vmem:[%s614 + $0x2c] sm:$0xf]
        %v4861 = vld [vmem:[%s614 + $0x30] sm:$0xf]
        %v4862 = vld [vmem:[%s614 + $0x34] sm:$0xf]
        %v4863 = vld [vmem:[%s614 + $0x38] sm:$0xf]
        %v4864 = vld [vmem:[%s614 + $0x3c] sm:$0xf]
        %v4865 = vld [vmem:[%s614 + $0x40] sm:$0xf]
        %v4866 = vld [vmem:[%s614 + $0x44] sm:$0xf]
        %v4867 = vld [vmem:[%s614 + $0x48] sm:$0xf]
        %v4868 = vld [vmem:[%s614 + $0x4c] sm:$0xf]
        %v4869 = vld [vmem:[%s614 + $0x50] sm:$0xf]
        %v4870 = vld [vmem:[%s614 + $0x54] sm:$0xf]
        %v4871 = vld [vmem:[%s614 + $0x58] sm:$0xf]
        %v4872 = vld [vmem:[%s614 + $0x5c] sm:$0xf]
        %v4873 = vld [vmem:[%s614 + $0x60] sm:$0xf]
        %v4874 = vld [vmem:[%s614 + $0x64] sm:$0xf]
        %v4875 = vld [vmem:[%s614 + $0x68] sm:$0xf]
        %v4876 = vld [vmem:[%s614 + $0x6c] sm:$0xf]
        %v4877 = vld [vmem:[%s614 + $0x70] sm:$0xf]
        %v4878 = vld [vmem:[%s614 + $0x74] sm:$0xf]
        %v4879 = vld [vmem:[%s614 + $0x78] sm:$0xf]
        %v4880 = vld [vmem:[%s614 + $0x7c] sm:$0xf]
        %v4881 = vld [vmem:[%s614 + $0x80] sm:$0xf]
        %v4882 = vld [vmem:[%s614 + $0x84] sm:$0xf]
        %v4883 = vld [vmem:[%s614 + $0x88] sm:$0xf]
        %v4884 = vld [vmem:[%s614 + $0x8c] sm:$0xf]
        %v4885 = vld [vmem:[%s614 + $0x90] sm:$0xf]
        %v4886 = vld [vmem:[%s614 + $0x94] sm:$0xf]
        %v4887 = vld [vmem:[%s614 + $0x98] sm:$0xf]
        %v4888 = vld [vmem:[%s614 + $0x9c] sm:$0xf]
        %v4889 = vld [vmem:[%s614 + $0xa0] sm:$0xf]
        %v4890 = vld [vmem:[%s614 + $0xa4] sm:$0xf]
        %v4891 = vld [vmem:[%s614 + $0xa8] sm:$0xf]
        %v4892 = vld [vmem:[%s614 + $0xac] sm:$0xf]
        %v4893 = vld [vmem:[%s614 + $0xb0] sm:$0xf]
        %v4894 = vld [vmem:[%s614 + $0xb4] sm:$0xf]
        %v4895 = vld [vmem:[%s614 + $0xb8] sm:$0xf]
        %v4896 = vld [vmem:[%s614 + $0xbc] sm:$0xf]
        %v4897 = vld [vmem:[%s614 + $0xc0] sm:$0xf]
        %v4898 = vld [vmem:[%s614 + $0xc4] sm:$0xf]
        %v4899 = vld [vmem:[%s614 + $0xc8] sm:$0xf]
        %v4900 = vld [vmem:[%s614 + $0xcc] sm:$0xf]
        %v4901 = vld [vmem:[%s614 + $0xd0] sm:$0xf]
        %v4902 = vld [vmem:[%s614 + $0xd4] sm:$0xf]
        %v4903 = vld [vmem:[%s614 + $0xd8] sm:$0xf]
        %v4904 = vld [vmem:[%s614 + $0xdc] sm:$0xf]
        %v4905 = vld [vmem:[%s614 + $0xe0] sm:$0xf]
        %v4906 = vld [vmem:[%s614 + $0xe4] sm:$0xf]
        %v4907 = vld [vmem:[%s614 + $0xe8] sm:$0xf]
        %v4908 = vld [vmem:[%s614 + $0xec] sm:$0xf]
        %v4909 = vld [vmem:[%s614 + $0xf0] sm:$0xf]
        %v4910 = vld [vmem:[%s614 + $0xf4] sm:$0xf]
        %v4911 = vld [vmem:[%s614 + $0xf8] sm:$0xf]
        %v4912 = vld [vmem:[%s614 + $0xfc] sm:$0xf]
        %v4913 = vpack.c.bf16 %v4845, %v4841
        %v4914 = vpack.c.bf16 %v4846, %v4842
        %v4915 = vpack.c.bf16 %v4847, %v4843
        %v4916 = vpack.c.bf16 %v4848, %v4844
        %v4917 = vld [vmem:[%s713] sm:$0x1]
        %v4919 = vlaneseq
        %v4920 = vshrl.u32 %v4919, 7
        %v4921 = vsub.s32 0, %v4920
        %v4922 = vrot.slane %v4917, %v4921
        %v4988 = vunpack.c.l.b16 %v4849
        %v4989 = vunpack.c.l.b16 %v4850
        %v4990 = vunpack.c.l.b16 %v4851
        %v4991 = vunpack.c.l.b16 %v4852
        %v4992 = vunpack.c.l.b16 %v4853
        %v4993 = vunpack.c.l.b16 %v4854
        %v4994 = vunpack.c.l.b16 %v4855
        %v4995 = vunpack.c.l.b16 %v4856
        %v4996 = vunpack.c.l.b16 %v4857
        %v4997 = vunpack.c.l.b16 %v4858
        %v4998 = vunpack.c.l.b16 %v4859
        %v4999 = vunpack.c.l.b16 %v4860
        %v5000 = vunpack.c.l.b16 %v4861
        %v5001 = vunpack.c.l.b16 %v4862
        %v5002 = vunpack.c.l.b16 %v4863
        %v5003 = vunpack.c.l.b16 %v4864
        %v5004 = vunpack.c.l.b16 %v4865
        %v5005 = vunpack.c.l.b16 %v4866
        %v5006 = vunpack.c.l.b16 %v4867
        %v5007 = vunpack.c.l.b16 %v4868
        %v5008 = vunpack.c.l.b16 %v4869
        %v5009 = vunpack.c.l.b16 %v4870
        %v5010 = vunpack.c.l.b16 %v4871
        %v5011 = vunpack.c.l.b16 %v4872
        %v5012 = vunpack.c.l.b16 %v4873
        %v5013 = vunpack.c.l.b16 %v4874
        %v5014 = vunpack.c.l.b16 %v4875
        %v5015 = vunpack.c.l.b16 %v4876
        %v5016 = vunpack.c.l.b16 %v4877
        %v5017 = vunpack.c.l.b16 %v4878
        %v5018 = vunpack.c.l.b16 %v4879
        %v5019 = vunpack.c.l.b16 %v4880
        %v5020 = vunpack.c.l.b16 %v4881
        %v5021 = vunpack.c.l.b16 %v4882
        %v5022 = vunpack.c.l.b16 %v4883
        %v5023 = vunpack.c.l.b16 %v4884
        %v5024 = vunpack.c.l.b16 %v4885
        %v5025 = vunpack.c.l.b16 %v4886
        %v5026 = vunpack.c.l.b16 %v4887
        %v5027 = vunpack.c.l.b16 %v4888
        %v5028 = vunpack.c.l.b16 %v4889
        %v5029 = vunpack.c.l.b16 %v4890
        %v5030 = vunpack.c.l.b16 %v4891
        %v5031 = vunpack.c.l.b16 %v4892
        %v5032 = vunpack.c.l.b16 %v4893
        %v5033 = vunpack.c.l.b16 %v4894
        %v5034 = vunpack.c.l.b16 %v4895
        %v5035 = vunpack.c.l.b16 %v4896
        %v5036 = vunpack.c.l.b16 %v4897
        %v5037 = vunpack.c.l.b16 %v4898
        %v5038 = vunpack.c.l.b16 %v4899
        %v5039 = vunpack.c.l.b16 %v4900
        %v5040 = vunpack.c.l.b16 %v4901
        %v5041 = vunpack.c.l.b16 %v4902
        %v5042 = vunpack.c.l.b16 %v4903
        %v5043 = vunpack.c.l.b16 %v4904
        %v5044 = vunpack.c.l.b16 %v4905
        %v5045 = vunpack.c.l.b16 %v4906
        %v5046 = vunpack.c.l.b16 %v4907
        %v5047 = vunpack.c.l.b16 %v4908
        %v5048 = vunpack.c.l.b16 %v4909
        %v5049 = vunpack.c.l.b16 %v4910
        %v5050 = vunpack.c.l.b16 %v4911
        %v5051 = vunpack.c.l.b16 %v4912
        %v5052 = vpack.c.b16 %v4989, %v4988
        %v5053 = vpack.c.b16 %v4991, %v4990
        %v5054 = vpack.c.b16 %v4993, %v4992
        %v5055 = vpack.c.b16 %v4995, %v4994
        %v5056 = vpack.c.b16 %v4997, %v4996
        %v5057 = vpack.c.b16 %v4999, %v4998
        %v5058 = vpack.c.b16 %v5001, %v5000
        %v5059 = vpack.c.b16 %v5003, %v5002
        %v5060 = vpack.c.b16 %v5005, %v5004
        %v5061 = vpack.c.b16 %v5007, %v5006
        %v5062 = vpack.c.b16 %v5009, %v5008
        %v5063 = vpack.c.b16 %v5011, %v5010
        %v5064 = vpack.c.b16 %v5013, %v5012
        %v5065 = vpack.c.b16 %v5015, %v5014
        %v5066 = vpack.c.b16 %v5017, %v5016
        %v5067 = vpack.c.b16 %v5019, %v5018
        %v5068 = vpack.c.b16 %v5021, %v5020
        %v5069 = vpack.c.b16 %v5023, %v5022
        %v5070 = vpack.c.b16 %v5025, %v5024
        %v5071 = vpack.c.b16 %v5027, %v5026
        %v5072 = vpack.c.b16 %v5029, %v5028
        %v5073 = vpack.c.b16 %v5031, %v5030
        %v5074 = vpack.c.b16 %v5033, %v5032
        %v5075 = vpack.c.b16 %v5035, %v5034
        %v5076 = vpack.c.b16 %v5037, %v5036
        %v5077 = vpack.c.b16 %v5039, %v5038
        %v5078 = vpack.c.b16 %v5041, %v5040
        %v5079 = vpack.c.b16 %v5043, %v5042
        %v5080 = vpack.c.b16 %v5045, %v5044
        %v5081 = vpack.c.b16 %v5047, %v5046
        %v5082 = vpack.c.b16 %v5049, %v5048
        %v5083 = vpack.c.b16 %v5051, %v5050
        %5116 = vmatprep.subr.bf16.mxu0 0
        %5117 = vmatpush1.bf16.msra.mxu0 %v5059
        %5118 = vmatprep.subr.bf16.mxu0 0
        %5119 = vmatpush1.bf16.msra.mxu0 %v5058
        %5120 = vmatprep.subr.bf16.mxu0 0
        %5121 = vmatpush1.bf16.msra.mxu0 %v5057
        %5122 = vmatprep.subr.bf16.mxu0 0
        %5123 = vmatpush1.bf16.msra.mxu0 %v5056
        %5124 = vmatprep.subr.bf16.mxu0 0
        %5125 = vmatpush1.bf16.msra.mxu0 %v5055
        %5126 = vmatprep.subr.bf16.mxu0 0
        %5127 = vmatpush1.bf16.msra.mxu0 %v5054
        %5128 = vmatprep.subr.bf16.mxu0 0
        %5129 = vmatpush1.bf16.msra.mxu0 %v5053
        %5130 = vmatprep.subr.bf16.mxu0 0
        %5131 = vmatpush1.bf16.msra.mxu0 %v5052
        %5132 = vmatprep.subr.bf16.mxu0 0
        %5133 = vmatpush2.bf16.msra.mxu0 %v5067
        %5134 = vmatprep.subr.bf16.mxu0 0
        %5135 = vmatpush2.bf16.msra.mxu0 %v5066
        %5136 = vmatprep.subr.bf16.mxu0 0
        %5137 = vmatpush2.bf16.msra.mxu0 %v5065
        %5138 = vmatprep.subr.bf16.mxu0 0
        %5139 = vmatpush2.bf16.msra.mxu0 %v5064
        %5140 = vmatprep.subr.bf16.mxu0 0
        %5141 = vmatpush2.bf16.msra.mxu0 %v5063
        %5142 = vmatprep.subr.bf16.mxu0 0
        %5143 = vmatpush2.bf16.msra.mxu0 %v5062
        %5144 = vmatprep.subr.bf16.mxu0 0
        %5145 = vmatpush2.bf16.msra.mxu0 %v5061
        %5146 = vmatprep.subr.bf16.mxu0 0
        %5147 = vmatpush2.bf16.msra.mxu0 %v5060
        %5148 = vmatprep.mubr.bf16.mxu0 %v4914
        %5149 = vmatmul.mubr.bf16.gmra.mxu0 %v4913
        %v5150 = vpop.f32.mrf.mxu0
        %v5151 = vadd.f32 %v4922, %v5150
        %v5152 = vpop.f32.mrf.mxu0
        %v5153 = vpop.f32.mrf.mxu0
        %v5154 = vadd.f32 %v4922, %v5153
        %v5155 = vpop.f32.mrf.mxu0
        %5156 = vdwg.mxu0
        %5157 = vmatprep.subr.bf16.mxu0 0
        %5158 = vmatpush1.bf16.msra.mxu0 %v5075
        %5159 = vmatprep.subr.bf16.mxu0 0
        %5160 = vmatpush1.bf16.msra.mxu0 %v5074
        %5161 = vmatprep.subr.bf16.mxu0 0
        %5162 = vmatpush1.bf16.msra.mxu0 %v5073
        %5163 = vmatprep.subr.bf16.mxu0 0
        %5164 = vmatpush1.bf16.msra.mxu0 %v5072
        %5165 = vmatprep.subr.bf16.mxu0 0
        %5166 = vmatpush1.bf16.msra.mxu0 %v5071
        %5167 = vmatprep.subr.bf16.mxu0 0
        %5168 = vmatpush1.bf16.msra.mxu0 %v5070
        %5169 = vmatprep.subr.bf16.mxu0 0
        %5170 = vmatpush1.bf16.msra.mxu0 %v5069
        %5171 = vmatprep.subr.bf16.mxu0 0
        %5172 = vmatpush1.bf16.msra.mxu0 %v5068
        %5173 = vmatprep.subr.bf16.mxu0 0
        %5174 = vmatpush2.bf16.msra.mxu0 %v5083
        %5175 = vmatprep.subr.bf16.mxu0 0
        %5176 = vmatpush2.bf16.msra.mxu0 %v5082
        %5177 = vmatprep.subr.bf16.mxu0 0
        %5178 = vmatpush2.bf16.msra.mxu0 %v5081
        %5179 = vmatprep.subr.bf16.mxu0 0
        %5180 = vmatpush2.bf16.msra.mxu0 %v5080
        %5181 = vmatprep.subr.bf16.mxu0 0
        %5182 = vmatpush2.bf16.msra.mxu0 %v5079
        %5183 = vmatprep.subr.bf16.mxu0 0
        %5184 = vmatpush2.bf16.msra.mxu0 %v5078
        %5185 = vmatprep.subr.bf16.mxu0 0
        %5186 = vmatpush2.bf16.msra.mxu0 %v5077
        %5187 = vmatprep.subr.bf16.mxu0 0
        %5188 = vmatpush2.bf16.msra.mxu0 %v5076
        %5189 = vmatprep.mubr.bf16.mxu0 %v4916
        %5190 = vmatmul.mubr.bf16.gmra.mxu0 %v4915
        %v5191 = vpop.f32.mrf.mxu0
        %v5192 = vadd.f32 %v5151, %v5191
        %v5193 = vpop.f32.mrf.mxu0
        %v5194 = vpop.f32.mrf.mxu0
        %v5195 = vadd.f32 %v5154, %v5194
        %v5196 = vpop.f32.mrf.mxu0
        %5197 = vdwg.mxu0
        %v5198 = vadd.f32 %v4330, %v5192
        %v5199 = vadd.f32 %v4331, %v5195
        %v5200 = vld [vmem:[%s716] sm:$0x1]
        %v5201 = vld [vmem:[%s719] sm:$0x1]
        %5202 = vadd.xlane.f32.xlu0 %v5198
        %v5203 = vpop.xlane.xlu0 %5202
        %5204 = vadd.xlane.f32.xlu0 %v5199
        %v5205 = vpop.xlane.xlu0 %5204
        %v5206 = vmul.f32 %v5203, %v4297
        %v5207 = vmul.f32 %v5205, %v4297
        %v5208 = vsub.f32 %v5198, %v5206
        %v5209 = vsub.f32 %v5199, %v5207
        %v5210 = vmul.f32 %v5208, %v5208
        %v5211 = vmul.f32 %v5209, %v5209
        %5212 = vadd.xlane.f32.xlu0 %v5210
        %v5213 = vpop.xlane.xlu0 %5212
        %5214 = vadd.xlane.f32.xlu0 %v5211
        %v5215 = vpop.xlane.xlu0 %5214
        %v5216 = vmul.f32 %v5213, %v4297
        %v5217 = vmul.f32 %v5215, %v4297
        %v5218 = vadd.f32 %v5216, 1e-05
        %v5219 = vadd.f32 %v5217, 1e-05
        %v5220 = vrsqrt.pop %v5218
        %v5221 = vrsqrt.pop %v5219
        %v5222 = vmul.f32 %v5208, %v5220
        %v5223 = vmul.f32 %v5209, %v5221
        %v5225 = vlaneseq
        %v5226 = vshrl.u32 %v5225, 7
        %v5227 = vsub.s32 0, %v5226
        %v5228 = vrot.slane %v5200, %v5227
        %v5230 = vmul.f32 %v5222, %v5228
        %v5231 = vmul.f32 %v5223, %v5228
        %v5233 = vlaneseq
        %v5234 = vshrl.u32 %v5233, 7
        %v5235 = vsub.s32 0, %v5234
        %v5236 = vrot.slane %v5201, %v5235
        %v5238 = vadd.f32 %v5230, %v5236
        %v5239 = vadd.f32 %v5231, %v5236
        %5240 = vst [vmem:[#allocation11] sm:$0xff] %v5238
        %5241 = vst [vmem:[#allocation11 + $0x8] sm:$0xff] %v5239
        // Predicated region
        $region97: #{tpu_custom_call.1} parent=71 // pred_check
          %p5242 = pneg %p400
        $region98: #{tpu_custom_call.1} parent=71 // pred_check_branch
          %5244 = sbr.rel (%p5242) target = $region100
        $region99: #{tpu_custom_call.1} parent=71 // pred_region
          %s5245 = smul.u32 2, %s36
          %s5247 = ssub.s32 256, 256
          %5248 = vsyncadd [#allocation4], %s5247
          %s5249 = smul.addr %s5245, 128
          %s5250 = scalar_lea.hbm %s13, %s5249
          %s5251 = sshll.u32 [#allocation11], 4
          %s5252 = int_to_ptr.vmem [resolvable:$true] %s5251
          %5257 = dma.vmem_to_hbm [thread:$0]  %s5252, 256, %s5250, [#allocation4], 128, 128, 8
        $region100: #{tpu_custom_call.1} parent=71 // pred_fallthru
          _
        // Predicated region
        $region101: #{tpu_custom_call.1} parent=71 // pred_check
          %p5258 = pneg %p400
        $region102: #{tpu_custom_call.1} parent=71 // pred_check_branch
          %5260 = sbr.rel (%p5258) target = $region104
        $region103: #{tpu_custom_call.1} parent=71 // pred_region
          %5261 = dma.done [#allocation4], 256
        $region104: #{tpu_custom_call.1} parent=71 // pred_fallthru
          _
      $region72: #{tpu_custom_call.1} parent=5 // pred_fallthru
        _
      %p5262 = scmp.le.s32.totalorder 2, %s27
      // Predicated region
      $region105: #{tpu_custom_call.1} parent=5 // pred_check
        %p5263 = pneg %p5262
      $region106: #{tpu_custom_call.1} parent=5 // pred_check_branch
        %5265 = sbr.rel (%p5263) target = $region108
      $region107: #{tpu_custom_call.1} parent=5 // pred_region
        %s5266 = ssub.s32 %s27, 2
      $region108: #{tpu_custom_call.1} parent=5 // pred_fallthru
        _
    $region6: #{tpu_custom_call.1} parent=1 // loop_footer
      %s31 = sadd.s32 1, %s27
    $region7: #{tpu_custom_call.1} parent=1 // loop_footer_branch
      %26 = sbr.rel target = $region3
    $region8: #{tpu_custom_call.1} parent=1 // loop_exit
      _
    %5267 = vsyncpa [#allocation3], 1
    %s5268 = scalar_lea.sflag [#allocation3], 1
    %5269 = vsyncpa %s5268, 1
    %5270 = vsyncpa [#allocation6], 1
    %s5271 = scalar_lea.sflag [#allocation6], 1
    %5272 = vsyncpa %s5271, 1
    %5273 = vsyncpa [#allocation9], 1
    %s5274 = scalar_lea.sflag [#allocation9], 1
    %5275 = vsyncpa %s5274, 1
    %5276 = vsyncpa [#allocation4], 1
    %s5277 = scalar_lea.sflag [#allocation4], 1
    %5278 = vsyncpa %s5277, 1

</llo_original>
